<compile_context>
chip_gen: v7x
topology: tpu7x:2x2x1
jax: 0.10.0
libtpu: 0.0.40
codegen_flags: <defaults>
</compile_context>

<pallas_src>
import functools

import jax
import jax.numpy as jnp
from jax import lax
from jax.experimental import pallas as pl
from jax.experimental.pallas import tpu as pltpu

NEG_SLOPE = 0.01      # nn.LeakyReLU default negative_slope
OUT_DIM = 3
OUT_ROWS = 8          # final layer padded 3 -> 8 output rows (sublane-aligned)
TILE_ALIGN = 256      # batch tiles are multiples of 256 (MXU / lane friendly)


def _round_up(x, m):
    return ((x + m - 1) // m) * m


def _leaky_relu(v):
    return jnp.where(v > 0, v, NEG_SLOPE * v)


def mlp_kernel(x_ref,
               w1_ref, b1_ref, w2_ref, b2_ref, w3_ref, b3_ref,
               w4_ref, b4_ref, w5_ref, b5_ref, w6t_ref, b6t_ref,
               o_ref, *, sub_tile, unroll):
    """Six fused Linear(+LeakyReLU) layers, sub-tiled over batch rows.

    x_ref : (batch_tile, 14) bf16
    o_ref : (batch_tile // sub_tile, 8, sub_tile) f32  -- transposed per
            sub-tile so HBM writeback is lane-dense and ~16x smaller.
    """
    n_sub = x_ref.shape[0] // sub_tile
    hidden_w = (w1_ref, w2_ref, w3_ref, w4_ref, w5_ref)

    # Hoist loop-invariant bias reads (small: 5 x (1,256) f32 + (8,1) f32).
    hidden_b = tuple(b[...] for b in (b1_ref, b2_ref, b3_ref, b4_ref, b5_ref))
    b6t = b6t_ref[...]

    def body(s, carry):
        r = pl.multiple_of(s * sub_tile, sub_tile)
        h = x_ref[pl.ds(r, sub_tile), :]                       # bf16 (sub, 14)
        for w_ref, b in zip(hidden_w, hidden_b):
            a = jnp.dot(h, w_ref[...], preferred_element_type=jnp.float32)
            a = a + b                                          # f32 bias add
            h = _leaky_relu(a).astype(jnp.bfloat16)            # bf16 for MXU
        # Final layer computed directly in transposed form on the MXU:
        #   out_t[o, s] = sum_k W6T[o, k] * h[s, k]    (A @ B^T contraction)
        out_t = lax.dot_general(w6t_ref[...], h, (((1,), (1,)), ((), ())),
                                preferred_element_type=jnp.float32)
        out_t = out_t + b6t                                    # (8, sub)+(8, 1)
        # Dropout(p=0) is the identity.
        o_ref[s] = out_t.astype(o_ref.dtype)                   # lane-dense store
        return carry

    # unroll=2: interleave two independent sub-tile chains (hides MXU drain
    # latency) without the vreg blow-up of a full unroll at large n_sub.
    lax.fori_loop(0, n_sub, body, 0, unroll=unroll)


@functools.partial(jax.jit, static_argnames=("batch_tile", "sub_tile", "unroll"))
def neural_net_forward(x, params, *, batch_tile=2048, sub_tile=128, unroll=2):
    """x: (B, 14) float32; params: list of (W, b) with W (in, out), b (1, out)."""
    B, in_dim = x.shape
    assert in_dim == 14
    out_dim = params[-1][0].shape[1]
    assert out_dim == OUT_DIM

    # ---- choose the batch tile -------------------------------------------
    b_aligned = _round_up(B, TILE_ALIGN)
    if b_aligned >= 2 * TILE_ALIGN:
        # Cap so large batches keep >= 2 grid steps (both v7x TensorCores busy).
        cap = max(TILE_ALIGN, (b_aligned // 2) // TILE_ALIGN * TILE_ALIGN)
    else:
        # Tiny batch: a single small tile, no over-padding.
        cap = b_aligned
    batch_tile = max(TILE_ALIGN, (batch_tile // TILE_ALIGN) * TILE_ALIGN)
    batch_tile = min(batch_tile, cap)
    sub_tile = min(sub_tile, batch_tile)
    assert batch_tile % sub_tile == 0 and sub_tile % 128 == 0

    # Pad the batch so every grid step is a full tile; slice back afterwards.
    b_pad = _round_up(B, batch_tile)
    x_p = x if b_pad == B else jnp.pad(x, ((0, b_pad - B), (0, 0)))
    x_bf16 = x_p.astype(jnp.bfloat16)

    # ---- pack weights ------------------------------------------------------
    flat = []
    last = len(params) - 1
    for li, (w, b) in enumerate(params):
        if li == last:
            # Final layer stored transposed (out, in), padded 3 -> 8 output
            # rows, so the kernel emits a lane-dense transposed result.
            w = jnp.pad(w.T, ((0, OUT_ROWS - w.shape[1]), (0, 0)))   # (8, 256)
            b = jnp.pad(b.T, ((0, OUT_ROWS - b.shape[1]), (0, 0)))   # (8, 1)
        flat.append(w.astype(jnp.bfloat16))    # MXU-native weight dtype
        flat.append(b.astype(jnp.float32))     # bias add stays in f32

    def whole(arr):
        # Full-array block, constant index_map: DMA'd once, VMEM-resident
        # across the (parallel) batch grid axis.
        return pl.BlockSpec(arr.shape, lambda i: (0, 0))

    in_specs = [pl.BlockSpec((batch_tile, in_dim), lambda i: (i, 0))]
    in_specs += [whole(a) for a in flat]

    n_sub_per_tile = batch_tile // sub_tile
    out_specs = pl.BlockSpec((n_sub_per_tile, OUT_ROWS, sub_tile),
                             lambda i: (i, 0, 0))
    out_shape = jax.ShapeDtypeStruct((b_pad // sub_tile, OUT_ROWS, sub_tile),
                                     jnp.float32)

    out3 = pl.pallas_call(
        functools.partial(mlp_kernel, sub_tile=sub_tile, unroll=unroll),
        out_shape=out_shape,
        grid_spec=pltpu.PrefetchScalarGridSpec(
            num_scalar_prefetch=0,
            grid=(b_pad // batch_tile,),
            in_specs=in_specs,
            out_specs=out_specs,
        ),
        compiler_params=pltpu.CompilerParams(
            dimension_semantics=("parallel",),
            vmem_limit_bytes=32 * 1024 * 1024),
    )(x_bf16, *flat)

    # (S, 8, sub) -> (S, sub, 8) -> (b_pad, 8) -> (B, 3).  Tiny: 32 B/row.
    out = jnp.swapaxes(out3, 1, 2).reshape(b_pad, OUT_ROWS)
    return out[:B, :OUT_DIM]


def init_params(key):
    """Deterministic init matching nn.Linear shapes (stored as (in, out))."""
    dims = [(14, 256), (256, 256), (256, 256), (256, 256), (256, 256), (256, 3)]
    params = []
    for (fan_in, fan_out) in dims:
        key, kw, kb = jax.random.split(key, 3)
        bound = 1.0 / jnp.sqrt(fan_in)
        w = jax.random.uniform(kw, (fan_in, fan_out), jnp.float32, -bound, bound)
        b = jax.random.uniform(kb, (1, fan_out), jnp.float32, -bound, bound)
        params.append((w, b))
    return params


def reference_forward(x, params):
    h = x
    for idx, (w, b) in enumerate(params):
        h = h @ w + b
        if idx < len(params) - 1:
            h = jnp.where(h > 0, h, NEG_SLOPE * h)
    return h


if __name__ == "__main__":
    key = jax.random.PRNGKey(0)
    k_in, k_par = jax.random.split(key)
    x = jax.random.normal(k_in, (8, 14), dtype=jnp.float32)
    params = init_params(k_par)

    out = neural_net_forward(x, params)
    out = jax.block_until_ready(out)

    ref = reference_forward(x, params)
    assert out.shape == (8, 3)
    # bf16 MXU inputs/activations (f32 accumulation) -> loosened tolerance.
    assert jnp.allclose(out, ref, atol=2e-2, rtol=2e-2)
    print("KERNEL_OK")
</pallas_src>

<mosaic_0001>
module attributes {stable_mosaic.version = 11 : i64} {
  func.func @mlp_kernel(%arg0: i32, %arg1: memref<256x14xbf16, #tpu.memory_space<vmem>>, %arg2: memref<14x256xbf16, #tpu.memory_space<vmem>>, %arg3: memref<1x256xf32, #tpu.memory_space<vmem>>, %arg4: memref<256x256xbf16, #tpu.memory_space<vmem>>, %arg5: memref<1x256xf32, #tpu.memory_space<vmem>>, %arg6: memref<256x256xbf16, #tpu.memory_space<vmem>>, %arg7: memref<1x256xf32, #tpu.memory_space<vmem>>, %arg8: memref<256x256xbf16, #tpu.memory_space<vmem>>, %arg9: memref<1x256xf32, #tpu.memory_space<vmem>>, %arg10: memref<256x256xbf16, #tpu.memory_space<vmem>>, %arg11: memref<1x256xf32, #tpu.memory_space<vmem>>, %arg12: memref<8x256xbf16, #tpu.memory_space<vmem>>, %arg13: memref<8x1xf32, #tpu.memory_space<vmem>>, %arg14: memref<2x8x128xf32, #tpu.memory_space<vmem>>) attributes {dimension_semantics = [#tpu.dimension_semantics<parallel>], iteration_bounds = array<i64: 1>, scalar_prefetch = 0 : i64, scratch_operands = 0 : i64, tpu.core_type = #tpu.core_type<tc>, window_params = [{transform_indices = @transform_0, window_bounds = array<i64: 256, 14>}, {pipeline_mode = #tpu.pipeline_mode<synchronous>, transform_indices = @transform_1, window_bounds = array<i64: 14, 256>}, {pipeline_mode = #tpu.pipeline_mode<synchronous>, transform_indices = @transform_2, window_bounds = array<i64: 1, 256>}, {pipeline_mode = #tpu.pipeline_mode<synchronous>, transform_indices = @transform_3, window_bounds = array<i64: 256, 256>}, {pipeline_mode = #tpu.pipeline_mode<synchronous>, transform_indices = @transform_4, window_bounds = array<i64: 1, 256>}, {pipeline_mode = #tpu.pipeline_mode<synchronous>, transform_indices = @transform_5, window_bounds = array<i64: 256, 256>}, {pipeline_mode = #tpu.pipeline_mode<synchronous>, transform_indices = @transform_6, window_bounds = array<i64: 1, 256>}, {pipeline_mode = #tpu.pipeline_mode<synchronous>, transform_indices = @transform_7, window_bounds = array<i64: 256, 256>}, {pipeline_mode = #tpu.pipeline_mode<synchronous>, transform_indices = @transform_8, window_bounds = array<i64: 1, 256>}, {pipeline_mode = #tpu.pipeline_mode<synchronous>, transform_indices = @transform_9, window_bounds = array<i64: 256, 256>}, {pipeline_mode = #tpu.pipeline_mode<synchronous>, transform_indices = @transform_10, window_bounds = array<i64: 1, 256>}, {pipeline_mode = #tpu.pipeline_mode<synchronous>, transform_indices = @transform_11, window_bounds = array<i64: 8, 256>}, {pipeline_mode = #tpu.pipeline_mode<synchronous>, transform_indices = @transform_12, window_bounds = array<i64: 8, 1>}, {transform_indices = @transform_13, window_bounds = array<i64: 2, 8, 128>}]} {
    %c0 = arith.constant 0 : index
    %c0_0 = arith.constant 0 : index
    %0 = vector.load %arg3[%c0, %c0_0] : memref<1x256xf32, #tpu.memory_space<vmem>>, vector<1x256xf32>
    %c0_1 = arith.constant 0 : index
    %c0_2 = arith.constant 0 : index
    %1 = vector.load %arg5[%c0_1, %c0_2] : memref<1x256xf32, #tpu.memory_space<vmem>>, vector<1x256xf32>
    %c0_3 = arith.constant 0 : index
    %c0_4 = arith.constant 0 : index
    %2 = vector.load %arg7[%c0_3, %c0_4] : memref<1x256xf32, #tpu.memory_space<vmem>>, vector<1x256xf32>
    %c0_5 = arith.constant 0 : index
    %c0_6 = arith.constant 0 : index
    %3 = vector.load %arg9[%c0_5, %c0_6] : memref<1x256xf32, #tpu.memory_space<vmem>>, vector<1x256xf32>
    %c0_7 = arith.constant 0 : index
    %c0_8 = arith.constant 0 : index
    %4 = vector.load %arg11[%c0_7, %c0_8] : memref<1x256xf32, #tpu.memory_space<vmem>>, vector<1x256xf32>
    %c0_9 = arith.constant 0 : index
    %c0_10 = arith.constant 0 : index
    %5 = vector.load %arg13[%c0_9, %c0_10] : memref<8x1xf32, #tpu.memory_space<vmem>>, vector<8x1xf32>
    %c0_i32 = arith.constant 0 : i32
    %c128_i32 = arith.constant 128 : i32
    %6 = arith.muli %c0_i32, %c128_i32 : i32
    %7 = tpu.assume_multiple %6, 128 : i32
    %8 = arith.index_cast %7 : i32 to index
    %c0_11 = arith.constant 0 : index
    %9 = vector.load %arg1[%8, %c0_11] : memref<256x14xbf16, #tpu.memory_space<vmem>>, vector<128x14xbf16>
    %c0_12 = arith.constant 0 : index
    %c0_13 = arith.constant 0 : index
    %10 = vector.load %arg2[%c0_12, %c0_13] : memref<14x256xbf16, #tpu.memory_space<vmem>>, vector<14x256xbf16>
    %cst = arith.constant dense<0.000000e+00> : vector<128x256xf32>
    %11 = tpu.matmul %9, %10, %cst {dimension_numbers = #tpu.dot_dimension_numbers<[1], [0], [0], [1], [0, 0, 1, 1], [], []>} : vector<128x14xbf16>, vector<14x256xbf16>, vector<128x256xf32> -> vector<128x256xf32>
    %12 = vector.broadcast %0 : vector<1x256xf32> to vector<128x256xf32>
    %13 = arith.addf %11, %12 : vector<128x256xf32>
    %cst_14 = arith.constant 0.000000e+00 : f32
    %14 = vector.broadcast %cst_14 : f32 to vector<128x256xf32>
    %15 = arith.cmpf ogt, %13, %14 : vector<128x256xf32>
    %cst_15 = arith.constant 0.00999999977 : f32
    %16 = vector.broadcast %cst_15 : f32 to vector<128x256xf32>
    %17 = arith.mulf %16, %13 : vector<128x256xf32>
    %18 = arith.select %15, %13, %17 : vector<128x256xi1>, vector<128x256xf32>
    %19 = arith.truncf %18 : vector<128x256xf32> to vector<128x256xbf16>
    %c0_16 = arith.constant 0 : index
    %c0_17 = arith.constant 0 : index
    %20 = vector.load %arg4[%c0_16, %c0_17] : memref<256x256xbf16, #tpu.memory_space<vmem>>, vector<256x256xbf16>
    %cst_18 = arith.constant dense<0.000000e+00> : vector<128x256xf32>
    %21 = tpu.matmul %19, %20, %cst_18 {dimension_numbers = #tpu.dot_dimension_numbers<[1], [0], [0], [1], [0, 0, 1, 1], [], []>} : vector<128x256xbf16>, vector<256x256xbf16>, vector<128x256xf32> -> vector<128x256xf32>
    %22 = vector.broadcast %1 : vector<1x256xf32> to vector<128x256xf32>
    %23 = arith.addf %21, %22 : vector<128x256xf32>
    %cst_19 = arith.constant 0.000000e+00 : f32
    %24 = vector.broadcast %cst_19 : f32 to vector<128x256xf32>
    %25 = arith.cmpf ogt, %23, %24 : vector<128x256xf32>
    %cst_20 = arith.constant 0.00999999977 : f32
    %26 = vector.broadcast %cst_20 : f32 to vector<128x256xf32>
    %27 = arith.mulf %26, %23 : vector<128x256xf32>
    %28 = arith.select %25, %23, %27 : vector<128x256xi1>, vector<128x256xf32>
    %29 = arith.truncf %28 : vector<128x256xf32> to vector<128x256xbf16>
    %c0_21 = arith.constant 0 : index
    %c0_22 = arith.constant 0 : index
    %30 = vector.load %arg6[%c0_21, %c0_22] : memref<256x256xbf16, #tpu.memory_space<vmem>>, vector<256x256xbf16>
    %cst_23 = arith.constant dense<0.000000e+00> : vector<128x256xf32>
    %31 = tpu.matmul %29, %30, %cst_23 {dimension_numbers = #tpu.dot_dimension_numbers<[1], [0], [0], [1], [0, 0, 1, 1], [], []>} : vector<128x256xbf16>, vector<256x256xbf16>, vector<128x256xf32> -> vector<128x256xf32>
    %32 = vector.broadcast %2 : vector<1x256xf32> to vector<128x256xf32>
    %33 = arith.addf %31, %32 : vector<128x256xf32>
    %cst_24 = arith.constant 0.000000e+00 : f32
    %34 = vector.broadcast %cst_24 : f32 to vector<128x256xf32>
    %35 = arith.cmpf ogt, %33, %34 : vector<128x256xf32>
    %cst_25 = arith.constant 0.00999999977 : f32
    %36 = vector.broadcast %cst_25 : f32 to vector<128x256xf32>
    %37 = arith.mulf %36, %33 : vector<128x256xf32>
    %38 = arith.select %35, %33, %37 : vector<128x256xi1>, vector<128x256xf32>
    %39 = arith.truncf %38 : vector<128x256xf32> to vector<128x256xbf16>
    %c0_26 = arith.constant 0 : index
    %c0_27 = arith.constant 0 : index
    %40 = vector.load %arg8[%c0_26, %c0_27] : memref<256x256xbf16, #tpu.memory_space<vmem>>, vector<256x256xbf16>
    %cst_28 = arith.constant dense<0.000000e+00> : vector<128x256xf32>
    %41 = tpu.matmul %39, %40, %cst_28 {dimension_numbers = #tpu.dot_dimension_numbers<[1], [0], [0], [1], [0, 0, 1, 1], [], []>} : vector<128x256xbf16>, vector<256x256xbf16>, vector<128x256xf32> -> vector<128x256xf32>
    %42 = vector.broadcast %3 : vector<1x256xf32> to vector<128x256xf32>
    %43 = arith.addf %41, %42 : vector<128x256xf32>
    %cst_29 = arith.constant 0.000000e+00 : f32
    %44 = vector.broadcast %cst_29 : f32 to vector<128x256xf32>
    %45 = arith.cmpf ogt, %43, %44 : vector<128x256xf32>
    %cst_30 = arith.constant 0.00999999977 : f32
    %46 = vector.broadcast %cst_30 : f32 to vector<128x256xf32>
    %47 = arith.mulf %46, %43 : vector<128x256xf32>
    %48 = arith.select %45, %43, %47 : vector<128x256xi1>, vector<128x256xf32>
    %49 = arith.truncf %48 : vector<128x256xf32> to vector<128x256xbf16>
    %c0_31 = arith.constant 0 : index
    %c0_32 = arith.constant 0 : index
    %50 = vector.load %arg10[%c0_31, %c0_32] : memref<256x256xbf16, #tpu.memory_space<vmem>>, vector<256x256xbf16>
    %cst_33 = arith.constant dense<0.000000e+00> : vector<128x256xf32>
    %51 = tpu.matmul %49, %50, %cst_33 {dimension_numbers = #tpu.dot_dimension_numbers<[1], [0], [0], [1], [0, 0, 1, 1], [], []>} : vector<128x256xbf16>, vector<256x256xbf16>, vector<128x256xf32> -> vector<128x256xf32>
    %52 = vector.broadcast %4 : vector<1x256xf32> to vector<128x256xf32>
    %53 = arith.addf %51, %52 : vector<128x256xf32>
    %cst_34 = arith.constant 0.000000e+00 : f32
    %54 = vector.broadcast %cst_34 : f32 to vector<128x256xf32>
    %55 = arith.cmpf ogt, %53, %54 : vector<128x256xf32>
    %cst_35 = arith.constant 0.00999999977 : f32
    %56 = vector.broadcast %cst_35 : f32 to vector<128x256xf32>
    %57 = arith.mulf %56, %53 : vector<128x256xf32>
    %58 = arith.select %55, %53, %57 : vector<128x256xi1>, vector<128x256xf32>
    %59 = arith.truncf %58 : vector<128x256xf32> to vector<128x256xbf16>
    %c0_36 = arith.constant 0 : index
    %c0_37 = arith.constant 0 : index
    %60 = vector.load %arg12[%c0_36, %c0_37] : memref<8x256xbf16, #tpu.memory_space<vmem>>, vector<8x256xbf16>
    %cst_38 = arith.constant dense<0.000000e+00> : vector<8x128xf32>
    %61 = tpu.matmul %60, %59, %cst_38 {dimension_numbers = #tpu.dot_dimension_numbers<[1], [1], [0], [0], [0, 0, 1, 0], [], []>} : vector<8x256xbf16>, vector<128x256xbf16>, vector<8x128xf32> -> vector<8x128xf32>
    %62 = vector.broadcast %5 : vector<8x1xf32> to vector<8x128xf32>
    %63 = arith.addf %61, %62 : vector<8x128xf32>
    %64 = arith.index_cast %c0_i32 : i32 to index
    %c0_39 = arith.constant 0 : index
    %c0_40 = arith.constant 0 : index
    %65 = vector.load %arg14[%64, %c0_39, %c0_40] : memref<2x8x128xf32, #tpu.memory_space<vmem>>, vector<1x8x128xf32>
    %66 = vector.shape_cast %65 : vector<1x8x128xf32> to vector<8x128xf32>
    %67 = vector.shape_cast %63 : vector<8x128xf32> to vector<1x8x128xf32>
    tpu.vector_store %arg14[%64, %c0_39, %c0_40], %67 {strides = array<i32>} : memref<2x8x128xf32, #tpu.memory_space<vmem>>, vector<1x8x128xf32>,
    %c1_i32 = arith.constant 1 : i32
    %c128_i32_41 = arith.constant 128 : i32
    %68 = arith.muli %c1_i32, %c128_i32_41 : i32
    %69 = tpu.assume_multiple %68, 128 : i32
    %70 = arith.index_cast %69 : i32 to index
    %c0_42 = arith.constant 0 : index
    %71 = vector.load %arg1[%70, %c0_42] : memref<256x14xbf16, #tpu.memory_space<vmem>>, vector<128x14xbf16>
    %c0_43 = arith.constant 0 : index
    %c0_44 = arith.constant 0 : index
    %72 = vector.load %arg2[%c0_43, %c0_44] : memref<14x256xbf16, #tpu.memory_space<vmem>>, vector<14x256xbf16>
    %cst_45 = arith.constant dense<0.000000e+00> : vector<128x256xf32>
    %73 = tpu.matmul %71, %72, %cst_45 {dimension_numbers = #tpu.dot_dimension_numbers<[1], [0], [0], [1], [0, 0, 1, 1], [], []>} : vector<128x14xbf16>, vector<14x256xbf16>, vector<128x256xf32> -> vector<128x256xf32>
    %74 = vector.broadcast %0 : vector<1x256xf32> to vector<128x256xf32>
    %75 = arith.addf %73, %74 : vector<128x256xf32>
    %cst_46 = arith.constant 0.000000e+00 : f32
    %76 = vector.broadcast %cst_46 : f32 to vector<128x256xf32>
    %77 = arith.cmpf ogt, %75, %76 : vector<128x256xf32>
    %cst_47 = arith.constant 0.00999999977 : f32
    %78 = vector.broadcast %cst_47 : f32 to vector<128x256xf32>
    %79 = arith.mulf %78, %75 : vector<128x256xf32>
    %80 = arith.select %77, %75, %79 : vector<128x256xi1>, vector<128x256xf32>
    %81 = arith.truncf %80 : vector<128x256xf32> to vector<128x256xbf16>
    %c0_48 = arith.constant 0 : index
    %c0_49 = arith.constant 0 : index
    %82 = vector.load %arg4[%c0_48, %c0_49] : memref<256x256xbf16, #tpu.memory_space<vmem>>, vector<256x256xbf16>
    %cst_50 = arith.constant dense<0.000000e+00> : vector<128x256xf32>
    %83 = tpu.matmul %81, %82, %cst_50 {dimension_numbers = #tpu.dot_dimension_numbers<[1], [0], [0], [1], [0, 0, 1, 1], [], []>} : vector<128x256xbf16>, vector<256x256xbf16>, vector<128x256xf32> -> vector<128x256xf32>
    %84 = vector.broadcast %1 : vector<1x256xf32> to vector<128x256xf32>
    %85 = arith.addf %83, %84 : vector<128x256xf32>
    %cst_51 = arith.constant 0.000000e+00 : f32
    %86 = vector.broadcast %cst_51 : f32 to vector<128x256xf32>
    %87 = arith.cmpf ogt, %85, %86 : vector<128x256xf32>
    %cst_52 = arith.constant 0.00999999977 : f32
    %88 = vector.broadcast %cst_52 : f32 to vector<128x256xf32>
    %89 = arith.mulf %88, %85 : vector<128x256xf32>
    %90 = arith.select %87, %85, %89 : vector<128x256xi1>, vector<128x256xf32>
    %91 = arith.truncf %90 : vector<128x256xf32> to vector<128x256xbf16>
    %c0_53 = arith.constant 0 : index
    %c0_54 = arith.constant 0 : index
    %92 = vector.load %arg6[%c0_53, %c0_54] : memref<256x256xbf16, #tpu.memory_space<vmem>>, vector<256x256xbf16>
    %cst_55 = arith.constant dense<0.000000e+00> : vector<128x256xf32>
    %93 = tpu.matmul %91, %92, %cst_55 {dimension_numbers = #tpu.dot_dimension_numbers<[1], [0], [0], [1], [0, 0, 1, 1], [], []>} : vector<128x256xbf16>, vector<256x256xbf16>, vector<128x256xf32> -> vector<128x256xf32>
    %94 = vector.broadcast %2 : vector<1x256xf32> to vector<128x256xf32>
    %95 = arith.addf %93, %94 : vector<128x256xf32>
    %cst_56 = arith.constant 0.000000e+00 : f32
    %96 = vector.broadcast %cst_56 : f32 to vector<128x256xf32>
    %97 = arith.cmpf ogt, %95, %96 : vector<128x256xf32>
    %cst_57 = arith.constant 0.00999999977 : f32
    %98 = vector.broadcast %cst_57 : f32 to vector<128x256xf32>
    %99 = arith.mulf %98, %95 : vector<128x256xf32>
    %100 = arith.select %97, %95, %99 : vector<128x256xi1>, vector<128x256xf32>
    %101 = arith.truncf %100 : vector<128x256xf32> to vector<128x256xbf16>
    %c0_58 = arith.constant 0 : index
    %c0_59 = arith.constant 0 : index
    %102 = vector.load %arg8[%c0_58, %c0_59] : memref<256x256xbf16, #tpu.memory_space<vmem>>, vector<256x256xbf16>
    %cst_60 = arith.constant dense<0.000000e+00> : vector<128x256xf32>
    %103 = tpu.matmul %101, %102, %cst_60 {dimension_numbers = #tpu.dot_dimension_numbers<[1], [0], [0], [1], [0, 0, 1, 1], [], []>} : vector<128x256xbf16>, vector<256x256xbf16>, vector<128x256xf32> -> vector<128x256xf32>
    %104 = vector.broadcast %3 : vector<1x256xf32> to vector<128x256xf32>
    %105 = arith.addf %103, %104 : vector<128x256xf32>
    %cst_61 = arith.constant 0.000000e+00 : f32
    %106 = vector.broadcast %cst_61 : f32 to vector<128x256xf32>
    %107 = arith.cmpf ogt, %105, %106 : vector<128x256xf32>
    %cst_62 = arith.constant 0.00999999977 : f32
    %108 = vector.broadcast %cst_62 : f32 to vector<128x256xf32>
    %109 = arith.mulf %108, %105 : vector<128x256xf32>
    %110 = arith.select %107, %105, %109 : vector<128x256xi1>, vector<128x256xf32>
    %111 = arith.truncf %110 : vector<128x256xf32> to vector<128x256xbf16>
    %c0_63 = arith.constant 0 : index
    %c0_64 = arith.constant 0 : index
    %112 = vector.load %arg10[%c0_63, %c0_64] : memref<256x256xbf16, #tpu.memory_space<vmem>>, vector<256x256xbf16>
    %cst_65 = arith.constant dense<0.000000e+00> : vector<128x256xf32>
    %113 = tpu.matmul %111, %112, %cst_65 {dimension_numbers = #tpu.dot_dimension_numbers<[1], [0], [0], [1], [0, 0, 1, 1], [], []>} : vector<128x256xbf16>, vector<256x256xbf16>, vector<128x256xf32> -> vector<128x256xf32>
    %114 = vector.broadcast %4 : vector<1x256xf32> to vector<128x256xf32>
    %115 = arith.addf %113, %114 : vector<128x256xf32>
    %cst_66 = arith.constant 0.000000e+00 : f32
    %116 = vector.broadcast %cst_66 : f32 to vector<128x256xf32>
    %117 = arith.cmpf ogt, %115, %116 : vector<128x256xf32>
    %cst_67 = arith.constant 0.00999999977 : f32
    %118 = vector.broadcast %cst_67 : f32 to vector<128x256xf32>
    %119 = arith.mulf %118, %115 : vector<128x256xf32>
    %120 = arith.select %117, %115, %119 : vector<128x256xi1>, vector<128x256xf32>
    %121 = arith.truncf %120 : vector<128x256xf32> to vector<128x256xbf16>
    %c0_68 = arith.constant 0 : index
    %c0_69 = arith.constant 0 : index
    %122 = vector.load %arg12[%c0_68, %c0_69] : memref<8x256xbf16, #tpu.memory_space<vmem>>, vector<8x256xbf16>
    %cst_70 = arith.constant dense<0.000000e+00> : vector<8x128xf32>
    %123 = tpu.matmul %122, %121, %cst_70 {dimension_numbers = #tpu.dot_dimension_numbers<[1], [1], [0], [0], [0, 0, 1, 0], [], []>} : vector<8x256xbf16>, vector<128x256xbf16>, vector<8x128xf32> -> vector<8x128xf32>
    %124 = vector.broadcast %5 : vector<8x1xf32> to vector<8x128xf32>
    %125 = arith.addf %123, %124 : vector<8x128xf32>
    %126 = arith.index_cast %c1_i32 : i32 to index
    %c0_71 = arith.constant 0 : index
    %c0_72 = arith.constant 0 : index
    %127 = vector.load %arg14[%126, %c0_71, %c0_72] : memref<2x8x128xf32, #tpu.memory_space<vmem>>, vector<1x8x128xf32>
    %128 = vector.shape_cast %127 : vector<1x8x128xf32> to vector<8x128xf32>
    %129 = vector.shape_cast %125 : vector<8x128xf32> to vector<1x8x128xf32>
    tpu.vector_store %arg14[%126, %c0_71, %c0_72], %129 {strides = array<i32>} : memref<2x8x128xf32, #tpu.memory_space<vmem>>, vector<1x8x128xf32>,
    %c2_i32 = arith.constant 2 : i32
    return
  }
  func.func @transform_0(%arg0: i32) -> (i32, i32) {
    %c0_i32 = arith.constant 0 : i32
    %c0_i32_0 = arith.constant 0 : i32
    return %arg0, %c0_i32 : i32, i32
  }
  func.func @transform_1(%arg0: i32) -> (i32, i32) {
    %c0_i32 = arith.constant 0 : i32
    %c0_i32_0 = arith.constant 0 : i32
    %c0_i32_1 = arith.constant 0 : i32
    return %c0_i32, %c0_i32_0 : i32, i32
  }
  func.func @transform_2(%arg0: i32) -> (i32, i32) {
    %c0_i32 = arith.constant 0 : i32
    %c0_i32_0 = arith.constant 0 : i32
    %c0_i32_1 = arith.constant 0 : i32
    return %c0_i32, %c0_i32_0 : i32, i32
  }
  func.func @transform_3(%arg0: i32) -> (i32, i32) {
    %c0_i32 = arith.constant 0 : i32
    %c0_i32_0 = arith.constant 0 : i32
    %c0_i32_1 = arith.constant 0 : i32
    return %c0_i32, %c0_i32_0 : i32, i32
  }
  func.func @transform_4(%arg0: i32) -> (i32, i32) {
    %c0_i32 = arith.constant 0 : i32
    %c0_i32_0 = arith.constant 0 : i32
    %c0_i32_1 = arith.constant 0 : i32
    return %c0_i32, %c0_i32_0 : i32, i32
  }
  func.func @transform_5(%arg0: i32) -> (i32, i32) {
    %c0_i32 = arith.constant 0 : i32
    %c0_i32_0 = arith.constant 0 : i32
    %c0_i32_1 = arith.constant 0 : i32
    return %c0_i32, %c0_i32_0 : i32, i32
  }
  func.func @transform_6(%arg0: i32) -> (i32, i32) {
    %c0_i32 = arith.constant 0 : i32
    %c0_i32_0 = arith.constant 0 : i32
    %c0_i32_1 = arith.constant 0 : i32
    return %c0_i32, %c0_i32_0 : i32, i32
  }
  func.func @transform_7(%arg0: i32) -> (i32, i32) {
    %c0_i32 = arith.constant 0 : i32
    %c0_i32_0 = arith.constant 0 : i32
    %c0_i32_1 = arith.constant 0 : i32
    return %c0_i32, %c0_i32_0 : i32, i32
  }
  func.func @transform_8(%arg0: i32) -> (i32, i32) {
    %c0_i32 = arith.constant 0 : i32
    %c0_i32_0 = arith.constant 0 : i32
    %c0_i32_1 = arith.constant 0 : i32
    return %c0_i32, %c0_i32_0 : i32, i32
  }
  func.func @transform_9(%arg0: i32) -> (i32, i32) {
    %c0_i32 = arith.constant 0 : i32
    %c0_i32_0 = arith.constant 0 : i32
    %c0_i32_1 = arith.constant 0 : i32
    return %c0_i32, %c0_i32_0 : i32, i32
  }
  func.func @transform_10(%arg0: i32) -> (i32, i32) {
    %c0_i32 = arith.constant 0 : i32
    %c0_i32_0 = arith.constant 0 : i32
    %c0_i32_1 = arith.constant 0 : i32
    return %c0_i32, %c0_i32_0 : i32, i32
  }
  func.func @transform_11(%arg0: i32) -> (i32, i32) {
    %c0_i32 = arith.constant 0 : i32
    %c0_i32_0 = arith.constant 0 : i32
    %c0_i32_1 = arith.constant 0 : i32
    return %c0_i32, %c0_i32_0 : i32, i32
  }
  func.func @transform_12(%arg0: i32) -> (i32, i32) {
    %c0_i32 = arith.constant 0 : i32
    %c0_i32_0 = arith.constant 0 : i32
    %c0_i32_1 = arith.constant 0 : i32
    return %c0_i32, %c0_i32_0 : i32, i32
  }
  func.func @transform_13(%arg0: i32) -> (i32, i32, i32) {
    %c0_i32 = arith.constant 0 : i32
    %c0_i32_0 = arith.constant 0 : i32
    %c0_i32_1 = arith.constant 0 : i32
    return %arg0, %c0_i32, %c0_i32_0 : i32, i32, i32
  }
}

</mosaic_0001>

<llo_original>
// kernel: neural_net_forward.1
$region0: #{neural_net_forward.1}
  #allocation0 [shape = 'u32[]', space=smem, size = 0x4, offset = 0x4, fixed_abs, tag = 'smem constant byte address 0x4 - core index']
  #allocation1 [shape = 'u32[144,128]{1,0:T(1,128)}', space=vmem, size = 0x12000, scoped, tag = 'internal scratch']
  %s0 = inlined_call_operand.vmem [shape: bf16[256,14], index: 0, kind: input, shape index: {}]
  %s1 = inlined_call_operand.vmem [shape: bf16[14,256], index: 1, kind: input, shape index: {}]
  %s2 = inlined_call_operand.vmem [shape: f32[1,256], index: 2, kind: input, shape index: {}]
  %s3 = inlined_call_operand.vmem [shape: bf16[256,256], index: 3, kind: input, shape index: {}]
  %s4 = inlined_call_operand.vmem [shape: f32[1,256], index: 4, kind: input, shape index: {}]
  %s5 = inlined_call_operand.vmem [shape: bf16[256,256], index: 5, kind: input, shape index: {}]
  %s6 = inlined_call_operand.vmem [shape: f32[1,256], index: 6, kind: input, shape index: {}]
  %s7 = inlined_call_operand.vmem [shape: bf16[256,256], index: 7, kind: input, shape index: {}]
  %s8 = inlined_call_operand.vmem [shape: f32[1,256], index: 8, kind: input, shape index: {}]
  %s9 = inlined_call_operand.vmem [shape: bf16[256,256], index: 9, kind: input, shape index: {}]
  %s10 = inlined_call_operand.vmem [shape: f32[1,256], index: 10, kind: input, shape index: {}]
  %s11 = inlined_call_operand.vmem [shape: bf16[8,256], index: 11, kind: input, shape index: {}]
  %s12 = inlined_call_operand.vmem [shape: f32[8,1], index: 12, kind: input, shape index: {}]
  %s13 = inlined_call_operand.vmem [shape: f32[2,8,128], index: 13, kind: output, shape index: {}]
  %s14 = sld [smem:[#allocation0]]
  $region62: #{neural_net_forward.1} parent=0
    _
  %s16 = ssub.s32 1, %s14
  %s17 = scalar_select 0, %s16, %s14
  // Predicated region
  $region2: #{neural_net_forward.1} parent=0 // pred_check
    _
  $region3: #{neural_net_forward.1} parent=0 // pred_check_branch
    %19 = sbr.rel (0) target = $region5
  $region4: #{neural_net_forward.1} parent=0 // pred_region
    _
  $region5: #{neural_net_forward.1} parent=0 // pred_fallthru
    _
  // Predicated region
  $region6: #{neural_net_forward.1} parent=0 // pred_check
    _
  $region7: #{neural_net_forward.1} parent=0 // pred_check_branch
    %21 = sbr.rel (0) target = $region9
  $region8: #{neural_net_forward.1} parent=0 // pred_region
    _
  $region9: #{neural_net_forward.1} parent=0 // pred_fallthru
    _
  // Predicated region
  $region10: #{neural_net_forward.1} parent=0 // pred_check
    _
  $region11: #{neural_net_forward.1} parent=0 // pred_check_branch
    %23 = sbr.rel (0) target = $region13
  $region12: #{neural_net_forward.1} parent=0 // pred_region
    _
  $region13: #{neural_net_forward.1} parent=0 // pred_fallthru
    _
  // Predicated region
  $region14: #{neural_net_forward.1} parent=0 // pred_check
    _
  $region15: #{neural_net_forward.1} parent=0 // pred_check_branch
    %25 = sbr.rel (0) target = $region17
  $region16: #{neural_net_forward.1} parent=0 // pred_region
    _
  $region17: #{neural_net_forward.1} parent=0 // pred_fallthru
    _
  // Predicated region
  $region18: #{neural_net_forward.1} parent=0 // pred_check
    _
  $region19: #{neural_net_forward.1} parent=0 // pred_check_branch
    %27 = sbr.rel (0) target = $region21
  $region20: #{neural_net_forward.1} parent=0 // pred_region
    _
  $region21: #{neural_net_forward.1} parent=0 // pred_fallthru
    _
  // Predicated region
  $region22: #{neural_net_forward.1} parent=0 // pred_check
    _
  $region23: #{neural_net_forward.1} parent=0 // pred_check_branch
    %29 = sbr.rel (0) target = $region25
  $region24: #{neural_net_forward.1} parent=0 // pred_region
    _
  $region25: #{neural_net_forward.1} parent=0 // pred_fallthru
    _
  // Predicated region
  $region26: #{neural_net_forward.1} parent=0 // pred_check
    _
  $region27: #{neural_net_forward.1} parent=0 // pred_check_branch
    %31 = sbr.rel (0) target = $region29
  $region28: #{neural_net_forward.1} parent=0 // pred_region
    _
  $region29: #{neural_net_forward.1} parent=0 // pred_fallthru
    _
  // Predicated region
  $region30: #{neural_net_forward.1} parent=0 // pred_check
    _
  $region31: #{neural_net_forward.1} parent=0 // pred_check_branch
    %33 = sbr.rel (0) target = $region33
  $region32: #{neural_net_forward.1} parent=0 // pred_region
    _
  $region33: #{neural_net_forward.1} parent=0 // pred_fallthru
    _
  // Predicated region
  $region34: #{neural_net_forward.1} parent=0 // pred_check
    _
  $region35: #{neural_net_forward.1} parent=0 // pred_check_branch
    %35 = sbr.rel (0) target = $region37
  $region36: #{neural_net_forward.1} parent=0 // pred_region
    _
  $region37: #{neural_net_forward.1} parent=0 // pred_fallthru
    _
  // Predicated region
  $region38: #{neural_net_forward.1} parent=0 // pred_check
    _
  $region39: #{neural_net_forward.1} parent=0 // pred_check_branch
    %37 = sbr.rel (0) target = $region41
  $region40: #{neural_net_forward.1} parent=0 // pred_region
    _
  $region41: #{neural_net_forward.1} parent=0 // pred_fallthru
    _
  // Predicated region
  $region42: #{neural_net_forward.1} parent=0 // pred_check
    _
  $region43: #{neural_net_forward.1} parent=0 // pred_check_branch
    %39 = sbr.rel (0) target = $region45
  $region44: #{neural_net_forward.1} parent=0 // pred_region
    _
  $region45: #{neural_net_forward.1} parent=0 // pred_fallthru
    _
  // Predicated region
  $region46: #{neural_net_forward.1} parent=0 // pred_check
    _
  $region47: #{neural_net_forward.1} parent=0 // pred_check_branch
    %41 = sbr.rel (0) target = $region49
  $region48: #{neural_net_forward.1} parent=0 // pred_region
    _
  $region49: #{neural_net_forward.1} parent=0 // pred_fallthru
    _
  // Predicated region
  $region50: #{neural_net_forward.1} parent=0 // pred_check
    _
  $region51: #{neural_net_forward.1} parent=0 // pred_check_branch
    %43 = sbr.rel (0) target = $region53
  $region52: #{neural_net_forward.1} parent=0 // pred_region
    _
  $region53: #{neural_net_forward.1} parent=0 // pred_fallthru
    _
  %v45 = vld [vmem:[%s2] sm:$0x3]
  %v46 = vld [vmem:[%s4] sm:$0x3]
  %v47 = vld [vmem:[%s6] sm:$0x3]
  %v48 = vld [vmem:[%s8] sm:$0x3]
  %v49 = vld [vmem:[%s10] sm:$0x3]
  %v50 = vld [vmem:[%s12] sm:$0xff]
  %v51 = vld [vmem:[%s0] sm:$0xf]
  %v52 = vld [vmem:[%s0 + $0x4] sm:$0xf]
  %v53 = vld [vmem:[%s0 + $0x8] sm:$0xf]
  %v54 = vld [vmem:[%s0 + $0xc] sm:$0xf]
  %v55 = vld [vmem:[%s0 + $0x10] sm:$0xf]
  %v56 = vld [vmem:[%s0 + $0x14] sm:$0xf]
  %v57 = vld [vmem:[%s0 + $0x18] sm:$0xf]
  %v58 = vld [vmem:[%s0 + $0x1c] sm:$0xf]
  %v59 = vld [vmem:[%s0 + $0x20] sm:$0xf]
  %v60 = vld [vmem:[%s0 + $0x24] sm:$0xf]
  %v61 = vld [vmem:[%s0 + $0x28] sm:$0xf]
  %v62 = vld [vmem:[%s0 + $0x2c] sm:$0xf]
  %v63 = vld [vmem:[%s0 + $0x30] sm:$0xf]
  %v64 = vld [vmem:[%s0 + $0x34] sm:$0xf]
  %v65 = vld [vmem:[%s0 + $0x38] sm:$0xf]
  %v66 = vld [vmem:[%s0 + $0x3c] sm:$0xf]
  %v67 = vld [vmem:[%s1] sm:$0xff]
  %v68 = vld [vmem:[%s1 + $0x8] sm:$0x77]
  %v70 = vlaneseq
  %v71 = vshrl.u32 %v70, 7
  %v72 = vsub.s32 0, %v71
  %v73 = vrot.slane %v45, %v72
  %v74 = vlaneseq
  %v75 = vshrl.u32 %v74, 7
  %v76 = vsub.s32 1, %v75
  %v77 = vrot.slane %v45, %v76
  %v96 = vunpack.c.l.b16 %v51
  %v97 = vunpack.c.l.b16 %v52
  %v98 = vunpack.c.l.b16 %v53
  %v99 = vunpack.c.l.b16 %v54
  %v100 = vunpack.c.l.b16 %v55
  %v101 = vunpack.c.l.b16 %v56
  %v102 = vunpack.c.l.b16 %v57
  %v103 = vunpack.c.l.b16 %v58
  %v104 = vunpack.c.l.b16 %v59
  %v105 = vunpack.c.l.b16 %v60
  %v106 = vunpack.c.l.b16 %v61
  %v107 = vunpack.c.l.b16 %v62
  %v108 = vunpack.c.l.b16 %v63
  %v109 = vunpack.c.l.b16 %v64
  %v110 = vunpack.c.l.b16 %v65
  %v111 = vunpack.c.l.b16 %v66
  %v112 = vpack.c.b16 %v97, %v96
  %v113 = vpack.c.b16 %v99, %v98
  %v114 = vpack.c.b16 %v101, %v100
  %v115 = vpack.c.b16 %v103, %v102
  %v116 = vpack.c.b16 %v105, %v104
  %v117 = vpack.c.b16 %v107, %v106
  %v118 = vpack.c.b16 %v109, %v108
  %v119 = vpack.c.b16 %v111, %v110
  %v122 = vunpack.c.l.b16 %v67
  %v123 = vunpack.c.h.b16 %v67
  %v124 = vunpack.c.l.b16 %v68
  %v125 = vunpack.c.h.b16 %v68
  %v126 = vpack.c.b16 %v124, %v122
  %v127 = vpack.c.b16 %v125, %v123
  %vm128 = vcmask 113664
  %v130 = vsel %vm128, %v112, 0
  %v133 = vsel %vm128, %v113, 0
  %v136 = vsel %vm128, %v114, 0
  %v139 = vsel %vm128, %v115, 0
  %v142 = vsel %vm128, %v116, 0
  %v145 = vsel %vm128, %v117, 0
  %v148 = vsel %vm128, %v118, 0
  %v151 = vsel %vm128, %v119, 0
  %vm153 = vcmask 1046528
  %v155 = vsel %vm153, %v126, 0
  %v158 = vsel %vm153, %v127, 0
  %160 = vmatprep.subr.bf16.mxu0 %v158
  %161 = vmatpush1.bf16.msra.mxu0 %v155
  %162 = vmatprep.subr.bf16.mxu0 0
  %163 = vmatpush1.bf16.msra.mxu0 0
  %164 = vmatprep.subr.bf16.mxu0 0
  %165 = vmatpush1.bf16.msra.mxu0 0
  %166 = vmatprep.subr.bf16.mxu0 0
  %167 = vmatpush1.bf16.msra.mxu0 0
  %168 = vmatprep.subr.bf16.mxu0 0
  %169 = vmatpush1.bf16.msra.mxu0 0
  %170 = vmatprep.subr.bf16.mxu0 0
  %171 = vmatpush1.bf16.msra.mxu0 0
  %172 = vmatprep.subr.bf16.mxu0 0
  %173 = vmatpush1.bf16.msra.mxu0 0
  %174 = vmatprep.subr.bf16.mxu0 0
  %175 = vmatpush1.bf16.msra.mxu0 0
  %176 = vmatprep.subr.bf16.mxu0 0
  %177 = vmatpush1.bf16.msra.mxu0 0
  %178 = vmatprep.subr.bf16.mxu0 0
  %179 = vmatpush1.bf16.msra.mxu0 0
  %180 = vmatprep.subr.bf16.mxu0 0
  %181 = vmatpush1.bf16.msra.mxu0 0
  %182 = vmatprep.subr.bf16.mxu0 0
  %183 = vmatpush1.bf16.msra.mxu0 0
  %184 = vmatprep.subr.bf16.mxu0 0
  %185 = vmatpush1.bf16.msra.mxu0 0
  %186 = vmatprep.subr.bf16.mxu0 0
  %187 = vmatpush1.bf16.msra.mxu0 0
  %188 = vmatprep.subr.bf16.mxu0 0
  %189 = vmatpush1.bf16.msra.mxu0 0
  %190 = vmatprep.subr.bf16.mxu0 0
  %191 = vmatpush1.bf16.msra.mxu0 0
  %192 = vmatprep.mubr.bf16.mxu0 0
  %193 = vmatmul.mubr.bf16.gmra.mrb[0].mxu0 %v130
  %v194 = vpop.f32.mrb[0].mxu0
  %v195 = vadd.f32 %v73, %v194
  %v196 = vpop.f32.mrb[0].mxu0
  %v197 = vadd.f32 %v77, %v196
  %v198 = vpop.f32.mrb[0].mxu0
  %v199 = vadd.f32 %v73, %v198
  %v200 = vpop.f32.mrb[0].mxu0
  %v201 = vadd.f32 %v77, %v200
  %202 = vmatprep.mubr.bf16.mxu0 0
  %203 = vmatmul.mubr.bf16.gmra.mrb[0].mxu0 %v133
  %v204 = vpop.f32.mrb[0].mxu0
  %v205 = vadd.f32 %v73, %v204
  %v206 = vpop.f32.mrb[0].mxu0
  %v207 = vadd.f32 %v77, %v206
  %v208 = vpop.f32.mrb[0].mxu0
  %v209 = vadd.f32 %v73, %v208
  %v210 = vpop.f32.mrb[0].mxu0
  %v211 = vadd.f32 %v77, %v210
  %212 = vmatprep.mubr.bf16.mxu0 0
  %213 = vmatmul.mubr.bf16.gmra.mrb[0].mxu0 %v136
  %v214 = vpop.f32.mrb[0].mxu0
  %v215 = vadd.f32 %v73, %v214
  %v216 = vpop.f32.mrb[0].mxu0
  %v217 = vadd.f32 %v77, %v216
  %v218 = vpop.f32.mrb[0].mxu0
  %v219 = vadd.f32 %v73, %v218
  %v220 = vpop.f32.mrb[0].mxu0
  %v221 = vadd.f32 %v77, %v220
  %222 = vmatprep.mubr.bf16.mxu0 0
  %223 = vmatmul.mubr.bf16.gmra.mrb[0].mxu0 %v139
  %v224 = vpop.f32.mrb[0].mxu0
  %v225 = vadd.f32 %v73, %v224
  %v226 = vpop.f32.mrb[0].mxu0
  %v227 = vadd.f32 %v77, %v226
  %v228 = vpop.f32.mrb[0].mxu0
  %v229 = vadd.f32 %v73, %v228
  %v230 = vpop.f32.mrb[0].mxu0
  %v231 = vadd.f32 %v77, %v230
  %232 = vmatprep.mubr.bf16.mxu0 0
  %233 = vmatmul.mubr.bf16.gmra.mrb[0].mxu0 %v142
  %v234 = vpop.f32.mrb[0].mxu0
  %v235 = vadd.f32 %v73, %v234
  %v236 = vpop.f32.mrb[0].mxu0
  %v237 = vadd.f32 %v77, %v236
  %v238 = vpop.f32.mrb[0].mxu0
  %v239 = vadd.f32 %v73, %v238
  %v240 = vpop.f32.mrb[0].mxu0
  %v241 = vadd.f32 %v77, %v240
  %242 = vmatprep.mubr.bf16.mxu0 0
  %243 = vmatmul.mubr.bf16.gmra.mrb[0].mxu0 %v145
  %v244 = vpop.f32.mrb[0].mxu0
  %v245 = vadd.f32 %v73, %v244
  %v246 = vpop.f32.mrb[0].mxu0
  %v247 = vadd.f32 %v77, %v246
  %v248 = vpop.f32.mrb[0].mxu0
  %v249 = vadd.f32 %v73, %v248
  %v250 = vpop.f32.mrb[0].mxu0
  %v251 = vadd.f32 %v77, %v250
  %252 = vmatprep.mubr.bf16.mxu0 0
  %253 = vmatmul.mubr.bf16.gmra.mrb[0].mxu0 %v148
  %v254 = vpop.f32.mrb[0].mxu0
  %v255 = vadd.f32 %v73, %v254
  %v256 = vpop.f32.mrb[0].mxu0
  %v257 = vadd.f32 %v77, %v256
  %v258 = vpop.f32.mrb[0].mxu0
  %v259 = vadd.f32 %v73, %v258
  %v260 = vpop.f32.mrb[0].mxu0
  %v261 = vadd.f32 %v77, %v260
  %262 = vmatprep.mubr.bf16.mxu0 0
  %263 = vmatmul.mubr.bf16.gmra.mrb[0].mxu0 %v151
  %v264 = vpop.f32.mrb[0].mxu0
  %v265 = vadd.f32 %v73, %v264
  %v266 = vpop.f32.mrb[0].mxu0
  %v267 = vadd.f32 %v77, %v266
  %v268 = vpop.f32.mrb[0].mxu0
  %v269 = vadd.f32 %v73, %v268
  %v270 = vpop.f32.mrb[0].mxu0
  %v271 = vadd.f32 %v77, %v270
  %272 = vdwg.mxu0
  %vm273 = vcmp.gt.f32.partialorder %v195, 0.0
  %vm274 = vcmp.gt.f32.partialorder %v197, 0.0
  %vm275 = vcmp.gt.f32.partialorder %v199, 0.0
  %vm276 = vcmp.gt.f32.partialorder %v201, 0.0
  %vm277 = vcmp.gt.f32.partialorder %v205, 0.0
  %vm278 = vcmp.gt.f32.partialorder %v207, 0.0
  %vm279 = vcmp.gt.f32.partialorder %v209, 0.0
  %vm280 = vcmp.gt.f32.partialorder %v211, 0.0
  %vm281 = vcmp.gt.f32.partialorder %v215, 0.0
  %vm282 = vcmp.gt.f32.partialorder %v217, 0.0
  %vm283 = vcmp.gt.f32.partialorder %v219, 0.0
  %vm284 = vcmp.gt.f32.partialorder %v221, 0.0
  %vm285 = vcmp.gt.f32.partialorder %v225, 0.0
  %vm286 = vcmp.gt.f32.partialorder %v227, 0.0
  %vm287 = vcmp.gt.f32.partialorder %v229, 0.0
  %vm288 = vcmp.gt.f32.partialorder %v231, 0.0
  %vm289 = vcmp.gt.f32.partialorder %v235, 0.0
  %vm290 = vcmp.gt.f32.partialorder %v237, 0.0
  %vm291 = vcmp.gt.f32.partialorder %v239, 0.0
  %vm292 = vcmp.gt.f32.partialorder %v241, 0.0
  %vm293 = vcmp.gt.f32.partialorder %v245, 0.0
  %vm294 = vcmp.gt.f32.partialorder %v247, 0.0
  %vm295 = vcmp.gt.f32.partialorder %v249, 0.0
  %vm296 = vcmp.gt.f32.partialorder %v251, 0.0
  %vm297 = vcmp.gt.f32.partialorder %v255, 0.0
  %vm298 = vcmp.gt.f32.partialorder %v257, 0.0
  %vm299 = vcmp.gt.f32.partialorder %v259, 0.0
  %vm300 = vcmp.gt.f32.partialorder %v261, 0.0
  %vm301 = vcmp.gt.f32.partialorder %v265, 0.0
  %vm302 = vcmp.gt.f32.partialorder %v267, 0.0
  %vm303 = vcmp.gt.f32.partialorder %v269, 0.0
  %vm304 = vcmp.gt.f32.partialorder %v271, 0.0
  %v305 = vmul.f32 %v195, 0.01
  %v306 = vmul.f32 %v197, 0.01
  %v307 = vmul.f32 %v199, 0.01
  %v308 = vmul.f32 %v201, 0.01
  %v309 = vmul.f32 %v205, 0.01
  %v310 = vmul.f32 %v207, 0.01
  %v311 = vmul.f32 %v209, 0.01
  %v312 = vmul.f32 %v211, 0.01
  %v313 = vmul.f32 %v215, 0.01
  %v314 = vmul.f32 %v217, 0.01
  %v315 = vmul.f32 %v219, 0.01
  %v316 = vmul.f32 %v221, 0.01
  %v317 = vmul.f32 %v225, 0.01
  %v318 = vmul.f32 %v227, 0.01
  %v319 = vmul.f32 %v229, 0.01
  %v320 = vmul.f32 %v231, 0.01
  %v321 = vmul.f32 %v235, 0.01
  %v322 = vmul.f32 %v237, 0.01
  %v323 = vmul.f32 %v239, 0.01
  %v324 = vmul.f32 %v241, 0.01
  %v325 = vmul.f32 %v245, 0.01
  %v326 = vmul.f32 %v247, 0.01
  %v327 = vmul.f32 %v249, 0.01
  %v328 = vmul.f32 %v251, 0.01
  %v329 = vmul.f32 %v255, 0.01
  %v330 = vmul.f32 %v257, 0.01
  %v331 = vmul.f32 %v259, 0.01
  %v332 = vmul.f32 %v261, 0.01
  %v333 = vmul.f32 %v265, 0.01
  %v334 = vmul.f32 %v267, 0.01
  %v335 = vmul.f32 %v269, 0.01
  %v336 = vmul.f32 %v271, 0.01
  %v337 = vsel %vm273, %v195, %v305
  %v338 = vsel %vm274, %v197, %v306
  %v339 = vsel %vm275, %v199, %v307
  %v340 = vsel %vm276, %v201, %v308
  %v341 = vsel %vm277, %v205, %v309
  %v342 = vsel %vm278, %v207, %v310
  %v343 = vsel %vm279, %v209, %v311
  %v344 = vsel %vm280, %v211, %v312
  %v345 = vsel %vm281, %v215, %v313
  %v346 = vsel %vm282, %v217, %v314
  %v347 = vsel %vm283, %v219, %v315
  %v348 = vsel %vm284, %v221, %v316
  %v349 = vsel %vm285, %v225, %v317
  %v350 = vsel %vm286, %v227, %v318
  %v351 = vsel %vm287, %v229, %v319
  %v352 = vsel %vm288, %v231, %v320
  %v353 = vsel %vm289, %v235, %v321
  %v354 = vsel %vm290, %v237, %v322
  %v355 = vsel %vm291, %v239, %v323
  %v356 = vsel %vm292, %v241, %v324
  %v357 = vsel %vm293, %v245, %v325
  %v358 = vsel %vm294, %v247, %v326
  %v359 = vsel %vm295, %v249, %v327
  %v360 = vsel %vm296, %v251, %v328
  %v361 = vsel %vm297, %v255, %v329
  %v362 = vsel %vm298, %v257, %v330
  %v363 = vsel %vm299, %v259, %v331
  %v364 = vsel %vm300, %v261, %v332
  %v365 = vsel %vm301, %v265, %v333
  %v366 = vsel %vm302, %v267, %v334
  %v367 = vsel %vm303, %v269, %v335
  %v368 = vsel %vm304, %v271, %v336
  %v369 = vpack.c.bf16 %v339, %v337
  %v370 = vpack.c.bf16 %v340, %v338
  %v371 = vpack.c.bf16 %v343, %v341
  %v372 = vpack.c.bf16 %v344, %v342
  %v373 = vpack.c.bf16 %v347, %v345
  %v374 = vpack.c.bf16 %v348, %v346
  %v375 = vpack.c.bf16 %v351, %v349
  %v376 = vpack.c.bf16 %v352, %v350
  %v377 = vpack.c.bf16 %v355, %v353
  %v378 = vpack.c.bf16 %v356, %v354
  %v379 = vpack.c.bf16 %v359, %v357
  %v380 = vpack.c.bf16 %v360, %v358
  %v381 = vpack.c.bf16 %v363, %v361
  %v382 = vpack.c.bf16 %v364, %v362
  %v383 = vpack.c.bf16 %v367, %v365
  %v384 = vpack.c.bf16 %v368, %v366
  %v385 = vld [vmem:[%s3] sm:$0xff]
  %v386 = vld [vmem:[%s3 + $0x8] sm:$0xff]
  %v387 = vld [vmem:[%s3 + $0x10] sm:$0xff]
  %v388 = vld [vmem:[%s3 + $0x18] sm:$0xff]
  %v389 = vld [vmem:[%s3 + $0x20] sm:$0xff]
  %v390 = vld [vmem:[%s3 + $0x28] sm:$0xff]
  %v391 = vld [vmem:[%s3 + $0x30] sm:$0xff]
  %v392 = vld [vmem:[%s3 + $0x38] sm:$0xff]
  %v393 = vld [vmem:[%s3 + $0x40] sm:$0xff]
  %v394 = vld [vmem:[%s3 + $0x48] sm:$0xff]
  %v395 = vld [vmem:[%s3 + $0x50] sm:$0xff]
  %v396 = vld [vmem:[%s3 + $0x58] sm:$0xff]
  %v397 = vld [vmem:[%s3 + $0x60] sm:$0xff]
  %v398 = vld [vmem:[%s3 + $0x68] sm:$0xff]
  %v399 = vld [vmem:[%s3 + $0x70] sm:$0xff]
  %v400 = vld [vmem:[%s3 + $0x78] sm:$0xff]
  %v401 = vld [vmem:[%s3 + $0x80] sm:$0xff]
  %v402 = vld [vmem:[%s3 + $0x88] sm:$0xff]
  %v403 = vld [vmem:[%s3 + $0x90] sm:$0xff]
  %v404 = vld [vmem:[%s3 + $0x98] sm:$0xff]
  %v405 = vld [vmem:[%s3 + $0xa0] sm:$0xff]
  %v406 = vld [vmem:[%s3 + $0xa8] sm:$0xff]
  %v407 = vld [vmem:[%s3 + $0xb0] sm:$0xff]
  %v408 = vld [vmem:[%s3 + $0xb8] sm:$0xff]
  %v409 = vld [vmem:[%s3 + $0xc0] sm:$0xff]
  %v410 = vld [vmem:[%s3 + $0xc8] sm:$0xff]
  %v411 = vld [vmem:[%s3 + $0xd0] sm:$0xff]
  %v412 = vld [vmem:[%s3 + $0xd8] sm:$0xff]
  %v413 = vld [vmem:[%s3 + $0xe0] sm:$0xff]
  %v414 = vld [vmem:[%s3 + $0xe8] sm:$0xff]
  %v415 = vld [vmem:[%s3 + $0xf0] sm:$0xff]
  %v416 = vld [vmem:[%s3 + $0xf8] sm:$0xff]
  %v418 = vlaneseq
  %v419 = vshrl.u32 %v418, 7
  %v420 = vsub.s32 0, %v419
  %v421 = vrot.slane %v46, %v420
  %v422 = vlaneseq
  %v423 = vshrl.u32 %v422, 7
  %v424 = vsub.s32 1, %v423
  %v425 = vrot.slane %v46, %v424
  %v460 = vunpack.c.l.b16 %v385
  %v461 = vunpack.c.h.b16 %v385
  %v462 = vunpack.c.l.b16 %v386
  %v463 = vunpack.c.h.b16 %v386
  %v464 = vunpack.c.l.b16 %v387
  %v465 = vunpack.c.h.b16 %v387
  %v466 = vunpack.c.l.b16 %v388
  %v467 = vunpack.c.h.b16 %v388
  %v468 = vunpack.c.l.b16 %v389
  %v469 = vunpack.c.h.b16 %v389
  %v470 = vunpack.c.l.b16 %v390
  %v471 = vunpack.c.h.b16 %v390
  %v472 = vunpack.c.l.b16 %v391
  %v473 = vunpack.c.h.b16 %v391
  %v474 = vunpack.c.l.b16 %v392
  %v475 = vunpack.c.h.b16 %v392
  %v476 = vunpack.c.l.b16 %v393
  %v477 = vunpack.c.h.b16 %v393
  %v478 = vunpack.c.l.b16 %v394
  %v479 = vunpack.c.h.b16 %v394
  %v480 = vunpack.c.l.b16 %v395
  %v481 = vunpack.c.h.b16 %v395
  %v482 = vunpack.c.l.b16 %v396
  %v483 = vunpack.c.h.b16 %v396
  %v484 = vunpack.c.l.b16 %v397
  %v485 = vunpack.c.h.b16 %v397
  %v486 = vunpack.c.l.b16 %v398
  %v487 = vunpack.c.h.b16 %v398
  %v488 = vunpack.c.l.b16 %v399
  %v489 = vunpack.c.h.b16 %v399
  %v490 = vunpack.c.l.b16 %v400
  %v491 = vunpack.c.h.b16 %v400
  %v492 = vunpack.c.l.b16 %v401
  %v493 = vunpack.c.h.b16 %v401
  %v494 = vunpack.c.l.b16 %v402
  %v495 = vunpack.c.h.b16 %v402
  %v496 = vunpack.c.l.b16 %v403
  %v497 = vunpack.c.h.b16 %v403
  %v498 = vunpack.c.l.b16 %v404
  %v499 = vunpack.c.h.b16 %v404
  %v500 = vunpack.c.l.b16 %v405
  %v501 = vunpack.c.h.b16 %v405
  %v502 = vunpack.c.l.b16 %v406
  %v503 = vunpack.c.h.b16 %v406
  %v504 = vunpack.c.l.b16 %v407
  %v505 = vunpack.c.h.b16 %v407
  %v506 = vunpack.c.l.b16 %v408
  %v507 = vunpack.c.h.b16 %v408
  %v508 = vunpack.c.l.b16 %v409
  %v509 = vunpack.c.h.b16 %v409
  %v510 = vunpack.c.l.b16 %v410
  %v511 = vunpack.c.h.b16 %v410
  %v512 = vunpack.c.l.b16 %v411
  %v513 = vunpack.c.h.b16 %v411
  %v514 = vunpack.c.l.b16 %v412
  %v515 = vunpack.c.h.b16 %v412
  %v516 = vunpack.c.l.b16 %v413
  %v517 = vunpack.c.h.b16 %v413
  %v518 = vunpack.c.l.b16 %v414
  %v519 = vunpack.c.h.b16 %v414
  %v520 = vunpack.c.l.b16 %v415
  %v521 = vunpack.c.h.b16 %v415
  %v522 = vunpack.c.l.b16 %v416
  %v523 = vunpack.c.h.b16 %v416
  %v524 = vpack.c.b16 %v462, %v460
  %v525 = vpack.c.b16 %v463, %v461
  %v526 = vpack.c.b16 %v466, %v464
  %v527 = vpack.c.b16 %v467, %v465
  %v528 = vpack.c.b16 %v470, %v468
  %v529 = vpack.c.b16 %v471, %v469
  %v530 = vpack.c.b16 %v474, %v472
  %v531 = vpack.c.b16 %v475, %v473
  %v532 = vpack.c.b16 %v478, %v476
  %v533 = vpack.c.b16 %v479, %v477
  %v534 = vpack.c.b16 %v482, %v480
  %v535 = vpack.c.b16 %v483, %v481
  %v536 = vpack.c.b16 %v486, %v484
  %v537 = vpack.c.b16 %v487, %v485
  %v538 = vpack.c.b16 %v490, %v488
  %v539 = vpack.c.b16 %v491, %v489
  %v540 = vpack.c.b16 %v494, %v492
  %v541 = vpack.c.b16 %v495, %v493
  %v542 = vpack.c.b16 %v498, %v496
  %v543 = vpack.c.b16 %v499, %v497
  %v544 = vpack.c.b16 %v502, %v500
  %v545 = vpack.c.b16 %v503, %v501
  %v546 = vpack.c.b16 %v506, %v504
  %v547 = vpack.c.b16 %v507, %v505
  %v548 = vpack.c.b16 %v510, %v508
  %v549 = vpack.c.b16 %v511, %v509
  %v550 = vpack.c.b16 %v514, %v512
  %v551 = vpack.c.b16 %v515, %v513
  %v552 = vpack.c.b16 %v518, %v516
  %v553 = vpack.c.b16 %v519, %v517
  %v554 = vpack.c.b16 %v522, %v520
  %v555 = vpack.c.b16 %v523, %v521
  %588 = vmatprep.subr.bf16.mxu0 %v525
  %589 = vmatpush1.bf16.msra.mxu0 %v524
  %590 = vmatprep.subr.bf16.mxu0 %v527
  %591 = vmatpush1.bf16.msra.mxu0 %v526
  %592 = vmatprep.subr.bf16.mxu0 %v529
  %593 = vmatpush1.bf16.msra.mxu0 %v528
  %594 = vmatprep.subr.bf16.mxu0 %v531
  %595 = vmatpush1.bf16.msra.mxu0 %v530
  %596 = vmatprep.subr.bf16.mxu0 %v533
  %597 = vmatpush1.bf16.msra.mxu0 %v532
  %598 = vmatprep.subr.bf16.mxu0 %v535
  %599 = vmatpush1.bf16.msra.mxu0 %v534
  %600 = vmatprep.subr.bf16.mxu0 %v537
  %601 = vmatpush1.bf16.msra.mxu0 %v536
  %602 = vmatprep.subr.bf16.mxu0 %v539
  %603 = vmatpush1.bf16.msra.mxu0 %v538
  %604 = vmatprep.subr.bf16.mxu0 %v541
  %605 = vmatpush1.bf16.msra.mxu0 %v540
  %606 = vmatprep.subr.bf16.mxu0 %v543
  %607 = vmatpush1.bf16.msra.mxu0 %v542
  %608 = vmatprep.subr.bf16.mxu0 %v545
  %609 = vmatpush1.bf16.msra.mxu0 %v544
  %610 = vmatprep.subr.bf16.mxu0 %v547
  %611 = vmatpush1.bf16.msra.mxu0 %v546
  %612 = vmatprep.subr.bf16.mxu0 %v549
  %613 = vmatpush1.bf16.msra.mxu0 %v548
  %614 = vmatprep.subr.bf16.mxu0 %v551
  %615 = vmatpush1.bf16.msra.mxu0 %v550
  %616 = vmatprep.subr.bf16.mxu0 %v553
  %617 = vmatpush1.bf16.msra.mxu0 %v552
  %618 = vmatprep.subr.bf16.mxu0 %v555
  %619 = vmatpush1.bf16.msra.mxu0 %v554
  %620 = vmatprep.mubr.bf16.mxu0 %v370
  %621 = vmatmul.mubr.bf16.gmra.mrb[0].mxu0 %v369
  %v622 = vpop.f32.mrb[0].mxu0
  %v623 = vadd.f32 %v421, %v622
  %v624 = vpop.f32.mrb[0].mxu0
  %v625 = vadd.f32 %v425, %v624
  %v626 = vpop.f32.mrb[0].mxu0
  %v627 = vadd.f32 %v421, %v626
  %v628 = vpop.f32.mrb[0].mxu0
  %v629 = vadd.f32 %v425, %v628
  %630 = vmatprep.mubr.bf16.mxu0 %v372
  %631 = vmatmul.mubr.bf16.gmra.mrb[0].mxu0 %v371
  %v632 = vpop.f32.mrb[0].mxu0
  %v633 = vadd.f32 %v421, %v632
  %v634 = vpop.f32.mrb[0].mxu0
  %v635 = vadd.f32 %v425, %v634
  %v636 = vpop.f32.mrb[0].mxu0
  %v637 = vadd.f32 %v421, %v636
  %v638 = vpop.f32.mrb[0].mxu0
  %v639 = vadd.f32 %v425, %v638
  %640 = vmatprep.mubr.bf16.mxu0 %v374
  %641 = vmatmul.mubr.bf16.gmra.mrb[0].mxu0 %v373
  %v642 = vpop.f32.mrb[0].mxu0
  %v643 = vadd.f32 %v421, %v642
  %v644 = vpop.f32.mrb[0].mxu0
  %v645 = vadd.f32 %v425, %v644
  %v646 = vpop.f32.mrb[0].mxu0
  %v647 = vadd.f32 %v421, %v646
  %v648 = vpop.f32.mrb[0].mxu0
  %v649 = vadd.f32 %v425, %v648
  %650 = vmatprep.mubr.bf16.mxu0 %v376
  %651 = vmatmul.mubr.bf16.gmra.mrb[0].mxu0 %v375
  %v652 = vpop.f32.mrb[0].mxu0
  %v653 = vadd.f32 %v421, %v652
  %v654 = vpop.f32.mrb[0].mxu0
  %v655 = vadd.f32 %v425, %v654
  %v656 = vpop.f32.mrb[0].mxu0
  %v657 = vadd.f32 %v421, %v656
  %v658 = vpop.f32.mrb[0].mxu0
  %v659 = vadd.f32 %v425, %v658
  %660 = vmatprep.mubr.bf16.mxu0 %v378
  %661 = vmatmul.mubr.bf16.gmra.mrb[0].mxu0 %v377
  %v662 = vpop.f32.mrb[0].mxu0
  %v663 = vadd.f32 %v421, %v662
  %v664 = vpop.f32.mrb[0].mxu0
  %v665 = vadd.f32 %v425, %v664
  %v666 = vpop.f32.mrb[0].mxu0
  %v667 = vadd.f32 %v421, %v666
  %v668 = vpop.f32.mrb[0].mxu0
  %v669 = vadd.f32 %v425, %v668
  %670 = vmatprep.mubr.bf16.mxu0 %v380
  %671 = vmatmul.mubr.bf16.gmra.mrb[0].mxu0 %v379
  %v672 = vpop.f32.mrb[0].mxu0
  %v673 = vadd.f32 %v421, %v672
  %v674 = vpop.f32.mrb[0].mxu0
  %v675 = vadd.f32 %v425, %v674
  %v676 = vpop.f32.mrb[0].mxu0
  %v677 = vadd.f32 %v421, %v676
  %v678 = vpop.f32.mrb[0].mxu0
  %v679 = vadd.f32 %v425, %v678
  %680 = vmatprep.mubr.bf16.mxu0 %v382
  %681 = vmatmul.mubr.bf16.gmra.mrb[0].mxu0 %v381
  %v682 = vpop.f32.mrb[0].mxu0
  %v683 = vadd.f32 %v421, %v682
  %v684 = vpop.f32.mrb[0].mxu0
  %v685 = vadd.f32 %v425, %v684
  %v686 = vpop.f32.mrb[0].mxu0
  %v687 = vadd.f32 %v421, %v686
  %v688 = vpop.f32.mrb[0].mxu0
  %v689 = vadd.f32 %v425, %v688
  %690 = vmatprep.mubr.bf16.mxu0 %v384
  %691 = vmatmul.mubr.bf16.gmra.mrb[0].mxu0 %v383
  %v692 = vpop.f32.mrb[0].mxu0
  %v693 = vadd.f32 %v421, %v692
  %v694 = vpop.f32.mrb[0].mxu0
  %v695 = vadd.f32 %v425, %v694
  %v696 = vpop.f32.mrb[0].mxu0
  %v697 = vadd.f32 %v421, %v696
  %v698 = vpop.f32.mrb[0].mxu0
  %v699 = vadd.f32 %v425, %v698
  %700 = vdwg.mxu0
  %vm701 = vcmp.gt.f32.partialorder %v623, 0.0
  %vm702 = vcmp.gt.f32.partialorder %v625, 0.0
  %vm703 = vcmp.gt.f32.partialorder %v627, 0.0
  %vm704 = vcmp.gt.f32.partialorder %v629, 0.0
  %vm705 = vcmp.gt.f32.partialorder %v633, 0.0
  %vm706 = vcmp.gt.f32.partialorder %v635, 0.0
  %vm707 = vcmp.gt.f32.partialorder %v637, 0.0
  %vm708 = vcmp.gt.f32.partialorder %v639, 0.0
  %vm709 = vcmp.gt.f32.partialorder %v643, 0.0
  %vm710 = vcmp.gt.f32.partialorder %v645, 0.0
  %vm711 = vcmp.gt.f32.partialorder %v647, 0.0
  %vm712 = vcmp.gt.f32.partialorder %v649, 0.0
  %vm713 = vcmp.gt.f32.partialorder %v653, 0.0
  %vm714 = vcmp.gt.f32.partialorder %v655, 0.0
  %vm715 = vcmp.gt.f32.partialorder %v657, 0.0
  %vm716 = vcmp.gt.f32.partialorder %v659, 0.0
  %vm717 = vcmp.gt.f32.partialorder %v663, 0.0
  %vm718 = vcmp.gt.f32.partialorder %v665, 0.0
  %vm719 = vcmp.gt.f32.partialorder %v667, 0.0
  %vm720 = vcmp.gt.f32.partialorder %v669, 0.0
  %vm721 = vcmp.gt.f32.partialorder %v673, 0.0
  %vm722 = vcmp.gt.f32.partialorder %v675, 0.0
  %vm723 = vcmp.gt.f32.partialorder %v677, 0.0
  %vm724 = vcmp.gt.f32.partialorder %v679, 0.0
  %vm725 = vcmp.gt.f32.partialorder %v683, 0.0
  %vm726 = vcmp.gt.f32.partialorder %v685, 0.0
  %vm727 = vcmp.gt.f32.partialorder %v687, 0.0
  %vm728 = vcmp.gt.f32.partialorder %v689, 0.0
  %vm729 = vcmp.gt.f32.partialorder %v693, 0.0
  %vm730 = vcmp.gt.f32.partialorder %v695, 0.0
  %vm731 = vcmp.gt.f32.partialorder %v697, 0.0
  %vm732 = vcmp.gt.f32.partialorder %v699, 0.0
  %v733 = vmul.f32 %v623, 0.01
  %v734 = vmul.f32 %v625, 0.01
  %v735 = vmul.f32 %v627, 0.01
  %v736 = vmul.f32 %v629, 0.01
  %v737 = vmul.f32 %v633, 0.01
  %v738 = vmul.f32 %v635, 0.01
  %v739 = vmul.f32 %v637, 0.01
  %v740 = vmul.f32 %v639, 0.01
  %v741 = vmul.f32 %v643, 0.01
  %v742 = vmul.f32 %v645, 0.01
  %v743 = vmul.f32 %v647, 0.01
  %v744 = vmul.f32 %v649, 0.01
  %v745 = vmul.f32 %v653, 0.01
  %v746 = vmul.f32 %v655, 0.01
  %v747 = vmul.f32 %v657, 0.01
  %v748 = vmul.f32 %v659, 0.01
  %v749 = vmul.f32 %v663, 0.01
  %v750 = vmul.f32 %v665, 0.01
  %v751 = vmul.f32 %v667, 0.01
  %v752 = vmul.f32 %v669, 0.01
  %v753 = vmul.f32 %v673, 0.01
  %v754 = vmul.f32 %v675, 0.01
  %v755 = vmul.f32 %v677, 0.01
  %v756 = vmul.f32 %v679, 0.01
  %v757 = vmul.f32 %v683, 0.01
  %v758 = vmul.f32 %v685, 0.01
  %v759 = vmul.f32 %v687, 0.01
  %v760 = vmul.f32 %v689, 0.01
  %v761 = vmul.f32 %v693, 0.01
  %v762 = vmul.f32 %v695, 0.01
  %v763 = vmul.f32 %v697, 0.01
  %v764 = vmul.f32 %v699, 0.01
  %v765 = vsel %vm701, %v623, %v733
  %v766 = vsel %vm702, %v625, %v734
  %v767 = vsel %vm703, %v627, %v735
  %v768 = vsel %vm704, %v629, %v736
  %v769 = vsel %vm705, %v633, %v737
  %v770 = vsel %vm706, %v635, %v738
  %v771 = vsel %vm707, %v637, %v739
  %v772 = vsel %vm708, %v639, %v740
  %v773 = vsel %vm709, %v643, %v741
  %v774 = vsel %vm710, %v645, %v742
  %v775 = vsel %vm711, %v647, %v743
  %v776 = vsel %vm712, %v649, %v744
  %v777 = vsel %vm713, %v653, %v745
  %v778 = vsel %vm714, %v655, %v746
  %v779 = vsel %vm715, %v657, %v747
  %v780 = vsel %vm716, %v659, %v748
  %v781 = vsel %vm717, %v663, %v749
  %v782 = vsel %vm718, %v665, %v750
  %v783 = vsel %vm719, %v667, %v751
  %v784 = vsel %vm720, %v669, %v752
  %v785 = vsel %vm721, %v673, %v753
  %v786 = vsel %vm722, %v675, %v754
  %v787 = vsel %vm723, %v677, %v755
  %v788 = vsel %vm724, %v679, %v756
  %v789 = vsel %vm725, %v683, %v757
  %v790 = vsel %vm726, %v685, %v758
  %v791 = vsel %vm727, %v687, %v759
  %v792 = vsel %vm728, %v689, %v760
  %v793 = vsel %vm729, %v693, %v761
  %v794 = vsel %vm730, %v695, %v762
  %v795 = vsel %vm731, %v697, %v763
  %v796 = vsel %vm732, %v699, %v764
  %v797 = vpack.c.bf16 %v767, %v765
  %v798 = vpack.c.bf16 %v768, %v766
  %v799 = vpack.c.bf16 %v771, %v769
  %v800 = vpack.c.bf16 %v772, %v770
  %v801 = vpack.c.bf16 %v775, %v773
  %v802 = vpack.c.bf16 %v776, %v774
  %v803 = vpack.c.bf16 %v779, %v777
  %v804 = vpack.c.bf16 %v780, %v778
  %v805 = vpack.c.bf16 %v783, %v781
  %v806 = vpack.c.bf16 %v784, %v782
  %v807 = vpack.c.bf16 %v787, %v785
  %v808 = vpack.c.bf16 %v788, %v786
  %v809 = vpack.c.bf16 %v791, %v789
  %v810 = vpack.c.bf16 %v792, %v790
  %v811 = vpack.c.bf16 %v795, %v793
  %v812 = vpack.c.bf16 %v796, %v794
  %v813 = vld [vmem:[%s5] sm:$0xff]
  %v814 = vld [vmem:[%s5 + $0x8] sm:$0xff]
  %v815 = vld [vmem:[%s5 + $0x10] sm:$0xff]
  %v816 = vld [vmem:[%s5 + $0x18] sm:$0xff]
  %v817 = vld [vmem:[%s5 + $0x20] sm:$0xff]
  %v818 = vld [vmem:[%s5 + $0x28] sm:$0xff]
  %v819 = vld [vmem:[%s5 + $0x30] sm:$0xff]
  %v820 = vld [vmem:[%s5 + $0x38] sm:$0xff]
  %v821 = vld [vmem:[%s5 + $0x40] sm:$0xff]
  %v822 = vld [vmem:[%s5 + $0x48] sm:$0xff]
  %v823 = vld [vmem:[%s5 + $0x50] sm:$0xff]
  %v824 = vld [vmem:[%s5 + $0x58] sm:$0xff]
  %v825 = vld [vmem:[%s5 + $0x60] sm:$0xff]
  %v826 = vld [vmem:[%s5 + $0x68] sm:$0xff]
  %v827 = vld [vmem:[%s5 + $0x70] sm:$0xff]
  %v828 = vld [vmem:[%s5 + $0x78] sm:$0xff]
  %v829 = vld [vmem:[%s5 + $0x80] sm:$0xff]
  %v830 = vld [vmem:[%s5 + $0x88] sm:$0xff]
  %v831 = vld [vmem:[%s5 + $0x90] sm:$0xff]
  %v832 = vld [vmem:[%s5 + $0x98] sm:$0xff]
  %v833 = vld [vmem:[%s5 + $0xa0] sm:$0xff]
  %v834 = vld [vmem:[%s5 + $0xa8] sm:$0xff]
  %v835 = vld [vmem:[%s5 + $0xb0] sm:$0xff]
  %v836 = vld [vmem:[%s5 + $0xb8] sm:$0xff]
  %v837 = vld [vmem:[%s5 + $0xc0] sm:$0xff]
  %v838 = vld [vmem:[%s5 + $0xc8] sm:$0xff]
  %v839 = vld [vmem:[%s5 + $0xd0] sm:$0xff]
  %v840 = vld [vmem:[%s5 + $0xd8] sm:$0xff]
  %v841 = vld [vmem:[%s5 + $0xe0] sm:$0xff]
  %v842 = vld [vmem:[%s5 + $0xe8] sm:$0xff]
  %v843 = vld [vmem:[%s5 + $0xf0] sm:$0xff]
  %v844 = vld [vmem:[%s5 + $0xf8] sm:$0xff]
  %v846 = vlaneseq
  %v847 = vshrl.u32 %v846, 7
  %v848 = vsub.s32 0, %v847
  %v849 = vrot.slane %v47, %v848
  %v850 = vlaneseq
  %v851 = vshrl.u32 %v850, 7
  %v852 = vsub.s32 1, %v851
  %v853 = vrot.slane %v47, %v852
  %v888 = vunpack.c.l.b16 %v813
  %v889 = vunpack.c.h.b16 %v813
  %v890 = vunpack.c.l.b16 %v814
  %v891 = vunpack.c.h.b16 %v814
  %v892 = vunpack.c.l.b16 %v815
  %v893 = vunpack.c.h.b16 %v815
  %v894 = vunpack.c.l.b16 %v816
  %v895 = vunpack.c.h.b16 %v816
  %v896 = vunpack.c.l.b16 %v817
  %v897 = vunpack.c.h.b16 %v817
  %v898 = vunpack.c.l.b16 %v818
  %v899 = vunpack.c.h.b16 %v818
  %v900 = vunpack.c.l.b16 %v819
  %v901 = vunpack.c.h.b16 %v819
  %v902 = vunpack.c.l.b16 %v820
  %v903 = vunpack.c.h.b16 %v820
  %v904 = vunpack.c.l.b16 %v821
  %v905 = vunpack.c.h.b16 %v821
  %v906 = vunpack.c.l.b16 %v822
  %v907 = vunpack.c.h.b16 %v822
  %v908 = vunpack.c.l.b16 %v823
  %v909 = vunpack.c.h.b16 %v823
  %v910 = vunpack.c.l.b16 %v824
  %v911 = vunpack.c.h.b16 %v824
  %v912 = vunpack.c.l.b16 %v825
  %v913 = vunpack.c.h.b16 %v825
  %v914 = vunpack.c.l.b16 %v826
  %v915 = vunpack.c.h.b16 %v826
  %v916 = vunpack.c.l.b16 %v827
  %v917 = vunpack.c.h.b16 %v827
  %v918 = vunpack.c.l.b16 %v828
  %v919 = vunpack.c.h.b16 %v828
  %v920 = vunpack.c.l.b16 %v829
  %v921 = vunpack.c.h.b16 %v829
  %v922 = vunpack.c.l.b16 %v830
  %v923 = vunpack.c.h.b16 %v830
  %v924 = vunpack.c.l.b16 %v831
  %v925 = vunpack.c.h.b16 %v831
  %v926 = vunpack.c.l.b16 %v832
  %v927 = vunpack.c.h.b16 %v832
  %v928 = vunpack.c.l.b16 %v833
  %v929 = vunpack.c.h.b16 %v833
  %v930 = vunpack.c.l.b16 %v834
  %v931 = vunpack.c.h.b16 %v834
  %v932 = vunpack.c.l.b16 %v835
  %v933 = vunpack.c.h.b16 %v835
  %v934 = vunpack.c.l.b16 %v836
  %v935 = vunpack.c.h.b16 %v836
  %v936 = vunpack.c.l.b16 %v837
  %v937 = vunpack.c.h.b16 %v837
  %v938 = vunpack.c.l.b16 %v838
  %v939 = vunpack.c.h.b16 %v838
  %v940 = vunpack.c.l.b16 %v839
  %v941 = vunpack.c.h.b16 %v839
  %v942 = vunpack.c.l.b16 %v840
  %v943 = vunpack.c.h.b16 %v840
  %v944 = vunpack.c.l.b16 %v841
  %v945 = vunpack.c.h.b16 %v841
  %v946 = vunpack.c.l.b16 %v842
  %v947 = vunpack.c.h.b16 %v842
  %v948 = vunpack.c.l.b16 %v843
  %v949 = vunpack.c.h.b16 %v843
  %v950 = vunpack.c.l.b16 %v844
  %v951 = vunpack.c.h.b16 %v844
  %v952 = vpack.c.b16 %v890, %v888
  %v953 = vpack.c.b16 %v891, %v889
  %v954 = vpack.c.b16 %v894, %v892
  %v955 = vpack.c.b16 %v895, %v893
  %v956 = vpack.c.b16 %v898, %v896
  %v957 = vpack.c.b16 %v899, %v897
  %v958 = vpack.c.b16 %v902, %v900
  %v959 = vpack.c.b16 %v903, %v901
  %v960 = vpack.c.b16 %v906, %v904
  %v961 = vpack.c.b16 %v907, %v905
  %v962 = vpack.c.b16 %v910, %v908
  %v963 = vpack.c.b16 %v911, %v909
  %v964 = vpack.c.b16 %v914, %v912
  %v965 = vpack.c.b16 %v915, %v913
  %v966 = vpack.c.b16 %v918, %v916
  %v967 = vpack.c.b16 %v919, %v917
  %v968 = vpack.c.b16 %v922, %v920
  %v969 = vpack.c.b16 %v923, %v921
  %v970 = vpack.c.b16 %v926, %v924
  %v971 = vpack.c.b16 %v927, %v925
  %v972 = vpack.c.b16 %v930, %v928
  %v973 = vpack.c.b16 %v931, %v929
  %v974 = vpack.c.b16 %v934, %v932
  %v975 = vpack.c.b16 %v935, %v933
  %v976 = vpack.c.b16 %v938, %v936
  %v977 = vpack.c.b16 %v939, %v937
  %v978 = vpack.c.b16 %v942, %v940
  %v979 = vpack.c.b16 %v943, %v941
  %v980 = vpack.c.b16 %v946, %v944
  %v981 = vpack.c.b16 %v947, %v945
  %v982 = vpack.c.b16 %v950, %v948
  %v983 = vpack.c.b16 %v951, %v949
  %1016 = vmatprep.subr.bf16.mxu0 %v953
  %1017 = vmatpush1.bf16.msra.mxu0 %v952
  %1018 = vmatprep.subr.bf16.mxu0 %v955
  %1019 = vmatpush1.bf16.msra.mxu0 %v954
  %1020 = vmatprep.subr.bf16.mxu0 %v957
  %1021 = vmatpush1.bf16.msra.mxu0 %v956
  %1022 = vmatprep.subr.bf16.mxu0 %v959
  %1023 = vmatpush1.bf16.msra.mxu0 %v958
  %1024 = vmatprep.subr.bf16.mxu0 %v961
  %1025 = vmatpush1.bf16.msra.mxu0 %v960
  %1026 = vmatprep.subr.bf16.mxu0 %v963
  %1027 = vmatpush1.bf16.msra.mxu0 %v962
  %1028 = vmatprep.subr.bf16.mxu0 %v965
  %1029 = vmatpush1.bf16.msra.mxu0 %v964
  %1030 = vmatprep.subr.bf16.mxu0 %v967
  %1031 = vmatpush1.bf16.msra.mxu0 %v966
  %1032 = vmatprep.subr.bf16.mxu0 %v969
  %1033 = vmatpush1.bf16.msra.mxu0 %v968
  %1034 = vmatprep.subr.bf16.mxu0 %v971
  %1035 = vmatpush1.bf16.msra.mxu0 %v970
  %1036 = vmatprep.subr.bf16.mxu0 %v973
  %1037 = vmatpush1.bf16.msra.mxu0 %v972
  %1038 = vmatprep.subr.bf16.mxu0 %v975
  %1039 = vmatpush1.bf16.msra.mxu0 %v974
  %1040 = vmatprep.subr.bf16.mxu0 %v977
  %1041 = vmatpush1.bf16.msra.mxu0 %v976
  %1042 = vmatprep.subr.bf16.mxu0 %v979
  %1043 = vmatpush1.bf16.msra.mxu0 %v978
  %1044 = vmatprep.subr.bf16.mxu0 %v981
  %1045 = vmatpush1.bf16.msra.mxu0 %v980
  %1046 = vmatprep.subr.bf16.mxu0 %v983
  %1047 = vmatpush1.bf16.msra.mxu0 %v982
  %1048 = vmatprep.mubr.bf16.mxu0 %v798
  %1049 = vmatmul.mubr.bf16.gmra.mrb[0].mxu0 %v797
  %v1050 = vpop.f32.mrb[0].mxu0
  %v1051 = vadd.f32 %v849, %v1050
  %v1052 = vpop.f32.mrb[0].mxu0
  %v1053 = vadd.f32 %v853, %v1052
  %v1054 = vpop.f32.mrb[0].mxu0
  %v1055 = vadd.f32 %v849, %v1054
  %v1056 = vpop.f32.mrb[0].mxu0
  %v1057 = vadd.f32 %v853, %v1056
  %1058 = vmatprep.mubr.bf16.mxu0 %v800
  %1059 = vmatmul.mubr.bf16.gmra.mrb[0].mxu0 %v799
  %v1060 = vpop.f32.mrb[0].mxu0
  %v1061 = vadd.f32 %v849, %v1060
  %v1062 = vpop.f32.mrb[0].mxu0
  %v1063 = vadd.f32 %v853, %v1062
  %v1064 = vpop.f32.mrb[0].mxu0
  %v1065 = vadd.f32 %v849, %v1064
  %v1066 = vpop.f32.mrb[0].mxu0
  %v1067 = vadd.f32 %v853, %v1066
  %1068 = vmatprep.mubr.bf16.mxu0 %v802
  %1069 = vmatmul.mubr.bf16.gmra.mrb[0].mxu0 %v801
  %v1070 = vpop.f32.mrb[0].mxu0
  %v1071 = vadd.f32 %v849, %v1070
  %v1072 = vpop.f32.mrb[0].mxu0
  %v1073 = vadd.f32 %v853, %v1072
  %v1074 = vpop.f32.mrb[0].mxu0
  %v1075 = vadd.f32 %v849, %v1074
  %v1076 = vpop.f32.mrb[0].mxu0
  %v1077 = vadd.f32 %v853, %v1076
  %1078 = vmatprep.mubr.bf16.mxu0 %v804
  %1079 = vmatmul.mubr.bf16.gmra.mrb[0].mxu0 %v803
  %v1080 = vpop.f32.mrb[0].mxu0
  %v1081 = vadd.f32 %v849, %v1080
  %v1082 = vpop.f32.mrb[0].mxu0
  %v1083 = vadd.f32 %v853, %v1082
  %v1084 = vpop.f32.mrb[0].mxu0
  %v1085 = vadd.f32 %v849, %v1084
  %v1086 = vpop.f32.mrb[0].mxu0
  %v1087 = vadd.f32 %v853, %v1086
  %1088 = vmatprep.mubr.bf16.mxu0 %v806
  %1089 = vmatmul.mubr.bf16.gmra.mrb[0].mxu0 %v805
  %v1090 = vpop.f32.mrb[0].mxu0
  %v1091 = vadd.f32 %v849, %v1090
  %v1092 = vpop.f32.mrb[0].mxu0
  %v1093 = vadd.f32 %v853, %v1092
  %v1094 = vpop.f32.mrb[0].mxu0
  %v1095 = vadd.f32 %v849, %v1094
  %v1096 = vpop.f32.mrb[0].mxu0
  %v1097 = vadd.f32 %v853, %v1096
  %1098 = vmatprep.mubr.bf16.mxu0 %v808
  %1099 = vmatmul.mubr.bf16.gmra.mrb[0].mxu0 %v807
  %v1100 = vpop.f32.mrb[0].mxu0
  %v1101 = vadd.f32 %v849, %v1100
  %v1102 = vpop.f32.mrb[0].mxu0
  %v1103 = vadd.f32 %v853, %v1102
  %v1104 = vpop.f32.mrb[0].mxu0
  %v1105 = vadd.f32 %v849, %v1104
  %v1106 = vpop.f32.mrb[0].mxu0
  %v1107 = vadd.f32 %v853, %v1106
  %1108 = vmatprep.mubr.bf16.mxu0 %v810
  %1109 = vmatmul.mubr.bf16.gmra.mrb[0].mxu0 %v809
  %v1110 = vpop.f32.mrb[0].mxu0
  %v1111 = vadd.f32 %v849, %v1110
  %v1112 = vpop.f32.mrb[0].mxu0
  %v1113 = vadd.f32 %v853, %v1112
  %v1114 = vpop.f32.mrb[0].mxu0
  %v1115 = vadd.f32 %v849, %v1114
  %v1116 = vpop.f32.mrb[0].mxu0
  %v1117 = vadd.f32 %v853, %v1116
  %1118 = vmatprep.mubr.bf16.mxu0 %v812
  %1119 = vmatmul.mubr.bf16.gmra.mrb[0].mxu0 %v811
  %v1120 = vpop.f32.mrb[0].mxu0
  %v1121 = vadd.f32 %v849, %v1120
  %v1122 = vpop.f32.mrb[0].mxu0
  %v1123 = vadd.f32 %v853, %v1122
  %v1124 = vpop.f32.mrb[0].mxu0
  %v1125 = vadd.f32 %v849, %v1124
  %v1126 = vpop.f32.mrb[0].mxu0
  %v1127 = vadd.f32 %v853, %v1126
  %1128 = vdwg.mxu0
  %vm1129 = vcmp.gt.f32.partialorder %v1051, 0.0
  %vm1130 = vcmp.gt.f32.partialorder %v1053, 0.0
  %vm1131 = vcmp.gt.f32.partialorder %v1055, 0.0
  %vm1132 = vcmp.gt.f32.partialorder %v1057, 0.0
  %vm1133 = vcmp.gt.f32.partialorder %v1061, 0.0
  %vm1134 = vcmp.gt.f32.partialorder %v1063, 0.0
  %vm1135 = vcmp.gt.f32.partialorder %v1065, 0.0
  %vm1136 = vcmp.gt.f32.partialorder %v1067, 0.0
  %vm1137 = vcmp.gt.f32.partialorder %v1071, 0.0
  %vm1138 = vcmp.gt.f32.partialorder %v1073, 0.0
  %vm1139 = vcmp.gt.f32.partialorder %v1075, 0.0
  %vm1140 = vcmp.gt.f32.partialorder %v1077, 0.0
  %vm1141 = vcmp.gt.f32.partialorder %v1081, 0.0
  %vm1142 = vcmp.gt.f32.partialorder %v1083, 0.0
  %vm1143 = vcmp.gt.f32.partialorder %v1085, 0.0
  %vm1144 = vcmp.gt.f32.partialorder %v1087, 0.0
  %vm1145 = vcmp.gt.f32.partialorder %v1091, 0.0
  %vm1146 = vcmp.gt.f32.partialorder %v1093, 0.0
  %vm1147 = vcmp.gt.f32.partialorder %v1095, 0.0
  %vm1148 = vcmp.gt.f32.partialorder %v1097, 0.0
  %vm1149 = vcmp.gt.f32.partialorder %v1101, 0.0
  %vm1150 = vcmp.gt.f32.partialorder %v1103, 0.0
  %vm1151 = vcmp.gt.f32.partialorder %v1105, 0.0
  %vm1152 = vcmp.gt.f32.partialorder %v1107, 0.0
  %vm1153 = vcmp.gt.f32.partialorder %v1111, 0.0
  %vm1154 = vcmp.gt.f32.partialorder %v1113, 0.0
  %vm1155 = vcmp.gt.f32.partialorder %v1115, 0.0
  %vm1156 = vcmp.gt.f32.partialorder %v1117, 0.0
  %vm1157 = vcmp.gt.f32.partialorder %v1121, 0.0
  %vm1158 = vcmp.gt.f32.partialorder %v1123, 0.0
  %vm1159 = vcmp.gt.f32.partialorder %v1125, 0.0
  %vm1160 = vcmp.gt.f32.partialorder %v1127, 0.0
  %v1161 = vmul.f32 %v1051, 0.01
  %v1162 = vmul.f32 %v1053, 0.01
  %v1163 = vmul.f32 %v1055, 0.01
  %v1164 = vmul.f32 %v1057, 0.01
  %v1165 = vmul.f32 %v1061, 0.01
  %v1166 = vmul.f32 %v1063, 0.01
  %v1167 = vmul.f32 %v1065, 0.01
  %v1168 = vmul.f32 %v1067, 0.01
  %v1169 = vmul.f32 %v1071, 0.01
  %v1170 = vmul.f32 %v1073, 0.01
  %v1171 = vmul.f32 %v1075, 0.01
  %v1172 = vmul.f32 %v1077, 0.01
  %v1173 = vmul.f32 %v1081, 0.01
  %v1174 = vmul.f32 %v1083, 0.01
  %v1175 = vmul.f32 %v1085, 0.01
  %v1176 = vmul.f32 %v1087, 0.01
  %v1177 = vmul.f32 %v1091, 0.01
  %v1178 = vmul.f32 %v1093, 0.01
  %v1179 = vmul.f32 %v1095, 0.01
  %v1180 = vmul.f32 %v1097, 0.01
  %v1181 = vmul.f32 %v1101, 0.01
  %v1182 = vmul.f32 %v1103, 0.01
  %v1183 = vmul.f32 %v1105, 0.01
  %v1184 = vmul.f32 %v1107, 0.01
  %v1185 = vmul.f32 %v1111, 0.01
  %v1186 = vmul.f32 %v1113, 0.01
  %v1187 = vmul.f32 %v1115, 0.01
  %v1188 = vmul.f32 %v1117, 0.01
  %v1189 = vmul.f32 %v1121, 0.01
  %v1190 = vmul.f32 %v1123, 0.01
  %v1191 = vmul.f32 %v1125, 0.01
  %v1192 = vmul.f32 %v1127, 0.01
  %v1193 = vsel %vm1129, %v1051, %v1161
  %v1194 = vsel %vm1130, %v1053, %v1162
  %v1195 = vsel %vm1131, %v1055, %v1163
  %v1196 = vsel %vm1132, %v1057, %v1164
  %v1197 = vsel %vm1133, %v1061, %v1165
  %v1198 = vsel %vm1134, %v1063, %v1166
  %v1199 = vsel %vm1135, %v1065, %v1167
  %v1200 = vsel %vm1136, %v1067, %v1168
  %v1201 = vsel %vm1137, %v1071, %v1169
  %v1202 = vsel %vm1138, %v1073, %v1170
  %v1203 = vsel %vm1139, %v1075, %v1171
  %v1204 = vsel %vm1140, %v1077, %v1172
  %v1205 = vsel %vm1141, %v1081, %v1173
  %v1206 = vsel %vm1142, %v1083, %v1174
  %v1207 = vsel %vm1143, %v1085, %v1175
  %v1208 = vsel %vm1144, %v1087, %v1176
  %v1209 = vsel %vm1145, %v1091, %v1177
  %v1210 = vsel %vm1146, %v1093, %v1178
  %v1211 = vsel %vm1147, %v1095, %v1179
  %v1212 = vsel %vm1148, %v1097, %v1180
  %v1213 = vsel %vm1149, %v1101, %v1181
  %v1214 = vsel %vm1150, %v1103, %v1182
  %v1215 = vsel %vm1151, %v1105, %v1183
  %v1216 = vsel %vm1152, %v1107, %v1184
  %v1217 = vsel %vm1153, %v1111, %v1185
  %v1218 = vsel %vm1154, %v1113, %v1186
  %v1219 = vsel %vm1155, %v1115, %v1187
  %v1220 = vsel %vm1156, %v1117, %v1188
  %v1221 = vsel %vm1157, %v1121, %v1189
  %v1222 = vsel %vm1158, %v1123, %v1190
  %v1223 = vsel %vm1159, %v1125, %v1191
  %v1224 = vsel %vm1160, %v1127, %v1192
  %v1225 = vpack.c.bf16 %v1195, %v1193
  %v1226 = vpack.c.bf16 %v1196, %v1194
  %v1227 = vpack.c.bf16 %v1199, %v1197
  %v1228 = vpack.c.bf16 %v1200, %v1198
  %v1229 = vpack.c.bf16 %v1203, %v1201
  %v1230 = vpack.c.bf16 %v1204, %v1202
  %v1231 = vpack.c.bf16 %v1207, %v1205
  %v1232 = vpack.c.bf16 %v1208, %v1206
  %v1233 = vpack.c.bf16 %v1211, %v1209
  %v1234 = vpack.c.bf16 %v1212, %v1210
  %v1235 = vpack.c.bf16 %v1215, %v1213
  %v1236 = vpack.c.bf16 %v1216, %v1214
  %v1237 = vpack.c.bf16 %v1219, %v1217
  %v1238 = vpack.c.bf16 %v1220, %v1218
  %v1239 = vpack.c.bf16 %v1223, %v1221
  %v1240 = vpack.c.bf16 %v1224, %v1222
  %v1241 = vld [vmem:[%s7] sm:$0xff]
  %v1242 = vld [vmem:[%s7 + $0x8] sm:$0xff]
  %v1243 = vld [vmem:[%s7 + $0x10] sm:$0xff]
  %v1244 = vld [vmem:[%s7 + $0x18] sm:$0xff]
  %v1245 = vld [vmem:[%s7 + $0x20] sm:$0xff]
  %v1246 = vld [vmem:[%s7 + $0x28] sm:$0xff]
  %v1247 = vld [vmem:[%s7 + $0x30] sm:$0xff]
  %v1248 = vld [vmem:[%s7 + $0x38] sm:$0xff]
  %v1249 = vld [vmem:[%s7 + $0x40] sm:$0xff]
  %v1250 = vld [vmem:[%s7 + $0x48] sm:$0xff]
  %v1251 = vld [vmem:[%s7 + $0x50] sm:$0xff]
  %v1252 = vld [vmem:[%s7 + $0x58] sm:$0xff]
  %v1253 = vld [vmem:[%s7 + $0x60] sm:$0xff]
  %v1254 = vld [vmem:[%s7 + $0x68] sm:$0xff]
  %v1255 = vld [vmem:[%s7 + $0x70] sm:$0xff]
  %v1256 = vld [vmem:[%s7 + $0x78] sm:$0xff]
  %v1257 = vld [vmem:[%s7 + $0x80] sm:$0xff]
  %v1258 = vld [vmem:[%s7 + $0x88] sm:$0xff]
  %v1259 = vld [vmem:[%s7 + $0x90] sm:$0xff]
  %v1260 = vld [vmem:[%s7 + $0x98] sm:$0xff]
  %v1261 = vld [vmem:[%s7 + $0xa0] sm:$0xff]
  %v1262 = vld [vmem:[%s7 + $0xa8] sm:$0xff]
  %v1263 = vld [vmem:[%s7 + $0xb0] sm:$0xff]
  %v1264 = vld [vmem:[%s7 + $0xb8] sm:$0xff]
  %v1265 = vld [vmem:[%s7 + $0xc0] sm:$0xff]
  %v1266 = vld [vmem:[%s7 + $0xc8] sm:$0xff]
  %v1267 = vld [vmem:[%s7 + $0xd0] sm:$0xff]
  %v1268 = vld [vmem:[%s7 + $0xd8] sm:$0xff]
  %v1269 = vld [vmem:[%s7 + $0xe0] sm:$0xff]
  %v1270 = vld [vmem:[%s7 + $0xe8] sm:$0xff]
  %v1271 = vld [vmem:[%s7 + $0xf0] sm:$0xff]
  %v1272 = vld [vmem:[%s7 + $0xf8] sm:$0xff]
  %v1274 = vlaneseq
  %v1275 = vshrl.u32 %v1274, 7
  %v1276 = vsub.s32 0, %v1275
  %v1277 = vrot.slane %v48, %v1276
  %v1278 = vlaneseq
  %v1279 = vshrl.u32 %v1278, 7
  %v1280 = vsub.s32 1, %v1279
  %v1281 = vrot.slane %v48, %v1280
  %v1316 = vunpack.c.l.b16 %v1241
  %v1317 = vunpack.c.h.b16 %v1241
  %v1318 = vunpack.c.l.b16 %v1242
  %v1319 = vunpack.c.h.b16 %v1242
  %v1320 = vunpack.c.l.b16 %v1243
  %v1321 = vunpack.c.h.b16 %v1243
  %v1322 = vunpack.c.l.b16 %v1244
  %v1323 = vunpack.c.h.b16 %v1244
  %v1324 = vunpack.c.l.b16 %v1245
  %v1325 = vunpack.c.h.b16 %v1245
  %v1326 = vunpack.c.l.b16 %v1246
  %v1327 = vunpack.c.h.b16 %v1246
  %v1328 = vunpack.c.l.b16 %v1247
  %v1329 = vunpack.c.h.b16 %v1247
  %v1330 = vunpack.c.l.b16 %v1248
  %v1331 = vunpack.c.h.b16 %v1248
  %v1332 = vunpack.c.l.b16 %v1249
  %v1333 = vunpack.c.h.b16 %v1249
  %v1334 = vunpack.c.l.b16 %v1250
  %v1335 = vunpack.c.h.b16 %v1250
  %v1336 = vunpack.c.l.b16 %v1251
  %v1337 = vunpack.c.h.b16 %v1251
  %v1338 = vunpack.c.l.b16 %v1252
  %v1339 = vunpack.c.h.b16 %v1252
  %v1340 = vunpack.c.l.b16 %v1253
  %v1341 = vunpack.c.h.b16 %v1253
  %v1342 = vunpack.c.l.b16 %v1254
  %v1343 = vunpack.c.h.b16 %v1254
  %v1344 = vunpack.c.l.b16 %v1255
  %v1345 = vunpack.c.h.b16 %v1255
  %v1346 = vunpack.c.l.b16 %v1256
  %v1347 = vunpack.c.h.b16 %v1256
  %v1348 = vunpack.c.l.b16 %v1257
  %v1349 = vunpack.c.h.b16 %v1257
  %v1350 = vunpack.c.l.b16 %v1258
  %v1351 = vunpack.c.h.b16 %v1258
  %v1352 = vunpack.c.l.b16 %v1259
  %v1353 = vunpack.c.h.b16 %v1259
  %v1354 = vunpack.c.l.b16 %v1260
  %v1355 = vunpack.c.h.b16 %v1260
  %v1356 = vunpack.c.l.b16 %v1261
  %v1357 = vunpack.c.h.b16 %v1261
  %v1358 = vunpack.c.l.b16 %v1262
  %v1359 = vunpack.c.h.b16 %v1262
  %v1360 = vunpack.c.l.b16 %v1263
  %v1361 = vunpack.c.h.b16 %v1263
  %v1362 = vunpack.c.l.b16 %v1264
  %v1363 = vunpack.c.h.b16 %v1264
  %v1364 = vunpack.c.l.b16 %v1265
  %v1365 = vunpack.c.h.b16 %v1265
  %v1366 = vunpack.c.l.b16 %v1266
  %v1367 = vunpack.c.h.b16 %v1266
  %v1368 = vunpack.c.l.b16 %v1267
  %v1369 = vunpack.c.h.b16 %v1267
  %v1370 = vunpack.c.l.b16 %v1268
  %v1371 = vunpack.c.h.b16 %v1268
  %v1372 = vunpack.c.l.b16 %v1269
  %v1373 = vunpack.c.h.b16 %v1269
  %v1374 = vunpack.c.l.b16 %v1270
  %v1375 = vunpack.c.h.b16 %v1270
  %v1376 = vunpack.c.l.b16 %v1271
  %v1377 = vunpack.c.h.b16 %v1271
  %v1378 = vunpack.c.l.b16 %v1272
  %v1379 = vunpack.c.h.b16 %v1272
  %v1380 = vpack.c.b16 %v1318, %v1316
  %v1381 = vpack.c.b16 %v1319, %v1317
  %v1382 = vpack.c.b16 %v1322, %v1320
  %v1383 = vpack.c.b16 %v1323, %v1321
  %v1384 = vpack.c.b16 %v1326, %v1324
  %v1385 = vpack.c.b16 %v1327, %v1325
  %v1386 = vpack.c.b16 %v1330, %v1328
  %v1387 = vpack.c.b16 %v1331, %v1329
  %v1388 = vpack.c.b16 %v1334, %v1332
  %v1389 = vpack.c.b16 %v1335, %v1333
  %v1390 = vpack.c.b16 %v1338, %v1336
  %v1391 = vpack.c.b16 %v1339, %v1337
  %v1392 = vpack.c.b16 %v1342, %v1340
  %v1393 = vpack.c.b16 %v1343, %v1341
  %v1394 = vpack.c.b16 %v1346, %v1344
  %v1395 = vpack.c.b16 %v1347, %v1345
  %v1396 = vpack.c.b16 %v1350, %v1348
  %v1397 = vpack.c.b16 %v1351, %v1349
  %v1398 = vpack.c.b16 %v1354, %v1352
  %v1399 = vpack.c.b16 %v1355, %v1353
  %v1400 = vpack.c.b16 %v1358, %v1356
  %v1401 = vpack.c.b16 %v1359, %v1357
  %v1402 = vpack.c.b16 %v1362, %v1360
  %v1403 = vpack.c.b16 %v1363, %v1361
  %v1404 = vpack.c.b16 %v1366, %v1364
  %v1405 = vpack.c.b16 %v1367, %v1365
  %v1406 = vpack.c.b16 %v1370, %v1368
  %v1407 = vpack.c.b16 %v1371, %v1369
  %v1408 = vpack.c.b16 %v1374, %v1372
  %v1409 = vpack.c.b16 %v1375, %v1373
  %v1410 = vpack.c.b16 %v1378, %v1376
  %v1411 = vpack.c.b16 %v1379, %v1377
  %1444 = vmatprep.subr.bf16.mxu0 %v1381
  %1445 = vmatpush1.bf16.msra.mxu0 %v1380
  %1446 = vmatprep.subr.bf16.mxu0 %v1383
  %1447 = vmatpush1.bf16.msra.mxu0 %v1382
  %1448 = vmatprep.subr.bf16.mxu0 %v1385
  %1449 = vmatpush1.bf16.msra.mxu0 %v1384
  %1450 = vmatprep.subr.bf16.mxu0 %v1387
  %1451 = vmatpush1.bf16.msra.mxu0 %v1386
  %1452 = vmatprep.subr.bf16.mxu0 %v1389
  %1453 = vmatpush1.bf16.msra.mxu0 %v1388
  %1454 = vmatprep.subr.bf16.mxu0 %v1391
  %1455 = vmatpush1.bf16.msra.mxu0 %v1390
  %1456 = vmatprep.subr.bf16.mxu0 %v1393
  %1457 = vmatpush1.bf16.msra.mxu0 %v1392
  %1458 = vmatprep.subr.bf16.mxu0 %v1395
  %1459 = vmatpush1.bf16.msra.mxu0 %v1394
  %1460 = vmatprep.subr.bf16.mxu0 %v1397
  %1461 = vmatpush1.bf16.msra.mxu0 %v1396
  %1462 = vmatprep.subr.bf16.mxu0 %v1399
  %1463 = vmatpush1.bf16.msra.mxu0 %v1398
  %1464 = vmatprep.subr.bf16.mxu0 %v1401
  %1465 = vmatpush1.bf16.msra.mxu0 %v1400
  %1466 = vmatprep.subr.bf16.mxu0 %v1403
  %1467 = vmatpush1.bf16.msra.mxu0 %v1402
  %1468 = vmatprep.subr.bf16.mxu0 %v1405
  %1469 = vmatpush1.bf16.msra.mxu0 %v1404
  %1470 = vmatprep.subr.bf16.mxu0 %v1407
  %1471 = vmatpush1.bf16.msra.mxu0 %v1406
  %1472 = vmatprep.subr.bf16.mxu0 %v1409
  %1473 = vmatpush1.bf16.msra.mxu0 %v1408
  %1474 = vmatprep.subr.bf16.mxu0 %v1411
  %1475 = vmatpush1.bf16.msra.mxu0 %v1410
  %1476 = vmatprep.mubr.bf16.mxu0 %v1226
  %1477 = vmatmul.mubr.bf16.gmra.mrb[0].mxu0 %v1225
  %v1478 = vpop.f32.mrb[0].mxu0
  %v1479 = vadd.f32 %v1277, %v1478
  %v1480 = vpop.f32.mrb[0].mxu0
  %v1481 = vadd.f32 %v1281, %v1480
  %v1482 = vpop.f32.mrb[0].mxu0
  %v1483 = vadd.f32 %v1277, %v1482
  %v1484 = vpop.f32.mrb[0].mxu0
  %v1485 = vadd.f32 %v1281, %v1484
  %1486 = vmatprep.mubr.bf16.mxu0 %v1228
  %1487 = vmatmul.mubr.bf16.gmra.mrb[0].mxu0 %v1227
  %v1488 = vpop.f32.mrb[0].mxu0
  %v1489 = vadd.f32 %v1277, %v1488
  %v1490 = vpop.f32.mrb[0].mxu0
  %v1491 = vadd.f32 %v1281, %v1490
  %v1492 = vpop.f32.mrb[0].mxu0
  %v1493 = vadd.f32 %v1277, %v1492
  %v1494 = vpop.f32.mrb[0].mxu0
  %v1495 = vadd.f32 %v1281, %v1494
  %1496 = vmatprep.mubr.bf16.mxu0 %v1230
  %1497 = vmatmul.mubr.bf16.gmra.mrb[0].mxu0 %v1229
  %v1498 = vpop.f32.mrb[0].mxu0
  %v1499 = vadd.f32 %v1277, %v1498
  %v1500 = vpop.f32.mrb[0].mxu0
  %v1501 = vadd.f32 %v1281, %v1500
  %v1502 = vpop.f32.mrb[0].mxu0
  %v1503 = vadd.f32 %v1277, %v1502
  %v1504 = vpop.f32.mrb[0].mxu0
  %v1505 = vadd.f32 %v1281, %v1504
  %1506 = vmatprep.mubr.bf16.mxu0 %v1232
  %1507 = vmatmul.mubr.bf16.gmra.mrb[0].mxu0 %v1231
  %v1508 = vpop.f32.mrb[0].mxu0
  %v1509 = vadd.f32 %v1277, %v1508
  %v1510 = vpop.f32.mrb[0].mxu0
  %v1511 = vadd.f32 %v1281, %v1510
  %v1512 = vpop.f32.mrb[0].mxu0
  %v1513 = vadd.f32 %v1277, %v1512
  %v1514 = vpop.f32.mrb[0].mxu0
  %v1515 = vadd.f32 %v1281, %v1514
  %1516 = vmatprep.mubr.bf16.mxu0 %v1234
  %1517 = vmatmul.mubr.bf16.gmra.mrb[0].mxu0 %v1233
  %v1518 = vpop.f32.mrb[0].mxu0
  %v1519 = vadd.f32 %v1277, %v1518
  %v1520 = vpop.f32.mrb[0].mxu0
  %v1521 = vadd.f32 %v1281, %v1520
  %v1522 = vpop.f32.mrb[0].mxu0
  %v1523 = vadd.f32 %v1277, %v1522
  %v1524 = vpop.f32.mrb[0].mxu0
  %v1525 = vadd.f32 %v1281, %v1524
  %1526 = vmatprep.mubr.bf16.mxu0 %v1236
  %1527 = vmatmul.mubr.bf16.gmra.mrb[0].mxu0 %v1235
  %v1528 = vpop.f32.mrb[0].mxu0
  %v1529 = vadd.f32 %v1277, %v1528
  %v1530 = vpop.f32.mrb[0].mxu0
  %v1531 = vadd.f32 %v1281, %v1530
  %v1532 = vpop.f32.mrb[0].mxu0
  %v1533 = vadd.f32 %v1277, %v1532
  %v1534 = vpop.f32.mrb[0].mxu0
  %v1535 = vadd.f32 %v1281, %v1534
  %1536 = vmatprep.mubr.bf16.mxu0 %v1238
  %1537 = vmatmul.mubr.bf16.gmra.mrb[0].mxu0 %v1237
  %v1538 = vpop.f32.mrb[0].mxu0
  %v1539 = vadd.f32 %v1277, %v1538
  %v1540 = vpop.f32.mrb[0].mxu0
  %v1541 = vadd.f32 %v1281, %v1540
  %v1542 = vpop.f32.mrb[0].mxu0
  %v1543 = vadd.f32 %v1277, %v1542
  %v1544 = vpop.f32.mrb[0].mxu0
  %v1545 = vadd.f32 %v1281, %v1544
  %1546 = vmatprep.mubr.bf16.mxu0 %v1240
  %1547 = vmatmul.mubr.bf16.gmra.mrb[0].mxu0 %v1239
  %v1548 = vpop.f32.mrb[0].mxu0
  %v1549 = vadd.f32 %v1277, %v1548
  %v1550 = vpop.f32.mrb[0].mxu0
  %v1551 = vadd.f32 %v1281, %v1550
  %v1552 = vpop.f32.mrb[0].mxu0
  %v1553 = vadd.f32 %v1277, %v1552
  %v1554 = vpop.f32.mrb[0].mxu0
  %v1555 = vadd.f32 %v1281, %v1554
  %1556 = vdwg.mxu0
  %vm1557 = vcmp.gt.f32.partialorder %v1479, 0.0
  %vm1558 = vcmp.gt.f32.partialorder %v1481, 0.0
  %vm1559 = vcmp.gt.f32.partialorder %v1483, 0.0
  %vm1560 = vcmp.gt.f32.partialorder %v1485, 0.0
  %vm1561 = vcmp.gt.f32.partialorder %v1489, 0.0
  %vm1562 = vcmp.gt.f32.partialorder %v1491, 0.0
  %vm1563 = vcmp.gt.f32.partialorder %v1493, 0.0
  %vm1564 = vcmp.gt.f32.partialorder %v1495, 0.0
  %vm1565 = vcmp.gt.f32.partialorder %v1499, 0.0
  %vm1566 = vcmp.gt.f32.partialorder %v1501, 0.0
  %vm1567 = vcmp.gt.f32.partialorder %v1503, 0.0
  %vm1568 = vcmp.gt.f32.partialorder %v1505, 0.0
  %vm1569 = vcmp.gt.f32.partialorder %v1509, 0.0
  %vm1570 = vcmp.gt.f32.partialorder %v1511, 0.0
  %vm1571 = vcmp.gt.f32.partialorder %v1513, 0.0
  %vm1572 = vcmp.gt.f32.partialorder %v1515, 0.0
  %vm1573 = vcmp.gt.f32.partialorder %v1519, 0.0
  %vm1574 = vcmp.gt.f32.partialorder %v1521, 0.0
  %vm1575 = vcmp.gt.f32.partialorder %v1523, 0.0
  %vm1576 = vcmp.gt.f32.partialorder %v1525, 0.0
  %vm1577 = vcmp.gt.f32.partialorder %v1529, 0.0
  %vm1578 = vcmp.gt.f32.partialorder %v1531, 0.0
  %vm1579 = vcmp.gt.f32.partialorder %v1533, 0.0
  %vm1580 = vcmp.gt.f32.partialorder %v1535, 0.0
  %vm1581 = vcmp.gt.f32.partialorder %v1539, 0.0
  %vm1582 = vcmp.gt.f32.partialorder %v1541, 0.0
  %vm1583 = vcmp.gt.f32.partialorder %v1543, 0.0
  %vm1584 = vcmp.gt.f32.partialorder %v1545, 0.0
  %vm1585 = vcmp.gt.f32.partialorder %v1549, 0.0
  %vm1586 = vcmp.gt.f32.partialorder %v1551, 0.0
  %vm1587 = vcmp.gt.f32.partialorder %v1553, 0.0
  %vm1588 = vcmp.gt.f32.partialorder %v1555, 0.0
  %v1589 = vmul.f32 %v1479, 0.01
  %v1590 = vmul.f32 %v1481, 0.01
  %v1591 = vmul.f32 %v1483, 0.01
  %v1592 = vmul.f32 %v1485, 0.01
  %v1593 = vmul.f32 %v1489, 0.01
  %v1594 = vmul.f32 %v1491, 0.01
  %v1595 = vmul.f32 %v1493, 0.01
  %v1596 = vmul.f32 %v1495, 0.01
  %v1597 = vmul.f32 %v1499, 0.01
  %v1598 = vmul.f32 %v1501, 0.01
  %v1599 = vmul.f32 %v1503, 0.01
  %v1600 = vmul.f32 %v1505, 0.01
  %v1601 = vmul.f32 %v1509, 0.01
  %v1602 = vmul.f32 %v1511, 0.01
  %v1603 = vmul.f32 %v1513, 0.01
  %v1604 = vmul.f32 %v1515, 0.01
  %v1605 = vmul.f32 %v1519, 0.01
  %v1606 = vmul.f32 %v1521, 0.01
  %v1607 = vmul.f32 %v1523, 0.01
  %v1608 = vmul.f32 %v1525, 0.01
  %v1609 = vmul.f32 %v1529, 0.01
  %v1610 = vmul.f32 %v1531, 0.01
  %v1611 = vmul.f32 %v1533, 0.01
  %v1612 = vmul.f32 %v1535, 0.01
  %v1613 = vmul.f32 %v1539, 0.01
  %v1614 = vmul.f32 %v1541, 0.01
  %v1615 = vmul.f32 %v1543, 0.01
  %v1616 = vmul.f32 %v1545, 0.01
  %v1617 = vmul.f32 %v1549, 0.01
  %v1618 = vmul.f32 %v1551, 0.01
  %v1619 = vmul.f32 %v1553, 0.01
  %v1620 = vmul.f32 %v1555, 0.01
  %v1621 = vsel %vm1557, %v1479, %v1589
  %v1622 = vsel %vm1558, %v1481, %v1590
  %v1623 = vsel %vm1559, %v1483, %v1591
  %v1624 = vsel %vm1560, %v1485, %v1592
  %v1625 = vsel %vm1561, %v1489, %v1593
  %v1626 = vsel %vm1562, %v1491, %v1594
  %v1627 = vsel %vm1563, %v1493, %v1595
  %v1628 = vsel %vm1564, %v1495, %v1596
  %v1629 = vsel %vm1565, %v1499, %v1597
  %v1630 = vsel %vm1566, %v1501, %v1598
  %v1631 = vsel %vm1567, %v1503, %v1599
  %v1632 = vsel %vm1568, %v1505, %v1600
  %v1633 = vsel %vm1569, %v1509, %v1601
  %v1634 = vsel %vm1570, %v1511, %v1602
  %v1635 = vsel %vm1571, %v1513, %v1603
  %v1636 = vsel %vm1572, %v1515, %v1604
  %v1637 = vsel %vm1573, %v1519, %v1605
  %v1638 = vsel %vm1574, %v1521, %v1606
  %v1639 = vsel %vm1575, %v1523, %v1607
  %v1640 = vsel %vm1576, %v1525, %v1608
  %v1641 = vsel %vm1577, %v1529, %v1609
  %v1642 = vsel %vm1578, %v1531, %v1610
  %v1643 = vsel %vm1579, %v1533, %v1611
  %v1644 = vsel %vm1580, %v1535, %v1612
  %v1645 = vsel %vm1581, %v1539, %v1613
  %v1646 = vsel %vm1582, %v1541, %v1614
  %v1647 = vsel %vm1583, %v1543, %v1615
  %v1648 = vsel %vm1584, %v1545, %v1616
  %v1649 = vsel %vm1585, %v1549, %v1617
  %v1650 = vsel %vm1586, %v1551, %v1618
  %v1651 = vsel %vm1587, %v1553, %v1619
  %v1652 = vsel %vm1588, %v1555, %v1620
  %v1653 = vpack.c.bf16 %v1623, %v1621
  %v1654 = vpack.c.bf16 %v1624, %v1622
  %v1655 = vpack.c.bf16 %v1627, %v1625
  %v1656 = vpack.c.bf16 %v1628, %v1626
  %v1657 = vpack.c.bf16 %v1631, %v1629
  %v1658 = vpack.c.bf16 %v1632, %v1630
  %v1659 = vpack.c.bf16 %v1635, %v1633
  %v1660 = vpack.c.bf16 %v1636, %v1634
  %v1661 = vpack.c.bf16 %v1639, %v1637
  %v1662 = vpack.c.bf16 %v1640, %v1638
  %v1663 = vpack.c.bf16 %v1643, %v1641
  %v1664 = vpack.c.bf16 %v1644, %v1642
  %v1665 = vpack.c.bf16 %v1647, %v1645
  %v1666 = vpack.c.bf16 %v1648, %v1646
  %v1667 = vpack.c.bf16 %v1651, %v1649
  %v1668 = vpack.c.bf16 %v1652, %v1650
  %v1669 = vld [vmem:[%s9] sm:$0xff]
  %v1670 = vld [vmem:[%s9 + $0x8] sm:$0xff]
  %v1671 = vld [vmem:[%s9 + $0x10] sm:$0xff]
  %v1672 = vld [vmem:[%s9 + $0x18] sm:$0xff]
  %v1673 = vld [vmem:[%s9 + $0x20] sm:$0xff]
  %v1674 = vld [vmem:[%s9 + $0x28] sm:$0xff]
  %v1675 = vld [vmem:[%s9 + $0x30] sm:$0xff]
  %v1676 = vld [vmem:[%s9 + $0x38] sm:$0xff]
  %v1677 = vld [vmem:[%s9 + $0x40] sm:$0xff]
  %v1678 = vld [vmem:[%s9 + $0x48] sm:$0xff]
  %v1679 = vld [vmem:[%s9 + $0x50] sm:$0xff]
  %v1680 = vld [vmem:[%s9 + $0x58] sm:$0xff]
  %v1681 = vld [vmem:[%s9 + $0x60] sm:$0xff]
  %v1682 = vld [vmem:[%s9 + $0x68] sm:$0xff]
  %v1683 = vld [vmem:[%s9 + $0x70] sm:$0xff]
  %v1684 = vld [vmem:[%s9 + $0x78] sm:$0xff]
  %v1685 = vld [vmem:[%s9 + $0x80] sm:$0xff]
  %v1686 = vld [vmem:[%s9 + $0x88] sm:$0xff]
  %v1687 = vld [vmem:[%s9 + $0x90] sm:$0xff]
  %v1688 = vld [vmem:[%s9 + $0x98] sm:$0xff]
  %v1689 = vld [vmem:[%s9 + $0xa0] sm:$0xff]
  %v1690 = vld [vmem:[%s9 + $0xa8] sm:$0xff]
  %v1691 = vld [vmem:[%s9 + $0xb0] sm:$0xff]
  %v1692 = vld [vmem:[%s9 + $0xb8] sm:$0xff]
  %v1693 = vld [vmem:[%s9 + $0xc0] sm:$0xff]
  %v1694 = vld [vmem:[%s9 + $0xc8] sm:$0xff]
  %v1695 = vld [vmem:[%s9 + $0xd0] sm:$0xff]
  %v1696 = vld [vmem:[%s9 + $0xd8] sm:$0xff]
  %v1697 = vld [vmem:[%s9 + $0xe0] sm:$0xff]
  %v1698 = vld [vmem:[%s9 + $0xe8] sm:$0xff]
  %v1699 = vld [vmem:[%s9 + $0xf0] sm:$0xff]
  %v1700 = vld [vmem:[%s9 + $0xf8] sm:$0xff]
  %v1702 = vlaneseq
  %v1703 = vshrl.u32 %v1702, 7
  %v1704 = vsub.s32 0, %v1703
  %v1705 = vrot.slane %v49, %v1704
  %v1706 = vlaneseq
  %v1707 = vshrl.u32 %v1706, 7
  %v1708 = vsub.s32 1, %v1707
  %v1709 = vrot.slane %v49, %v1708
  %v1744 = vunpack.c.l.b16 %v1669
  %v1745 = vunpack.c.h.b16 %v1669
  %v1746 = vunpack.c.l.b16 %v1670
  %v1747 = vunpack.c.h.b16 %v1670
  %v1748 = vunpack.c.l.b16 %v1671
  %v1749 = vunpack.c.h.b16 %v1671
  %v1750 = vunpack.c.l.b16 %v1672
  %v1751 = vunpack.c.h.b16 %v1672
  %v1752 = vunpack.c.l.b16 %v1673
  %v1753 = vunpack.c.h.b16 %v1673
  %v1754 = vunpack.c.l.b16 %v1674
  %v1755 = vunpack.c.h.b16 %v1674
  %v1756 = vunpack.c.l.b16 %v1675
  %v1757 = vunpack.c.h.b16 %v1675
  %v1758 = vunpack.c.l.b16 %v1676
  %v1759 = vunpack.c.h.b16 %v1676
  %v1760 = vunpack.c.l.b16 %v1677
  %v1761 = vunpack.c.h.b16 %v1677
  %v1762 = vunpack.c.l.b16 %v1678
  %v1763 = vunpack.c.h.b16 %v1678
  %v1764 = vunpack.c.l.b16 %v1679
  %v1765 = vunpack.c.h.b16 %v1679
  %v1766 = vunpack.c.l.b16 %v1680
  %v1767 = vunpack.c.h.b16 %v1680
  %v1768 = vunpack.c.l.b16 %v1681
  %v1769 = vunpack.c.h.b16 %v1681
  %v1770 = vunpack.c.l.b16 %v1682
  %v1771 = vunpack.c.h.b16 %v1682
  %v1772 = vunpack.c.l.b16 %v1683
  %v1773 = vunpack.c.h.b16 %v1683
  %v1774 = vunpack.c.l.b16 %v1684
  %v1775 = vunpack.c.h.b16 %v1684
  %v1776 = vunpack.c.l.b16 %v1685
  %v1777 = vunpack.c.h.b16 %v1685
  %v1778 = vunpack.c.l.b16 %v1686
  %v1779 = vunpack.c.h.b16 %v1686
  %v1780 = vunpack.c.l.b16 %v1687
  %v1781 = vunpack.c.h.b16 %v1687
  %v1782 = vunpack.c.l.b16 %v1688
  %v1783 = vunpack.c.h.b16 %v1688
  %v1784 = vunpack.c.l.b16 %v1689
  %v1785 = vunpack.c.h.b16 %v1689
  %v1786 = vunpack.c.l.b16 %v1690
  %v1787 = vunpack.c.h.b16 %v1690
  %v1788 = vunpack.c.l.b16 %v1691
  %v1789 = vunpack.c.h.b16 %v1691
  %v1790 = vunpack.c.l.b16 %v1692
  %v1791 = vunpack.c.h.b16 %v1692
  %v1792 = vunpack.c.l.b16 %v1693
  %v1793 = vunpack.c.h.b16 %v1693
  %v1794 = vunpack.c.l.b16 %v1694
  %v1795 = vunpack.c.h.b16 %v1694
  %v1796 = vunpack.c.l.b16 %v1695
  %v1797 = vunpack.c.h.b16 %v1695
  %v1798 = vunpack.c.l.b16 %v1696
  %v1799 = vunpack.c.h.b16 %v1696
  %v1800 = vunpack.c.l.b16 %v1697
  %v1801 = vunpack.c.h.b16 %v1697
  %v1802 = vunpack.c.l.b16 %v1698
  %v1803 = vunpack.c.h.b16 %v1698
  %v1804 = vunpack.c.l.b16 %v1699
  %v1805 = vunpack.c.h.b16 %v1699
  %v1806 = vunpack.c.l.b16 %v1700
  %v1807 = vunpack.c.h.b16 %v1700
  %v1808 = vpack.c.b16 %v1746, %v1744
  %v1809 = vpack.c.b16 %v1747, %v1745
  %v1810 = vpack.c.b16 %v1750, %v1748
  %v1811 = vpack.c.b16 %v1751, %v1749
  %v1812 = vpack.c.b16 %v1754, %v1752
  %v1813 = vpack.c.b16 %v1755, %v1753
  %v1814 = vpack.c.b16 %v1758, %v1756
  %v1815 = vpack.c.b16 %v1759, %v1757
  %v1816 = vpack.c.b16 %v1762, %v1760
  %v1817 = vpack.c.b16 %v1763, %v1761
  %v1818 = vpack.c.b16 %v1766, %v1764
  %v1819 = vpack.c.b16 %v1767, %v1765
  %v1820 = vpack.c.b16 %v1770, %v1768
  %v1821 = vpack.c.b16 %v1771, %v1769
  %v1822 = vpack.c.b16 %v1774, %v1772
  %v1823 = vpack.c.b16 %v1775, %v1773
  %v1824 = vpack.c.b16 %v1778, %v1776
  %v1825 = vpack.c.b16 %v1779, %v1777
  %v1826 = vpack.c.b16 %v1782, %v1780
  %v1827 = vpack.c.b16 %v1783, %v1781
  %v1828 = vpack.c.b16 %v1786, %v1784
  %v1829 = vpack.c.b16 %v1787, %v1785
  %v1830 = vpack.c.b16 %v1790, %v1788
  %v1831 = vpack.c.b16 %v1791, %v1789
  %v1832 = vpack.c.b16 %v1794, %v1792
  %v1833 = vpack.c.b16 %v1795, %v1793
  %v1834 = vpack.c.b16 %v1798, %v1796
  %v1835 = vpack.c.b16 %v1799, %v1797
  %v1836 = vpack.c.b16 %v1802, %v1800
  %v1837 = vpack.c.b16 %v1803, %v1801
  %v1838 = vpack.c.b16 %v1806, %v1804
  %v1839 = vpack.c.b16 %v1807, %v1805
  %1872 = vmatprep.subr.bf16.mxu0 %v1809
  %1873 = vmatpush1.bf16.msra.mxu0 %v1808
  %1874 = vmatprep.subr.bf16.mxu0 %v1811
  %1875 = vmatpush1.bf16.msra.mxu0 %v1810
  %1876 = vmatprep.subr.bf16.mxu0 %v1813
  %1877 = vmatpush1.bf16.msra.mxu0 %v1812
  %1878 = vmatprep.subr.bf16.mxu0 %v1815
  %1879 = vmatpush1.bf16.msra.mxu0 %v1814
  %1880 = vmatprep.subr.bf16.mxu0 %v1817
  %1881 = vmatpush1.bf16.msra.mxu0 %v1816
  %1882 = vmatprep.subr.bf16.mxu0 %v1819
  %1883 = vmatpush1.bf16.msra.mxu0 %v1818
  %1884 = vmatprep.subr.bf16.mxu0 %v1821
  %1885 = vmatpush1.bf16.msra.mxu0 %v1820
  %1886 = vmatprep.subr.bf16.mxu0 %v1823
  %1887 = vmatpush1.bf16.msra.mxu0 %v1822
  %1888 = vmatprep.subr.bf16.mxu0 %v1825
  %1889 = vmatpush1.bf16.msra.mxu0 %v1824
  %1890 = vmatprep.subr.bf16.mxu0 %v1827
  %1891 = vmatpush1.bf16.msra.mxu0 %v1826
  %1892 = vmatprep.subr.bf16.mxu0 %v1829
  %1893 = vmatpush1.bf16.msra.mxu0 %v1828
  %1894 = vmatprep.subr.bf16.mxu0 %v1831
  %1895 = vmatpush1.bf16.msra.mxu0 %v1830
  %1896 = vmatprep.subr.bf16.mxu0 %v1833
  %1897 = vmatpush1.bf16.msra.mxu0 %v1832
  %1898 = vmatprep.subr.bf16.mxu0 %v1835
  %1899 = vmatpush1.bf16.msra.mxu0 %v1834
  %1900 = vmatprep.subr.bf16.mxu0 %v1837
  %1901 = vmatpush1.bf16.msra.mxu0 %v1836
  %1902 = vmatprep.subr.bf16.mxu0 %v1839
  %1903 = vmatpush1.bf16.msra.mxu0 %v1838
  %1904 = vmatprep.mubr.bf16.mxu0 %v1654
  %1905 = vmatmul.mubr.bf16.gmra.mrb[0].mxu0 %v1653
  %v1906 = vpop.f32.mrb[0].mxu0
  %v1907 = vadd.f32 %v1705, %v1906
  %v1908 = vpop.f32.mrb[0].mxu0
  %v1909 = vadd.f32 %v1709, %v1908
  %v1910 = vpop.f32.mrb[0].mxu0
  %v1911 = vadd.f32 %v1705, %v1910
  %v1912 = vpop.f32.mrb[0].mxu0
  %v1913 = vadd.f32 %v1709, %v1912
  %1914 = vmatprep.mubr.bf16.mxu0 %v1656
  %1915 = vmatmul.mubr.bf16.gmra.mrb[0].mxu0 %v1655
  %v1916 = vpop.f32.mrb[0].mxu0
  %v1917 = vadd.f32 %v1705, %v1916
  %v1918 = vpop.f32.mrb[0].mxu0
  %v1919 = vadd.f32 %v1709, %v1918
  %v1920 = vpop.f32.mrb[0].mxu0
  %v1921 = vadd.f32 %v1705, %v1920
  %v1922 = vpop.f32.mrb[0].mxu0
  %v1923 = vadd.f32 %v1709, %v1922
  %1924 = vmatprep.mubr.bf16.mxu0 %v1658
  %1925 = vmatmul.mubr.bf16.gmra.mrb[0].mxu0 %v1657
  %v1926 = vpop.f32.mrb[0].mxu0
  %v1927 = vadd.f32 %v1705, %v1926
  %v1928 = vpop.f32.mrb[0].mxu0
  %v1929 = vadd.f32 %v1709, %v1928
  %v1930 = vpop.f32.mrb[0].mxu0
  %v1931 = vadd.f32 %v1705, %v1930
  %v1932 = vpop.f32.mrb[0].mxu0
  %v1933 = vadd.f32 %v1709, %v1932
  %1934 = vmatprep.mubr.bf16.mxu0 %v1660
  %1935 = vmatmul.mubr.bf16.gmra.mrb[0].mxu0 %v1659
  %v1936 = vpop.f32.mrb[0].mxu0
  %v1937 = vadd.f32 %v1705, %v1936
  %v1938 = vpop.f32.mrb[0].mxu0
  %v1939 = vadd.f32 %v1709, %v1938
  %v1940 = vpop.f32.mrb[0].mxu0
  %v1941 = vadd.f32 %v1705, %v1940
  %v1942 = vpop.f32.mrb[0].mxu0
  %v1943 = vadd.f32 %v1709, %v1942
  %1944 = vmatprep.mubr.bf16.mxu0 %v1662
  %1945 = vmatmul.mubr.bf16.gmra.mrb[0].mxu0 %v1661
  %v1946 = vpop.f32.mrb[0].mxu0
  %v1947 = vadd.f32 %v1705, %v1946
  %v1948 = vpop.f32.mrb[0].mxu0
  %v1949 = vadd.f32 %v1709, %v1948
  %v1950 = vpop.f32.mrb[0].mxu0
  %v1951 = vadd.f32 %v1705, %v1950
  %v1952 = vpop.f32.mrb[0].mxu0
  %v1953 = vadd.f32 %v1709, %v1952
  %1954 = vmatprep.mubr.bf16.mxu0 %v1664
  %1955 = vmatmul.mubr.bf16.gmra.mrb[0].mxu0 %v1663
  %v1956 = vpop.f32.mrb[0].mxu0
  %v1957 = vadd.f32 %v1705, %v1956
  %v1958 = vpop.f32.mrb[0].mxu0
  %v1959 = vadd.f32 %v1709, %v1958
  %v1960 = vpop.f32.mrb[0].mxu0
  %v1961 = vadd.f32 %v1705, %v1960
  %v1962 = vpop.f32.mrb[0].mxu0
  %v1963 = vadd.f32 %v1709, %v1962
  %1964 = vmatprep.mubr.bf16.mxu0 %v1666
  %1965 = vmatmul.mubr.bf16.gmra.mrb[0].mxu0 %v1665
  %v1966 = vpop.f32.mrb[0].mxu0
  %v1967 = vadd.f32 %v1705, %v1966
  %v1968 = vpop.f32.mrb[0].mxu0
  %v1969 = vadd.f32 %v1709, %v1968
  %v1970 = vpop.f32.mrb[0].mxu0
  %v1971 = vadd.f32 %v1705, %v1970
  %v1972 = vpop.f32.mrb[0].mxu0
  %v1973 = vadd.f32 %v1709, %v1972
  %1974 = vmatprep.mubr.bf16.mxu0 %v1668
  %1975 = vmatmul.mubr.bf16.gmra.mrb[0].mxu0 %v1667
  %v1976 = vpop.f32.mrb[0].mxu0
  %v1977 = vadd.f32 %v1705, %v1976
  %v1978 = vpop.f32.mrb[0].mxu0
  %v1979 = vadd.f32 %v1709, %v1978
  %v1980 = vpop.f32.mrb[0].mxu0
  %v1981 = vadd.f32 %v1705, %v1980
  %v1982 = vpop.f32.mrb[0].mxu0
  %v1983 = vadd.f32 %v1709, %v1982
  %1984 = vdwg.mxu0
  %vm1985 = vcmp.gt.f32.partialorder %v1907, 0.0
  %vm1986 = vcmp.gt.f32.partialorder %v1909, 0.0
  %vm1987 = vcmp.gt.f32.partialorder %v1911, 0.0
  %vm1988 = vcmp.gt.f32.partialorder %v1913, 0.0
  %vm1989 = vcmp.gt.f32.partialorder %v1917, 0.0
  %vm1990 = vcmp.gt.f32.partialorder %v1919, 0.0
  %vm1991 = vcmp.gt.f32.partialorder %v1921, 0.0
  %vm1992 = vcmp.gt.f32.partialorder %v1923, 0.0
  %vm1993 = vcmp.gt.f32.partialorder %v1927, 0.0
  %vm1994 = vcmp.gt.f32.partialorder %v1929, 0.0
  %vm1995 = vcmp.gt.f32.partialorder %v1931, 0.0
  %vm1996 = vcmp.gt.f32.partialorder %v1933, 0.0
  %vm1997 = vcmp.gt.f32.partialorder %v1937, 0.0
  %vm1998 = vcmp.gt.f32.partialorder %v1939, 0.0
  %vm1999 = vcmp.gt.f32.partialorder %v1941, 0.0
  %vm2000 = vcmp.gt.f32.partialorder %v1943, 0.0
  %vm2001 = vcmp.gt.f32.partialorder %v1947, 0.0
  %vm2002 = vcmp.gt.f32.partialorder %v1949, 0.0
  %vm2003 = vcmp.gt.f32.partialorder %v1951, 0.0
  %vm2004 = vcmp.gt.f32.partialorder %v1953, 0.0
  %vm2005 = vcmp.gt.f32.partialorder %v1957, 0.0
  %vm2006 = vcmp.gt.f32.partialorder %v1959, 0.0
  %vm2007 = vcmp.gt.f32.partialorder %v1961, 0.0
  %vm2008 = vcmp.gt.f32.partialorder %v1963, 0.0
  %vm2009 = vcmp.gt.f32.partialorder %v1967, 0.0
  %vm2010 = vcmp.gt.f32.partialorder %v1969, 0.0
  %vm2011 = vcmp.gt.f32.partialorder %v1971, 0.0
  %vm2012 = vcmp.gt.f32.partialorder %v1973, 0.0
  %vm2013 = vcmp.gt.f32.partialorder %v1977, 0.0
  %vm2014 = vcmp.gt.f32.partialorder %v1979, 0.0
  %vm2015 = vcmp.gt.f32.partialorder %v1981, 0.0
  %vm2016 = vcmp.gt.f32.partialorder %v1983, 0.0
  %v2017 = vmul.f32 %v1907, 0.01
  %v2018 = vmul.f32 %v1909, 0.01
  %v2019 = vmul.f32 %v1911, 0.01
  %v2020 = vmul.f32 %v1913, 0.01
  %v2021 = vmul.f32 %v1917, 0.01
  %v2022 = vmul.f32 %v1919, 0.01
  %v2023 = vmul.f32 %v1921, 0.01
  %v2024 = vmul.f32 %v1923, 0.01
  %v2025 = vmul.f32 %v1927, 0.01
  %v2026 = vmul.f32 %v1929, 0.01
  %v2027 = vmul.f32 %v1931, 0.01
  %v2028 = vmul.f32 %v1933, 0.01
  %v2029 = vmul.f32 %v1937, 0.01
  %v2030 = vmul.f32 %v1939, 0.01
  %v2031 = vmul.f32 %v1941, 0.01
  %v2032 = vmul.f32 %v1943, 0.01
  %v2033 = vmul.f32 %v1947, 0.01
  %v2034 = vmul.f32 %v1949, 0.01
  %v2035 = vmul.f32 %v1951, 0.01
  %v2036 = vmul.f32 %v1953, 0.01
  %v2037 = vmul.f32 %v1957, 0.01
  %v2038 = vmul.f32 %v1959, 0.01
  %v2039 = vmul.f32 %v1961, 0.01
  %v2040 = vmul.f32 %v1963, 0.01
  %v2041 = vmul.f32 %v1967, 0.01
  %v2042 = vmul.f32 %v1969, 0.01
  %v2043 = vmul.f32 %v1971, 0.01
  %v2044 = vmul.f32 %v1973, 0.01
  %v2045 = vmul.f32 %v1977, 0.01
  %v2046 = vmul.f32 %v1979, 0.01
  %v2047 = vmul.f32 %v1981, 0.01
  %v2048 = vmul.f32 %v1983, 0.01
  %v2049 = vsel %vm1985, %v1907, %v2017
  %v2050 = vsel %vm1986, %v1909, %v2018
  %v2051 = vsel %vm1987, %v1911, %v2019
  %v2052 = vsel %vm1988, %v1913, %v2020
  %v2053 = vsel %vm1989, %v1917, %v2021
  %v2054 = vsel %vm1990, %v1919, %v2022
  %v2055 = vsel %vm1991, %v1921, %v2023
  %v2056 = vsel %vm1992, %v1923, %v2024
  %v2057 = vsel %vm1993, %v1927, %v2025
  %v2058 = vsel %vm1994, %v1929, %v2026
  %v2059 = vsel %vm1995, %v1931, %v2027
  %v2060 = vsel %vm1996, %v1933, %v2028
  %v2061 = vsel %vm1997, %v1937, %v2029
  %v2062 = vsel %vm1998, %v1939, %v2030
  %v2063 = vsel %vm1999, %v1941, %v2031
  %v2064 = vsel %vm2000, %v1943, %v2032
  %v2065 = vsel %vm2001, %v1947, %v2033
  %v2066 = vsel %vm2002, %v1949, %v2034
  %v2067 = vsel %vm2003, %v1951, %v2035
  %v2068 = vsel %vm2004, %v1953, %v2036
  %v2069 = vsel %vm2005, %v1957, %v2037
  %v2070 = vsel %vm2006, %v1959, %v2038
  %v2071 = vsel %vm2007, %v1961, %v2039
  %v2072 = vsel %vm2008, %v1963, %v2040
  %v2073 = vsel %vm2009, %v1967, %v2041
  %v2074 = vsel %vm2010, %v1969, %v2042
  %v2075 = vsel %vm2011, %v1971, %v2043
  %v2076 = vsel %vm2012, %v1973, %v2044
  %v2077 = vsel %vm2013, %v1977, %v2045
  %v2078 = vsel %vm2014, %v1979, %v2046
  %v2079 = vsel %vm2015, %v1981, %v2047
  %v2080 = vsel %vm2016, %v1983, %v2048
  %v2081 = vpack.c.bf16 %v2051, %v2049
  %v2082 = vpack.c.bf16 %v2052, %v2050
  %v2083 = vpack.c.bf16 %v2055, %v2053
  %v2084 = vpack.c.bf16 %v2056, %v2054
  %v2085 = vpack.c.bf16 %v2059, %v2057
  %v2086 = vpack.c.bf16 %v2060, %v2058
  %v2087 = vpack.c.bf16 %v2063, %v2061
  %v2088 = vpack.c.bf16 %v2064, %v2062
  %v2089 = vpack.c.bf16 %v2067, %v2065
  %v2090 = vpack.c.bf16 %v2068, %v2066
  %v2091 = vpack.c.bf16 %v2071, %v2069
  %v2092 = vpack.c.bf16 %v2072, %v2070
  %v2093 = vpack.c.bf16 %v2075, %v2073
  %v2094 = vpack.c.bf16 %v2076, %v2074
  %v2095 = vpack.c.bf16 %v2079, %v2077
  %v2096 = vpack.c.bf16 %v2080, %v2078
  %v2097 = vld [vmem:[%s11] sm:$0xff]
  %2099 = vset.pattern.permute.xlu0 0
  %2100 = vperm.xlu0 %2099, %v50
  %v2101 = vpop.permute.xlu0 %2100
  %v2104 = vunpack.c.l.b16 %v2097
  %v2105 = vunpack.c.h.b16 %v2097
  %v2106 = vpack.c.b16 %v2104, %v2104
  %v2107 = vpack.c.b16 %v2105, %v2105
  %2110 = vmatprep.subr.bf16.mxu0 %v2082
  %2111 = vmatpush1.bf16.xpose.msra.mxu0 %v2081
  %2112 = vmatprep.subr.bf16.mxu0 %v2084
  %2113 = vmatpush1.bf16.xpose.msra.mxu0 %v2083
  %2114 = vmatprep.subr.bf16.mxu0 %v2086
  %2115 = vmatpush1.bf16.xpose.msra.mxu0 %v2085
  %2116 = vmatprep.subr.bf16.mxu0 %v2088
  %2117 = vmatpush1.bf16.xpose.msra.mxu0 %v2087
  %2118 = vmatprep.subr.bf16.mxu0 %v2090
  %2119 = vmatpush1.bf16.xpose.msra.mxu0 %v2089
  %2120 = vmatprep.subr.bf16.mxu0 %v2092
  %2121 = vmatpush1.bf16.xpose.msra.mxu0 %v2091
  %2122 = vmatprep.subr.bf16.mxu0 %v2094
  %2123 = vmatpush1.bf16.xpose.msra.mxu0 %v2093
  %2124 = vmatprep.subr.bf16.mxu0 %v2096
  %2125 = vmatpush1.bf16.xpose.msra.mxu0 %v2095
  %2126 = vmatprep.subr.bf16.mxu0 0
  %2127 = vmatpush1.bf16.xpose.msra.mxu0 0
  %2128 = vmatprep.subr.bf16.mxu0 0
  %2129 = vmatpush1.bf16.xpose.msra.mxu0 0
  %2130 = vmatprep.subr.bf16.mxu0 0
  %2131 = vmatpush1.bf16.xpose.msra.mxu0 0
  %2132 = vmatprep.subr.bf16.mxu0 0
  %2133 = vmatpush1.bf16.xpose.msra.mxu0 0
  %2134 = vmatprep.subr.bf16.mxu0 0
  %2135 = vmatpush1.bf16.xpose.msra.mxu0 0
  %2136 = vmatprep.subr.bf16.mxu0 0
  %2137 = vmatpush1.bf16.xpose.msra.mxu0 0
  %2138 = vmatprep.subr.bf16.mxu0 0
  %2139 = vmatpush1.bf16.xpose.msra.mxu0 0
  %2140 = vmatprep.subr.bf16.mxu0 0
  %2141 = vmatpush1.bf16.xpose.msra.mxu0 0
  %2142 = vmatprep.mubr.bf16.mxu0 %v2107
  %2143 = vmatmul.mubr.bf16.gmra.mrb[0].mxu0 %v2106
  %v2144 = vpop.f32.mrb[0].mxu0
  %v2145 = vadd.f32 %v2101, %v2144
  %v2146 = vpop.f32.mrb[0].mxu0
  %v2147 = vpop.f32.mrb[0].mxu0
  %v2148 = vpop.f32.mrb[0].mxu0
  %2149 = vdwg.mxu0
  %2150 = vst [vmem:[%s13] sm:$0xff] %v2145
  %s2151 = scalar_lea.vmem %s0, 64
  %v2152 = vld [vmem:[%s2151] sm:$0xf]
  %v2153 = vld [vmem:[%s2151 + $0x4] sm:$0xf]
  %v2154 = vld [vmem:[%s2151 + $0x8] sm:$0xf]
  %v2155 = vld [vmem:[%s2151 + $0xc] sm:$0xf]
  %v2156 = vld [vmem:[%s2151 + $0x10] sm:$0xf]
  %v2157 = vld [vmem:[%s2151 + $0x14] sm:$0xf]
  %v2158 = vld [vmem:[%s2151 + $0x18] sm:$0xf]
  %v2159 = vld [vmem:[%s2151 + $0x1c] sm:$0xf]
  %v2160 = vld [vmem:[%s2151 + $0x20] sm:$0xf]
  %v2161 = vld [vmem:[%s2151 + $0x24] sm:$0xf]
  %v2162 = vld [vmem:[%s2151 + $0x28] sm:$0xf]
  %v2163 = vld [vmem:[%s2151 + $0x2c] sm:$0xf]
  %v2164 = vld [vmem:[%s2151 + $0x30] sm:$0xf]
  %v2165 = vld [vmem:[%s2151 + $0x34] sm:$0xf]
  %v2166 = vld [vmem:[%s2151 + $0x38] sm:$0xf]
  %v2167 = vld [vmem:[%s2151 + $0x3c] sm:$0xf]
  %v2168 = vld [vmem:[%s1] sm:$0xff]
  %v2169 = vld [vmem:[%s1 + $0x8] sm:$0x77]
  %v2186 = vunpack.c.l.b16 %v2152
  %v2187 = vunpack.c.l.b16 %v2153
  %v2188 = vunpack.c.l.b16 %v2154
  %v2189 = vunpack.c.l.b16 %v2155
  %v2190 = vunpack.c.l.b16 %v2156
  %v2191 = vunpack.c.l.b16 %v2157
  %v2192 = vunpack.c.l.b16 %v2158
  %v2193 = vunpack.c.l.b16 %v2159
  %v2194 = vunpack.c.l.b16 %v2160
  %v2195 = vunpack.c.l.b16 %v2161
  %v2196 = vunpack.c.l.b16 %v2162
  %v2197 = vunpack.c.l.b16 %v2163
  %v2198 = vunpack.c.l.b16 %v2164
  %v2199 = vunpack.c.l.b16 %v2165
  %v2200 = vunpack.c.l.b16 %v2166
  %v2201 = vunpack.c.l.b16 %v2167
  %v2202 = vpack.c.b16 %v2187, %v2186
  %v2203 = vpack.c.b16 %v2189, %v2188
  %v2204 = vpack.c.b16 %v2191, %v2190
  %v2205 = vpack.c.b16 %v2193, %v2192
  %v2206 = vpack.c.b16 %v2195, %v2194
  %v2207 = vpack.c.b16 %v2197, %v2196
  %v2208 = vpack.c.b16 %v2199, %v2198
  %v2209 = vpack.c.b16 %v2201, %v2200
  %v2212 = vunpack.c.l.b16 %v2168
  %v2213 = vunpack.c.h.b16 %v2168
  %v2214 = vunpack.c.l.b16 %v2169
  %v2215 = vunpack.c.h.b16 %v2169
  %v2216 = vpack.c.b16 %v2214, %v2212
  %v2217 = vpack.c.b16 %v2215, %v2213
  %v2219 = vsel %vm128, %v2202, 0
  %v2222 = vsel %vm128, %v2203, 0
  %v2225 = vsel %vm128, %v2204, 0
  %v2228 = vsel %vm128, %v2205, 0
  %v2231 = vsel %vm128, %v2206, 0
  %v2234 = vsel %vm128, %v2207, 0
  %v2237 = vsel %vm128, %v2208, 0
  %v2240 = vsel %vm128, %v2209, 0
  %v2243 = vsel %vm153, %v2216, 0
  %v2246 = vsel %vm153, %v2217, 0
  %2248 = vmatprep.subr.bf16.mxu0 %v2246
  %2249 = vmatpush1.bf16.msra.mxu0 %v2243
  %2250 = vmatprep.subr.bf16.mxu0 0
  %2251 = vmatpush1.bf16.msra.mxu0 0
  %2252 = vmatprep.subr.bf16.mxu0 0
  %2253 = vmatpush1.bf16.msra.mxu0 0
  %2254 = vmatprep.subr.bf16.mxu0 0
  %2255 = vmatpush1.bf16.msra.mxu0 0
  %2256 = vmatprep.subr.bf16.mxu0 0
  %2257 = vmatpush1.bf16.msra.mxu0 0
  %2258 = vmatprep.subr.bf16.mxu0 0
  %2259 = vmatpush1.bf16.msra.mxu0 0
  %2260 = vmatprep.subr.bf16.mxu0 0
  %2261 = vmatpush1.bf16.msra.mxu0 0
  %2262 = vmatprep.subr.bf16.mxu0 0
  %2263 = vmatpush1.bf16.msra.mxu0 0
  %2264 = vmatprep.subr.bf16.mxu0 0
  %2265 = vmatpush1.bf16.msra.mxu0 0
  %2266 = vmatprep.subr.bf16.mxu0 0
  %2267 = vmatpush1.bf16.msra.mxu0 0
  %2268 = vmatprep.subr.bf16.mxu0 0
  %2269 = vmatpush1.bf16.msra.mxu0 0
  %2270 = vmatprep.subr.bf16.mxu0 0
  %2271 = vmatpush1.bf16.msra.mxu0 0
  %2272 = vmatprep.subr.bf16.mxu0 0
  %2273 = vmatpush1.bf16.msra.mxu0 0
  %2274 = vmatprep.subr.bf16.mxu0 0
  %2275 = vmatpush1.bf16.msra.mxu0 0
  %2276 = vmatprep.subr.bf16.mxu0 0
  %2277 = vmatpush1.bf16.msra.mxu0 0
  %2278 = vmatprep.subr.bf16.mxu0 0
  %2279 = vmatpush1.bf16.msra.mxu0 0
  %2280 = vmatprep.mubr.bf16.mxu0 0
  %2281 = vmatmul.mubr.bf16.gmra.mrb[0].mxu0 %v2219
  %v2282 = vpop.f32.mrb[0].mxu0
  %v2283 = vadd.f32 %v73, %v2282
  %v2284 = vpop.f32.mrb[0].mxu0
  %v2285 = vadd.f32 %v77, %v2284
  %v2286 = vpop.f32.mrb[0].mxu0
  %v2287 = vadd.f32 %v73, %v2286
  %v2288 = vpop.f32.mrb[0].mxu0
  %v2289 = vadd.f32 %v77, %v2288
  %2290 = vmatprep.mubr.bf16.mxu0 0
  %2291 = vmatmul.mubr.bf16.gmra.mrb[0].mxu0 %v2222
  %v2292 = vpop.f32.mrb[0].mxu0
  %v2293 = vadd.f32 %v73, %v2292
  %v2294 = vpop.f32.mrb[0].mxu0
  %v2295 = vadd.f32 %v77, %v2294
  %v2296 = vpop.f32.mrb[0].mxu0
  %v2297 = vadd.f32 %v73, %v2296
  %v2298 = vpop.f32.mrb[0].mxu0
  %v2299 = vadd.f32 %v77, %v2298
  %2300 = vmatprep.mubr.bf16.mxu0 0
  %2301 = vmatmul.mubr.bf16.gmra.mrb[0].mxu0 %v2225
  %v2302 = vpop.f32.mrb[0].mxu0
  %v2303 = vadd.f32 %v73, %v2302
  %v2304 = vpop.f32.mrb[0].mxu0
  %v2305 = vadd.f32 %v77, %v2304
  %v2306 = vpop.f32.mrb[0].mxu0
  %v2307 = vadd.f32 %v73, %v2306
  %v2308 = vpop.f32.mrb[0].mxu0
  %v2309 = vadd.f32 %v77, %v2308
  %2310 = vmatprep.mubr.bf16.mxu0 0
  %2311 = vmatmul.mubr.bf16.gmra.mrb[0].mxu0 %v2228
  %v2312 = vpop.f32.mrb[0].mxu0
  %v2313 = vadd.f32 %v73, %v2312
  %v2314 = vpop.f32.mrb[0].mxu0
  %v2315 = vadd.f32 %v77, %v2314
  %v2316 = vpop.f32.mrb[0].mxu0
  %v2317 = vadd.f32 %v73, %v2316
  %v2318 = vpop.f32.mrb[0].mxu0
  %v2319 = vadd.f32 %v77, %v2318
  %2320 = vmatprep.mubr.bf16.mxu0 0
  %2321 = vmatmul.mubr.bf16.gmra.mrb[0].mxu0 %v2231
  %v2322 = vpop.f32.mrb[0].mxu0
  %v2323 = vadd.f32 %v73, %v2322
  %v2324 = vpop.f32.mrb[0].mxu0
  %v2325 = vadd.f32 %v77, %v2324
  %v2326 = vpop.f32.mrb[0].mxu0
  %v2327 = vadd.f32 %v73, %v2326
  %v2328 = vpop.f32.mrb[0].mxu0
  %v2329 = vadd.f32 %v77, %v2328
  %2330 = vmatprep.mubr.bf16.mxu0 0
  %2331 = vmatmul.mubr.bf16.gmra.mrb[0].mxu0 %v2234
  %v2332 = vpop.f32.mrb[0].mxu0
  %v2333 = vadd.f32 %v73, %v2332
  %v2334 = vpop.f32.mrb[0].mxu0
  %v2335 = vadd.f32 %v77, %v2334
  %v2336 = vpop.f32.mrb[0].mxu0
  %v2337 = vadd.f32 %v73, %v2336
  %v2338 = vpop.f32.mrb[0].mxu0
  %v2339 = vadd.f32 %v77, %v2338
  %2340 = vmatprep.mubr.bf16.mxu0 0
  %2341 = vmatmul.mubr.bf16.gmra.mrb[0].mxu0 %v2237
  %v2342 = vpop.f32.mrb[0].mxu0
  %v2343 = vadd.f32 %v73, %v2342
  %v2344 = vpop.f32.mrb[0].mxu0
  %v2345 = vadd.f32 %v77, %v2344
  %v2346 = vpop.f32.mrb[0].mxu0
  %v2347 = vadd.f32 %v73, %v2346
  %v2348 = vpop.f32.mrb[0].mxu0
  %v2349 = vadd.f32 %v77, %v2348
  %2350 = vmatprep.mubr.bf16.mxu0 0
  %2351 = vmatmul.mubr.bf16.gmra.mrb[0].mxu0 %v2240
  %v2352 = vpop.f32.mrb[0].mxu0
  %v2353 = vadd.f32 %v73, %v2352
  %v2354 = vpop.f32.mrb[0].mxu0
  %v2355 = vadd.f32 %v77, %v2354
  %v2356 = vpop.f32.mrb[0].mxu0
  %v2357 = vadd.f32 %v73, %v2356
  %v2358 = vpop.f32.mrb[0].mxu0
  %v2359 = vadd.f32 %v77, %v2358
  %2360 = vdwg.mxu0
  %vm2361 = vcmp.gt.f32.partialorder %v2283, 0.0
  %vm2362 = vcmp.gt.f32.partialorder %v2285, 0.0
  %vm2363 = vcmp.gt.f32.partialorder %v2287, 0.0
  %vm2364 = vcmp.gt.f32.partialorder %v2289, 0.0
  %vm2365 = vcmp.gt.f32.partialorder %v2293, 0.0
  %vm2366 = vcmp.gt.f32.partialorder %v2295, 0.0
  %vm2367 = vcmp.gt.f32.partialorder %v2297, 0.0
  %vm2368 = vcmp.gt.f32.partialorder %v2299, 0.0
  %vm2369 = vcmp.gt.f32.partialorder %v2303, 0.0
  %vm2370 = vcmp.gt.f32.partialorder %v2305, 0.0
  %vm2371 = vcmp.gt.f32.partialorder %v2307, 0.0
  %vm2372 = vcmp.gt.f32.partialorder %v2309, 0.0
  %vm2373 = vcmp.gt.f32.partialorder %v2313, 0.0
  %vm2374 = vcmp.gt.f32.partialorder %v2315, 0.0
  %vm2375 = vcmp.gt.f32.partialorder %v2317, 0.0
  %vm2376 = vcmp.gt.f32.partialorder %v2319, 0.0
  %vm2377 = vcmp.gt.f32.partialorder %v2323, 0.0
  %vm2378 = vcmp.gt.f32.partialorder %v2325, 0.0
  %vm2379 = vcmp.gt.f32.partialorder %v2327, 0.0
  %vm2380 = vcmp.gt.f32.partialorder %v2329, 0.0
  %vm2381 = vcmp.gt.f32.partialorder %v2333, 0.0
  %vm2382 = vcmp.gt.f32.partialorder %v2335, 0.0
  %vm2383 = vcmp.gt.f32.partialorder %v2337, 0.0
  %vm2384 = vcmp.gt.f32.partialorder %v2339, 0.0
  %vm2385 = vcmp.gt.f32.partialorder %v2343, 0.0
  %vm2386 = vcmp.gt.f32.partialorder %v2345, 0.0
  %vm2387 = vcmp.gt.f32.partialorder %v2347, 0.0
  %vm2388 = vcmp.gt.f32.partialorder %v2349, 0.0
  %vm2389 = vcmp.gt.f32.partialorder %v2353, 0.0
  %vm2390 = vcmp.gt.f32.partialorder %v2355, 0.0
  %vm2391 = vcmp.gt.f32.partialorder %v2357, 0.0
  %vm2392 = vcmp.gt.f32.partialorder %v2359, 0.0
  %v2393 = vmul.f32 %v2283, 0.01
  %v2394 = vmul.f32 %v2285, 0.01
  %v2395 = vmul.f32 %v2287, 0.01
  %v2396 = vmul.f32 %v2289, 0.01
  %v2397 = vmul.f32 %v2293, 0.01
  %v2398 = vmul.f32 %v2295, 0.01
  %v2399 = vmul.f32 %v2297, 0.01
  %v2400 = vmul.f32 %v2299, 0.01
  %v2401 = vmul.f32 %v2303, 0.01
  %v2402 = vmul.f32 %v2305, 0.01
  %v2403 = vmul.f32 %v2307, 0.01
  %v2404 = vmul.f32 %v2309, 0.01
  %v2405 = vmul.f32 %v2313, 0.01
  %v2406 = vmul.f32 %v2315, 0.01
  %v2407 = vmul.f32 %v2317, 0.01
  %v2408 = vmul.f32 %v2319, 0.01
  %v2409 = vmul.f32 %v2323, 0.01
  %v2410 = vmul.f32 %v2325, 0.01
  %v2411 = vmul.f32 %v2327, 0.01
  %v2412 = vmul.f32 %v2329, 0.01
  %v2413 = vmul.f32 %v2333, 0.01
  %v2414 = vmul.f32 %v2335, 0.01
  %v2415 = vmul.f32 %v2337, 0.01
  %v2416 = vmul.f32 %v2339, 0.01
  %v2417 = vmul.f32 %v2343, 0.01
  %v2418 = vmul.f32 %v2345, 0.01
  %v2419 = vmul.f32 %v2347, 0.01
  %v2420 = vmul.f32 %v2349, 0.01
  %v2421 = vmul.f32 %v2353, 0.01
  %v2422 = vmul.f32 %v2355, 0.01
  %v2423 = vmul.f32 %v2357, 0.01
  %v2424 = vmul.f32 %v2359, 0.01
  %v2425 = vsel %vm2361, %v2283, %v2393
  %v2426 = vsel %vm2362, %v2285, %v2394
  %v2427 = vsel %vm2363, %v2287, %v2395
  %v2428 = vsel %vm2364, %v2289, %v2396
  %v2429 = vsel %vm2365, %v2293, %v2397
  %v2430 = vsel %vm2366, %v2295, %v2398
  %v2431 = vsel %vm2367, %v2297, %v2399
  %v2432 = vsel %vm2368, %v2299, %v2400
  %v2433 = vsel %vm2369, %v2303, %v2401
  %v2434 = vsel %vm2370, %v2305, %v2402
  %v2435 = vsel %vm2371, %v2307, %v2403
  %v2436 = vsel %vm2372, %v2309, %v2404
  %v2437 = vsel %vm2373, %v2313, %v2405
  %v2438 = vsel %vm2374, %v2315, %v2406
  %v2439 = vsel %vm2375, %v2317, %v2407
  %v2440 = vsel %vm2376, %v2319, %v2408
  %v2441 = vsel %vm2377, %v2323, %v2409
  %v2442 = vsel %vm2378, %v2325, %v2410
  %v2443 = vsel %vm2379, %v2327, %v2411
  %v2444 = vsel %vm2380, %v2329, %v2412
  %v2445 = vsel %vm2381, %v2333, %v2413
  %v2446 = vsel %vm2382, %v2335, %v2414
  %v2447 = vsel %vm2383, %v2337, %v2415
  %v2448 = vsel %vm2384, %v2339, %v2416
  %v2449 = vsel %vm2385, %v2343, %v2417
  %v2450 = vsel %vm2386, %v2345, %v2418
  %v2451 = vsel %vm2387, %v2347, %v2419
  %v2452 = vsel %vm2388, %v2349, %v2420
  %v2453 = vsel %vm2389, %v2353, %v2421
  %v2454 = vsel %vm2390, %v2355, %v2422
  %v2455 = vsel %vm2391, %v2357, %v2423
  %v2456 = vsel %vm2392, %v2359, %v2424
  %v2457 = vpack.c.bf16 %v2427, %v2425
  %v2458 = vpack.c.bf16 %v2428, %v2426
  %v2459 = vpack.c.bf16 %v2431, %v2429
  %v2460 = vpack.c.bf16 %v2432, %v2430
  %v2461 = vpack.c.bf16 %v2435, %v2433
  %v2462 = vpack.c.bf16 %v2436, %v2434
  %v2463 = vpack.c.bf16 %v2439, %v2437
  %v2464 = vpack.c.bf16 %v2440, %v2438
  %v2465 = vpack.c.bf16 %v2443, %v2441
  %v2466 = vpack.c.bf16 %v2444, %v2442
  %v2467 = vpack.c.bf16 %v2447, %v2445
  %v2468 = vpack.c.bf16 %v2448, %v2446
  %v2469 = vpack.c.bf16 %v2451, %v2449
  %v2470 = vpack.c.bf16 %v2452, %v2450
  %v2471 = vpack.c.bf16 %v2455, %v2453
  %v2472 = vpack.c.bf16 %v2456, %v2454
  %v2473 = vld [vmem:[%s3] sm:$0xff]
  %v2474 = vld [vmem:[%s3 + $0x8] sm:$0xff]
  %v2475 = vld [vmem:[%s3 + $0x10] sm:$0xff]
  %v2476 = vld [vmem:[%s3 + $0x18] sm:$0xff]
  %v2477 = vld [vmem:[%s3 + $0x20] sm:$0xff]
  %v2478 = vld [vmem:[%s3 + $0x28] sm:$0xff]
  %v2479 = vld [vmem:[%s3 + $0x30] sm:$0xff]
  %v2480 = vld [vmem:[%s3 + $0x38] sm:$0xff]
  %v2481 = vld [vmem:[%s3 + $0x40] sm:$0xff]
  %v2482 = vld [vmem:[%s3 + $0x48] sm:$0xff]
  %v2483 = vld [vmem:[%s3 + $0x50] sm:$0xff]
  %v2484 = vld [vmem:[%s3 + $0x58] sm:$0xff]
  %v2485 = vld [vmem:[%s3 + $0x60] sm:$0xff]
  %v2486 = vld [vmem:[%s3 + $0x68] sm:$0xff]
  %v2487 = vld [vmem:[%s3 + $0x70] sm:$0xff]
  %v2488 = vld [vmem:[%s3 + $0x78] sm:$0xff]
  %v2489 = vld [vmem:[%s3 + $0x80] sm:$0xff]
  %v2490 = vld [vmem:[%s3 + $0x88] sm:$0xff]
  %v2491 = vld [vmem:[%s3 + $0x90] sm:$0xff]
  %v2492 = vld [vmem:[%s3 + $0x98] sm:$0xff]
  %v2493 = vld [vmem:[%s3 + $0xa0] sm:$0xff]
  %v2494 = vld [vmem:[%s3 + $0xa8] sm:$0xff]
  %v2495 = vld [vmem:[%s3 + $0xb0] sm:$0xff]
  %v2496 = vld [vmem:[%s3 + $0xb8] sm:$0xff]
  %v2497 = vld [vmem:[%s3 + $0xc0] sm:$0xff]
  %v2498 = vld [vmem:[%s3 + $0xc8] sm:$0xff]
  %v2499 = vld [vmem:[%s3 + $0xd0] sm:$0xff]
  %v2500 = vld [vmem:[%s3 + $0xd8] sm:$0xff]
  %v2501 = vld [vmem:[%s3 + $0xe0] sm:$0xff]
  %v2502 = vld [vmem:[%s3 + $0xe8] sm:$0xff]
  %v2503 = vld [vmem:[%s3 + $0xf0] sm:$0xff]
  %v2504 = vld [vmem:[%s3 + $0xf8] sm:$0xff]
  %v2537 = vunpack.c.l.b16 %v2473
  %v2538 = vunpack.c.h.b16 %v2473
  %v2539 = vunpack.c.l.b16 %v2474
  %v2540 = vunpack.c.h.b16 %v2474
  %v2541 = vunpack.c.l.b16 %v2475
  %v2542 = vunpack.c.h.b16 %v2475
  %v2543 = vunpack.c.l.b16 %v2476
  %v2544 = vunpack.c.h.b16 %v2476
  %v2545 = vunpack.c.l.b16 %v2477
  %v2546 = vunpack.c.h.b16 %v2477
  %v2547 = vunpack.c.l.b16 %v2478
  %v2548 = vunpack.c.h.b16 %v2478
  %v2549 = vunpack.c.l.b16 %v2479
  %v2550 = vunpack.c.h.b16 %v2479
  %v2551 = vunpack.c.l.b16 %v2480
  %v2552 = vunpack.c.h.b16 %v2480
  %v2553 = vunpack.c.l.b16 %v2481
  %v2554 = vunpack.c.h.b16 %v2481
  %v2555 = vunpack.c.l.b16 %v2482
  %v2556 = vunpack.c.h.b16 %v2482
  %v2557 = vunpack.c.l.b16 %v2483
  %v2558 = vunpack.c.h.b16 %v2483
  %v2559 = vunpack.c.l.b16 %v2484
  %v2560 = vunpack.c.h.b16 %v2484
  %v2561 = vunpack.c.l.b16 %v2485
  %v2562 = vunpack.c.h.b16 %v2485
  %v2563 = vunpack.c.l.b16 %v2486
  %v2564 = vunpack.c.h.b16 %v2486
  %v2565 = vunpack.c.l.b16 %v2487
  %v2566 = vunpack.c.h.b16 %v2487
  %v2567 = vunpack.c.l.b16 %v2488
  %v2568 = vunpack.c.h.b16 %v2488
  %v2569 = vunpack.c.l.b16 %v2489
  %v2570 = vunpack.c.h.b16 %v2489
  %v2571 = vunpack.c.l.b16 %v2490
  %v2572 = vunpack.c.h.b16 %v2490
  %v2573 = vunpack.c.l.b16 %v2491
  %v2574 = vunpack.c.h.b16 %v2491
  %v2575 = vunpack.c.l.b16 %v2492
  %v2576 = vunpack.c.h.b16 %v2492
  %v2577 = vunpack.c.l.b16 %v2493
  %v2578 = vunpack.c.h.b16 %v2493
  %v2579 = vunpack.c.l.b16 %v2494
  %v2580 = vunpack.c.h.b16 %v2494
  %v2581 = vunpack.c.l.b16 %v2495
  %v2582 = vunpack.c.h.b16 %v2495
  %v2583 = vunpack.c.l.b16 %v2496
  %v2584 = vunpack.c.h.b16 %v2496
  %v2585 = vunpack.c.l.b16 %v2497
  %v2586 = vunpack.c.h.b16 %v2497
  %v2587 = vunpack.c.l.b16 %v2498
  %v2588 = vunpack.c.h.b16 %v2498
  %v2589 = vunpack.c.l.b16 %v2499
  %v2590 = vunpack.c.h.b16 %v2499
  %v2591 = vunpack.c.l.b16 %v2500
  %v2592 = vunpack.c.h.b16 %v2500
  %v2593 = vunpack.c.l.b16 %v2501
  %v2594 = vunpack.c.h.b16 %v2501
  %v2595 = vunpack.c.l.b16 %v2502
  %v2596 = vunpack.c.h.b16 %v2502
  %v2597 = vunpack.c.l.b16 %v2503
  %v2598 = vunpack.c.h.b16 %v2503
  %v2599 = vunpack.c.l.b16 %v2504
  %v2600 = vunpack.c.h.b16 %v2504
  %v2601 = vpack.c.b16 %v2539, %v2537
  %v2602 = vpack.c.b16 %v2540, %v2538
  %v2603 = vpack.c.b16 %v2543, %v2541
  %v2604 = vpack.c.b16 %v2544, %v2542
  %v2605 = vpack.c.b16 %v2547, %v2545
  %v2606 = vpack.c.b16 %v2548, %v2546
  %v2607 = vpack.c.b16 %v2551, %v2549
  %v2608 = vpack.c.b16 %v2552, %v2550
  %v2609 = vpack.c.b16 %v2555, %v2553
  %v2610 = vpack.c.b16 %v2556, %v2554
  %v2611 = vpack.c.b16 %v2559, %v2557
  %v2612 = vpack.c.b16 %v2560, %v2558
  %v2613 = vpack.c.b16 %v2563, %v2561
  %v2614 = vpack.c.b16 %v2564, %v2562
  %v2615 = vpack.c.b16 %v2567, %v2565
  %v2616 = vpack.c.b16 %v2568, %v2566
  %v2617 = vpack.c.b16 %v2571, %v2569
  %v2618 = vpack.c.b16 %v2572, %v2570
  %v2619 = vpack.c.b16 %v2575, %v2573
  %v2620 = vpack.c.b16 %v2576, %v2574
  %v2621 = vpack.c.b16 %v2579, %v2577
  %v2622 = vpack.c.b16 %v2580, %v2578
  %v2623 = vpack.c.b16 %v2583, %v2581
  %v2624 = vpack.c.b16 %v2584, %v2582
  %v2625 = vpack.c.b16 %v2587, %v2585
  %v2626 = vpack.c.b16 %v2588, %v2586
  %v2627 = vpack.c.b16 %v2591, %v2589
  %v2628 = vpack.c.b16 %v2592, %v2590
  %v2629 = vpack.c.b16 %v2595, %v2593
  %v2630 = vpack.c.b16 %v2596, %v2594
  %v2631 = vpack.c.b16 %v2599, %v2597
  %v2632 = vpack.c.b16 %v2600, %v2598
  %2665 = vmatprep.subr.bf16.mxu0 %v2602
  %2666 = vmatpush1.bf16.msra.mxu0 %v2601
  %2667 = vmatprep.subr.bf16.mxu0 %v2604
  %2668 = vmatpush1.bf16.msra.mxu0 %v2603
  %2669 = vmatprep.subr.bf16.mxu0 %v2606
  %2670 = vmatpush1.bf16.msra.mxu0 %v2605
  %2671 = vmatprep.subr.bf16.mxu0 %v2608
  %2672 = vmatpush1.bf16.msra.mxu0 %v2607
  %2673 = vmatprep.subr.bf16.mxu0 %v2610
  %2674 = vmatpush1.bf16.msra.mxu0 %v2609
  %2675 = vmatprep.subr.bf16.mxu0 %v2612
  %2676 = vmatpush1.bf16.msra.mxu0 %v2611
  %2677 = vmatprep.subr.bf16.mxu0 %v2614
  %2678 = vmatpush1.bf16.msra.mxu0 %v2613
  %2679 = vmatprep.subr.bf16.mxu0 %v2616
  %2680 = vmatpush1.bf16.msra.mxu0 %v2615
  %2681 = vmatprep.subr.bf16.mxu0 %v2618
  %2682 = vmatpush1.bf16.msra.mxu0 %v2617
  %2683 = vmatprep.subr.bf16.mxu0 %v2620
  %2684 = vmatpush1.bf16.msra.mxu0 %v2619
  %2685 = vmatprep.subr.bf16.mxu0 %v2622
  %2686 = vmatpush1.bf16.msra.mxu0 %v2621
  %2687 = vmatprep.subr.bf16.mxu0 %v2624
  %2688 = vmatpush1.bf16.msra.mxu0 %v2623
  %2689 = vmatprep.subr.bf16.mxu0 %v2626
  %2690 = vmatpush1.bf16.msra.mxu0 %v2625
  %2691 = vmatprep.subr.bf16.mxu0 %v2628
  %2692 = vmatpush1.bf16.msra.mxu0 %v2627
  %2693 = vmatprep.subr.bf16.mxu0 %v2630
  %2694 = vmatpush1.bf16.msra.mxu0 %v2629
  %2695 = vmatprep.subr.bf16.mxu0 %v2632
  %2696 = vmatpush1.bf16.msra.mxu0 %v2631
  %2697 = vmatprep.mubr.bf16.mxu0 %v2458
  %2698 = vmatmul.mubr.bf16.gmra.mrb[0].mxu0 %v2457
  %v2699 = vpop.f32.mrb[0].mxu0
  %v2700 = vadd.f32 %v421, %v2699
  %v2701 = vpop.f32.mrb[0].mxu0
  %v2702 = vadd.f32 %v425, %v2701
  %v2703 = vpop.f32.mrb[0].mxu0
  %v2704 = vadd.f32 %v421, %v2703
  %v2705 = vpop.f32.mrb[0].mxu0
  %v2706 = vadd.f32 %v425, %v2705
  %2707 = vmatprep.mubr.bf16.mxu0 %v2460
  %2708 = vmatmul.mubr.bf16.gmra.mrb[0].mxu0 %v2459
  %v2709 = vpop.f32.mrb[0].mxu0
  %v2710 = vadd.f32 %v421, %v2709
  %v2711 = vpop.f32.mrb[0].mxu0
  %v2712 = vadd.f32 %v425, %v2711
  %v2713 = vpop.f32.mrb[0].mxu0
  %v2714 = vadd.f32 %v421, %v2713
  %v2715 = vpop.f32.mrb[0].mxu0
  %v2716 = vadd.f32 %v425, %v2715
  %2717 = vmatprep.mubr.bf16.mxu0 %v2462
  %2718 = vmatmul.mubr.bf16.gmra.mrb[0].mxu0 %v2461
  %v2719 = vpop.f32.mrb[0].mxu0
  %v2720 = vadd.f32 %v421, %v2719
  %v2721 = vpop.f32.mrb[0].mxu0
  %v2722 = vadd.f32 %v425, %v2721
  %v2723 = vpop.f32.mrb[0].mxu0
  %v2724 = vadd.f32 %v421, %v2723
  %v2725 = vpop.f32.mrb[0].mxu0
  %v2726 = vadd.f32 %v425, %v2725
  %2727 = vmatprep.mubr.bf16.mxu0 %v2464
  %2728 = vmatmul.mubr.bf16.gmra.mrb[0].mxu0 %v2463
  %v2729 = vpop.f32.mrb[0].mxu0
  %v2730 = vadd.f32 %v421, %v2729
  %v2731 = vpop.f32.mrb[0].mxu0
  %v2732 = vadd.f32 %v425, %v2731
  %v2733 = vpop.f32.mrb[0].mxu0
  %v2734 = vadd.f32 %v421, %v2733
  %v2735 = vpop.f32.mrb[0].mxu0
  %v2736 = vadd.f32 %v425, %v2735
  %2737 = vmatprep.mubr.bf16.mxu0 %v2466
  %2738 = vmatmul.mubr.bf16.gmra.mrb[0].mxu0 %v2465
  %v2739 = vpop.f32.mrb[0].mxu0
  %v2740 = vadd.f32 %v421, %v2739
  %v2741 = vpop.f32.mrb[0].mxu0
  %v2742 = vadd.f32 %v425, %v2741
  %v2743 = vpop.f32.mrb[0].mxu0
  %v2744 = vadd.f32 %v421, %v2743
  %v2745 = vpop.f32.mrb[0].mxu0
  %v2746 = vadd.f32 %v425, %v2745
  %2747 = vmatprep.mubr.bf16.mxu0 %v2468
  %2748 = vmatmul.mubr.bf16.gmra.mrb[0].mxu0 %v2467
  %v2749 = vpop.f32.mrb[0].mxu0
  %v2750 = vadd.f32 %v421, %v2749
  %v2751 = vpop.f32.mrb[0].mxu0
  %v2752 = vadd.f32 %v425, %v2751
  %v2753 = vpop.f32.mrb[0].mxu0
  %v2754 = vadd.f32 %v421, %v2753
  %v2755 = vpop.f32.mrb[0].mxu0
  %v2756 = vadd.f32 %v425, %v2755
  %2757 = vmatprep.mubr.bf16.mxu0 %v2470
  %2758 = vmatmul.mubr.bf16.gmra.mrb[0].mxu0 %v2469
  %v2759 = vpop.f32.mrb[0].mxu0
  %v2760 = vadd.f32 %v421, %v2759
  %v2761 = vpop.f32.mrb[0].mxu0
  %v2762 = vadd.f32 %v425, %v2761
  %v2763 = vpop.f32.mrb[0].mxu0
  %v2764 = vadd.f32 %v421, %v2763
  %v2765 = vpop.f32.mrb[0].mxu0
  %v2766 = vadd.f32 %v425, %v2765
  %2767 = vmatprep.mubr.bf16.mxu0 %v2472
  %2768 = vmatmul.mubr.bf16.gmra.mrb[0].mxu0 %v2471
  %v2769 = vpop.f32.mrb[0].mxu0
  %v2770 = vadd.f32 %v421, %v2769
  %v2771 = vpop.f32.mrb[0].mxu0
  %v2772 = vadd.f32 %v425, %v2771
  %v2773 = vpop.f32.mrb[0].mxu0
  %v2774 = vadd.f32 %v421, %v2773
  %v2775 = vpop.f32.mrb[0].mxu0
  %v2776 = vadd.f32 %v425, %v2775
  %2777 = vdwg.mxu0
  %vm2778 = vcmp.gt.f32.partialorder %v2700, 0.0
  %vm2779 = vcmp.gt.f32.partialorder %v2702, 0.0
  %vm2780 = vcmp.gt.f32.partialorder %v2704, 0.0
  %vm2781 = vcmp.gt.f32.partialorder %v2706, 0.0
  %vm2782 = vcmp.gt.f32.partialorder %v2710, 0.0
  %vm2783 = vcmp.gt.f32.partialorder %v2712, 0.0
  %vm2784 = vcmp.gt.f32.partialorder %v2714, 0.0
  %vm2785 = vcmp.gt.f32.partialorder %v2716, 0.0
  %vm2786 = vcmp.gt.f32.partialorder %v2720, 0.0
  %vm2787 = vcmp.gt.f32.partialorder %v2722, 0.0
  %vm2788 = vcmp.gt.f32.partialorder %v2724, 0.0
  %vm2789 = vcmp.gt.f32.partialorder %v2726, 0.0
  %vm2790 = vcmp.gt.f32.partialorder %v2730, 0.0
  %vm2791 = vcmp.gt.f32.partialorder %v2732, 0.0
  %vm2792 = vcmp.gt.f32.partialorder %v2734, 0.0
  %vm2793 = vcmp.gt.f32.partialorder %v2736, 0.0
  %vm2794 = vcmp.gt.f32.partialorder %v2740, 0.0
  %vm2795 = vcmp.gt.f32.partialorder %v2742, 0.0
  %vm2796 = vcmp.gt.f32.partialorder %v2744, 0.0
  %vm2797 = vcmp.gt.f32.partialorder %v2746, 0.0
  %vm2798 = vcmp.gt.f32.partialorder %v2750, 0.0
  %vm2799 = vcmp.gt.f32.partialorder %v2752, 0.0
  %vm2800 = vcmp.gt.f32.partialorder %v2754, 0.0
  %vm2801 = vcmp.gt.f32.partialorder %v2756, 0.0
  %vm2802 = vcmp.gt.f32.partialorder %v2760, 0.0
  %vm2803 = vcmp.gt.f32.partialorder %v2762, 0.0
  %vm2804 = vcmp.gt.f32.partialorder %v2764, 0.0
  %vm2805 = vcmp.gt.f32.partialorder %v2766, 0.0
  %vm2806 = vcmp.gt.f32.partialorder %v2770, 0.0
  %vm2807 = vcmp.gt.f32.partialorder %v2772, 0.0
  %vm2808 = vcmp.gt.f32.partialorder %v2774, 0.0
  %vm2809 = vcmp.gt.f32.partialorder %v2776, 0.0
  %v2810 = vmul.f32 %v2700, 0.01
  %v2811 = vmul.f32 %v2702, 0.01
  %v2812 = vmul.f32 %v2704, 0.01
  %v2813 = vmul.f32 %v2706, 0.01
  %v2814 = vmul.f32 %v2710, 0.01
  %v2815 = vmul.f32 %v2712, 0.01
  %v2816 = vmul.f32 %v2714, 0.01
  %v2817 = vmul.f32 %v2716, 0.01
  %v2818 = vmul.f32 %v2720, 0.01
  %v2819 = vmul.f32 %v2722, 0.01
  %v2820 = vmul.f32 %v2724, 0.01
  %v2821 = vmul.f32 %v2726, 0.01
  %v2822 = vmul.f32 %v2730, 0.01
  %v2823 = vmul.f32 %v2732, 0.01
  %v2824 = vmul.f32 %v2734, 0.01
  %v2825 = vmul.f32 %v2736, 0.01
  %v2826 = vmul.f32 %v2740, 0.01
  %v2827 = vmul.f32 %v2742, 0.01
  %v2828 = vmul.f32 %v2744, 0.01
  %v2829 = vmul.f32 %v2746, 0.01
  %v2830 = vmul.f32 %v2750, 0.01
  %v2831 = vmul.f32 %v2752, 0.01
  %v2832 = vmul.f32 %v2754, 0.01
  %v2833 = vmul.f32 %v2756, 0.01
  %v2834 = vmul.f32 %v2760, 0.01
  %v2835 = vmul.f32 %v2762, 0.01
  %v2836 = vmul.f32 %v2764, 0.01
  %v2837 = vmul.f32 %v2766, 0.01
  %v2838 = vmul.f32 %v2770, 0.01
  %v2839 = vmul.f32 %v2772, 0.01
  %v2840 = vmul.f32 %v2774, 0.01
  %v2841 = vmul.f32 %v2776, 0.01
  %v2842 = vsel %vm2778, %v2700, %v2810
  %v2843 = vsel %vm2779, %v2702, %v2811
  %v2844 = vsel %vm2780, %v2704, %v2812
  %v2845 = vsel %vm2781, %v2706, %v2813
  %v2846 = vsel %vm2782, %v2710, %v2814
  %v2847 = vsel %vm2783, %v2712, %v2815
  %v2848 = vsel %vm2784, %v2714, %v2816
  %v2849 = vsel %vm2785, %v2716, %v2817
  %v2850 = vsel %vm2786, %v2720, %v2818
  %v2851 = vsel %vm2787, %v2722, %v2819
  %v2852 = vsel %vm2788, %v2724, %v2820
  %v2853 = vsel %vm2789, %v2726, %v2821
  %v2854 = vsel %vm2790, %v2730, %v2822
  %v2855 = vsel %vm2791, %v2732, %v2823
  %v2856 = vsel %vm2792, %v2734, %v2824
  %v2857 = vsel %vm2793, %v2736, %v2825
  %v2858 = vsel %vm2794, %v2740, %v2826
  %v2859 = vsel %vm2795, %v2742, %v2827
  %v2860 = vsel %vm2796, %v2744, %v2828
  %v2861 = vsel %vm2797, %v2746, %v2829
  %v2862 = vsel %vm2798, %v2750, %v2830
  %v2863 = vsel %vm2799, %v2752, %v2831
  %v2864 = vsel %vm2800, %v2754, %v2832
  %v2865 = vsel %vm2801, %v2756, %v2833
  %v2866 = vsel %vm2802, %v2760, %v2834
  %v2867 = vsel %vm2803, %v2762, %v2835
  %v2868 = vsel %vm2804, %v2764, %v2836
  %v2869 = vsel %vm2805, %v2766, %v2837
  %v2870 = vsel %vm2806, %v2770, %v2838
  %v2871 = vsel %vm2807, %v2772, %v2839
  %v2872 = vsel %vm2808, %v2774, %v2840
  %v2873 = vsel %vm2809, %v2776, %v2841
  %v2874 = vpack.c.bf16 %v2844, %v2842
  %v2875 = vpack.c.bf16 %v2845, %v2843
  %v2876 = vpack.c.bf16 %v2848, %v2846
  %v2877 = vpack.c.bf16 %v2849, %v2847
  %v2878 = vpack.c.bf16 %v2852, %v2850
  %v2879 = vpack.c.bf16 %v2853, %v2851
  %v2880 = vpack.c.bf16 %v2856, %v2854
  %v2881 = vpack.c.bf16 %v2857, %v2855
  %v2882 = vpack.c.bf16 %v2860, %v2858
  %v2883 = vpack.c.bf16 %v2861, %v2859
  %v2884 = vpack.c.bf16 %v2864, %v2862
  %v2885 = vpack.c.bf16 %v2865, %v2863
  %v2886 = vpack.c.bf16 %v2868, %v2866
  %v2887 = vpack.c.bf16 %v2869, %v2867
  %v2888 = vpack.c.bf16 %v2872, %v2870
  %v2889 = vpack.c.bf16 %v2873, %v2871
  %v2890 = vld [vmem:[%s5] sm:$0xff]
  %v2891 = vld [vmem:[%s5 + $0x8] sm:$0xff]
  %v2892 = vld [vmem:[%s5 + $0x10] sm:$0xff]
  %v2893 = vld [vmem:[%s5 + $0x18] sm:$0xff]
  %v2894 = vld [vmem:[%s5 + $0x20] sm:$0xff]
  %v2895 = vld [vmem:[%s5 + $0x28] sm:$0xff]
  %v2896 = vld [vmem:[%s5 + $0x30] sm:$0xff]
  %v2897 = vld [vmem:[%s5 + $0x38] sm:$0xff]
  %v2898 = vld [vmem:[%s5 + $0x40] sm:$0xff]
  %v2899 = vld [vmem:[%s5 + $0x48] sm:$0xff]
  %v2900 = vld [vmem:[%s5 + $0x50] sm:$0xff]
  %v2901 = vld [vmem:[%s5 + $0x58] sm:$0xff]
  %v2902 = vld [vmem:[%s5 + $0x60] sm:$0xff]
  %v2903 = vld [vmem:[%s5 + $0x68] sm:$0xff]
  %v2904 = vld [vmem:[%s5 + $0x70] sm:$0xff]
  %v2905 = vld [vmem:[%s5 + $0x78] sm:$0xff]
  %v2906 = vld [vmem:[%s5 + $0x80] sm:$0xff]
  %v2907 = vld [vmem:[%s5 + $0x88] sm:$0xff]
  %v2908 = vld [vmem:[%s5 + $0x90] sm:$0xff]
  %v2909 = vld [vmem:[%s5 + $0x98] sm:$0xff]
  %v2910 = vld [vmem:[%s5 + $0xa0] sm:$0xff]
  %v2911 = vld [vmem:[%s5 + $0xa8] sm:$0xff]
  %v2912 = vld [vmem:[%s5 + $0xb0] sm:$0xff]
  %v2913 = vld [vmem:[%s5 + $0xb8] sm:$0xff]
  %v2914 = vld [vmem:[%s5 + $0xc0] sm:$0xff]
  %v2915 = vld [vmem:[%s5 + $0xc8] sm:$0xff]
  %v2916 = vld [vmem:[%s5 + $0xd0] sm:$0xff]
  %v2917 = vld [vmem:[%s5 + $0xd8] sm:$0xff]
  %v2918 = vld [vmem:[%s5 + $0xe0] sm:$0xff]
  %v2919 = vld [vmem:[%s5 + $0xe8] sm:$0xff]
  %v2920 = vld [vmem:[%s5 + $0xf0] sm:$0xff]
  %v2921 = vld [vmem:[%s5 + $0xf8] sm:$0xff]
  %v2954 = vunpack.c.l.b16 %v2890
  %v2955 = vunpack.c.h.b16 %v2890
  %v2956 = vunpack.c.l.b16 %v2891
  %v2957 = vunpack.c.h.b16 %v2891
  %v2958 = vunpack.c.l.b16 %v2892
  %v2959 = vunpack.c.h.b16 %v2892
  %v2960 = vunpack.c.l.b16 %v2893
  %v2961 = vunpack.c.h.b16 %v2893
  %v2962 = vunpack.c.l.b16 %v2894
  %v2963 = vunpack.c.h.b16 %v2894
  %v2964 = vunpack.c.l.b16 %v2895
  %v2965 = vunpack.c.h.b16 %v2895
  %v2966 = vunpack.c.l.b16 %v2896
  %v2967 = vunpack.c.h.b16 %v2896
  %v2968 = vunpack.c.l.b16 %v2897
  %v2969 = vunpack.c.h.b16 %v2897
  %v2970 = vunpack.c.l.b16 %v2898
  %v2971 = vunpack.c.h.b16 %v2898
  %v2972 = vunpack.c.l.b16 %v2899
  %v2973 = vunpack.c.h.b16 %v2899
  %v2974 = vunpack.c.l.b16 %v2900
  %v2975 = vunpack.c.h.b16 %v2900
  %v2976 = vunpack.c.l.b16 %v2901
  %v2977 = vunpack.c.h.b16 %v2901
  %v2978 = vunpack.c.l.b16 %v2902
  %v2979 = vunpack.c.h.b16 %v2902
  %v2980 = vunpack.c.l.b16 %v2903
  %v2981 = vunpack.c.h.b16 %v2903
  %v2982 = vunpack.c.l.b16 %v2904
  %v2983 = vunpack.c.h.b16 %v2904
  %v2984 = vunpack.c.l.b16 %v2905
  %v2985 = vunpack.c.h.b16 %v2905
  %v2986 = vunpack.c.l.b16 %v2906
  %v2987 = vunpack.c.h.b16 %v2906
  %v2988 = vunpack.c.l.b16 %v2907
  %v2989 = vunpack.c.h.b16 %v2907
  %v2990 = vunpack.c.l.b16 %v2908
  %v2991 = vunpack.c.h.b16 %v2908
  %v2992 = vunpack.c.l.b16 %v2909
  %v2993 = vunpack.c.h.b16 %v2909
  %v2994 = vunpack.c.l.b16 %v2910
  %v2995 = vunpack.c.h.b16 %v2910
  %v2996 = vunpack.c.l.b16 %v2911
  %v2997 = vunpack.c.h.b16 %v2911
  %v2998 = vunpack.c.l.b16 %v2912
  %v2999 = vunpack.c.h.b16 %v2912
  %v3000 = vunpack.c.l.b16 %v2913
  %v3001 = vunpack.c.h.b16 %v2913
  %v3002 = vunpack.c.l.b16 %v2914
  %v3003 = vunpack.c.h.b16 %v2914
  %v3004 = vunpack.c.l.b16 %v2915
  %v3005 = vunpack.c.h.b16 %v2915
  %v3006 = vunpack.c.l.b16 %v2916
  %v3007 = vunpack.c.h.b16 %v2916
  %v3008 = vunpack.c.l.b16 %v2917
  %v3009 = vunpack.c.h.b16 %v2917
  %v3010 = vunpack.c.l.b16 %v2918
  %v3011 = vunpack.c.h.b16 %v2918
  %v3012 = vunpack.c.l.b16 %v2919
  %v3013 = vunpack.c.h.b16 %v2919
  %v3014 = vunpack.c.l.b16 %v2920
  %v3015 = vunpack.c.h.b16 %v2920
  %v3016 = vunpack.c.l.b16 %v2921
  %v3017 = vunpack.c.h.b16 %v2921
  %v3018 = vpack.c.b16 %v2956, %v2954
  %v3019 = vpack.c.b16 %v2957, %v2955
  %v3020 = vpack.c.b16 %v2960, %v2958
  %v3021 = vpack.c.b16 %v2961, %v2959
  %v3022 = vpack.c.b16 %v2964, %v2962
  %v3023 = vpack.c.b16 %v2965, %v2963
  %v3024 = vpack.c.b16 %v2968, %v2966
  %v3025 = vpack.c.b16 %v2969, %v2967
  %v3026 = vpack.c.b16 %v2972, %v2970
  %v3027 = vpack.c.b16 %v2973, %v2971
  %v3028 = vpack.c.b16 %v2976, %v2974
  %v3029 = vpack.c.b16 %v2977, %v2975
  %v3030 = vpack.c.b16 %v2980, %v2978
  %v3031 = vpack.c.b16 %v2981, %v2979
  %v3032 = vpack.c.b16 %v2984, %v2982
  %v3033 = vpack.c.b16 %v2985, %v2983
  %v3034 = vpack.c.b16 %v2988, %v2986
  %v3035 = vpack.c.b16 %v2989, %v2987
  %v3036 = vpack.c.b16 %v2992, %v2990
  %v3037 = vpack.c.b16 %v2993, %v2991
  %v3038 = vpack.c.b16 %v2996, %v2994
  %v3039 = vpack.c.b16 %v2997, %v2995
  %v3040 = vpack.c.b16 %v3000, %v2998
  %v3041 = vpack.c.b16 %v3001, %v2999
  %v3042 = vpack.c.b16 %v3004, %v3002
  %v3043 = vpack.c.b16 %v3005, %v3003
  %v3044 = vpack.c.b16 %v3008, %v3006
  %v3045 = vpack.c.b16 %v3009, %v3007
  %v3046 = vpack.c.b16 %v3012, %v3010
  %v3047 = vpack.c.b16 %v3013, %v3011
  %v3048 = vpack.c.b16 %v3016, %v3014
  %v3049 = vpack.c.b16 %v3017, %v3015
  %3082 = vmatprep.subr.bf16.mxu0 %v3019
  %3083 = vmatpush1.bf16.msra.mxu0 %v3018
  %3084 = vmatprep.subr.bf16.mxu0 %v3021
  %3085 = vmatpush1.bf16.msra.mxu0 %v3020
  %3086 = vmatprep.subr.bf16.mxu0 %v3023
  %3087 = vmatpush1.bf16.msra.mxu0 %v3022
  %3088 = vmatprep.subr.bf16.mxu0 %v3025
  %3089 = vmatpush1.bf16.msra.mxu0 %v3024
  %3090 = vmatprep.subr.bf16.mxu0 %v3027
  %3091 = vmatpush1.bf16.msra.mxu0 %v3026
  %3092 = vmatprep.subr.bf16.mxu0 %v3029
  %3093 = vmatpush1.bf16.msra.mxu0 %v3028
  %3094 = vmatprep.subr.bf16.mxu0 %v3031
  %3095 = vmatpush1.bf16.msra.mxu0 %v3030
  %3096 = vmatprep.subr.bf16.mxu0 %v3033
  %3097 = vmatpush1.bf16.msra.mxu0 %v3032
  %3098 = vmatprep.subr.bf16.mxu0 %v3035
  %3099 = vmatpush1.bf16.msra.mxu0 %v3034
  %3100 = vmatprep.subr.bf16.mxu0 %v3037
  %3101 = vmatpush1.bf16.msra.mxu0 %v3036
  %3102 = vmatprep.subr.bf16.mxu0 %v3039
  %3103 = vmatpush1.bf16.msra.mxu0 %v3038
  %3104 = vmatprep.subr.bf16.mxu0 %v3041
  %3105 = vmatpush1.bf16.msra.mxu0 %v3040
  %3106 = vmatprep.subr.bf16.mxu0 %v3043
  %3107 = vmatpush1.bf16.msra.mxu0 %v3042
  %3108 = vmatprep.subr.bf16.mxu0 %v3045
  %3109 = vmatpush1.bf16.msra.mxu0 %v3044
  %3110 = vmatprep.subr.bf16.mxu0 %v3047
  %3111 = vmatpush1.bf16.msra.mxu0 %v3046
  %3112 = vmatprep.subr.bf16.mxu0 %v3049
  %3113 = vmatpush1.bf16.msra.mxu0 %v3048
  %3114 = vmatprep.mubr.bf16.mxu0 %v2875
  %3115 = vmatmul.mubr.bf16.gmra.mrb[0].mxu0 %v2874
  %v3116 = vpop.f32.mrb[0].mxu0
  %v3117 = vadd.f32 %v849, %v3116
  %v3118 = vpop.f32.mrb[0].mxu0
  %v3119 = vadd.f32 %v853, %v3118
  %v3120 = vpop.f32.mrb[0].mxu0
  %v3121 = vadd.f32 %v849, %v3120
  %v3122 = vpop.f32.mrb[0].mxu0
  %v3123 = vadd.f32 %v853, %v3122
  %3124 = vmatprep.mubr.bf16.mxu0 %v2877
  %3125 = vmatmul.mubr.bf16.gmra.mrb[0].mxu0 %v2876
  %v3126 = vpop.f32.mrb[0].mxu0
  %v3127 = vadd.f32 %v849, %v3126
  %v3128 = vpop.f32.mrb[0].mxu0
  %v3129 = vadd.f32 %v853, %v3128
  %v3130 = vpop.f32.mrb[0].mxu0
  %v3131 = vadd.f32 %v849, %v3130
  %v3132 = vpop.f32.mrb[0].mxu0
  %v3133 = vadd.f32 %v853, %v3132
  %3134 = vmatprep.mubr.bf16.mxu0 %v2879
  %3135 = vmatmul.mubr.bf16.gmra.mrb[0].mxu0 %v2878
  %v3136 = vpop.f32.mrb[0].mxu0
  %v3137 = vadd.f32 %v849, %v3136
  %v3138 = vpop.f32.mrb[0].mxu0
  %v3139 = vadd.f32 %v853, %v3138
  %v3140 = vpop.f32.mrb[0].mxu0
  %v3141 = vadd.f32 %v849, %v3140
  %v3142 = vpop.f32.mrb[0].mxu0
  %v3143 = vadd.f32 %v853, %v3142
  %3144 = vmatprep.mubr.bf16.mxu0 %v2881
  %3145 = vmatmul.mubr.bf16.gmra.mrb[0].mxu0 %v2880
  %v3146 = vpop.f32.mrb[0].mxu0
  %v3147 = vadd.f32 %v849, %v3146
  %v3148 = vpop.f32.mrb[0].mxu0
  %v3149 = vadd.f32 %v853, %v3148
  %v3150 = vpop.f32.mrb[0].mxu0
  %v3151 = vadd.f32 %v849, %v3150
  %v3152 = vpop.f32.mrb[0].mxu0
  %v3153 = vadd.f32 %v853, %v3152
  %3154 = vmatprep.mubr.bf16.mxu0 %v2883
  %3155 = vmatmul.mubr.bf16.gmra.mrb[0].mxu0 %v2882
  %v3156 = vpop.f32.mrb[0].mxu0
  %v3157 = vadd.f32 %v849, %v3156
  %v3158 = vpop.f32.mrb[0].mxu0
  %v3159 = vadd.f32 %v853, %v3158
  %v3160 = vpop.f32.mrb[0].mxu0
  %v3161 = vadd.f32 %v849, %v3160
  %v3162 = vpop.f32.mrb[0].mxu0
  %v3163 = vadd.f32 %v853, %v3162
  %3164 = vmatprep.mubr.bf16.mxu0 %v2885
  %3165 = vmatmul.mubr.bf16.gmra.mrb[0].mxu0 %v2884
  %v3166 = vpop.f32.mrb[0].mxu0
  %v3167 = vadd.f32 %v849, %v3166
  %v3168 = vpop.f32.mrb[0].mxu0
  %v3169 = vadd.f32 %v853, %v3168
  %v3170 = vpop.f32.mrb[0].mxu0
  %v3171 = vadd.f32 %v849, %v3170
  %v3172 = vpop.f32.mrb[0].mxu0
  %v3173 = vadd.f32 %v853, %v3172
  %3174 = vmatprep.mubr.bf16.mxu0 %v2887
  %3175 = vmatmul.mubr.bf16.gmra.mrb[0].mxu0 %v2886
  %v3176 = vpop.f32.mrb[0].mxu0
  %v3177 = vadd.f32 %v849, %v3176
  %v3178 = vpop.f32.mrb[0].mxu0
  %v3179 = vadd.f32 %v853, %v3178
  %v3180 = vpop.f32.mrb[0].mxu0
  %v3181 = vadd.f32 %v849, %v3180
  %v3182 = vpop.f32.mrb[0].mxu0
  %v3183 = vadd.f32 %v853, %v3182
  %3184 = vmatprep.mubr.bf16.mxu0 %v2889
  %3185 = vmatmul.mubr.bf16.gmra.mrb[0].mxu0 %v2888
  %v3186 = vpop.f32.mrb[0].mxu0
  %v3187 = vadd.f32 %v849, %v3186
  %v3188 = vpop.f32.mrb[0].mxu0
  %v3189 = vadd.f32 %v853, %v3188
  %v3190 = vpop.f32.mrb[0].mxu0
  %v3191 = vadd.f32 %v849, %v3190
  %v3192 = vpop.f32.mrb[0].mxu0
  %v3193 = vadd.f32 %v853, %v3192
  %3194 = vdwg.mxu0
  %vm3195 = vcmp.gt.f32.partialorder %v3117, 0.0
  %vm3196 = vcmp.gt.f32.partialorder %v3119, 0.0
  %vm3197 = vcmp.gt.f32.partialorder %v3121, 0.0
  %vm3198 = vcmp.gt.f32.partialorder %v3123, 0.0
  %vm3199 = vcmp.gt.f32.partialorder %v3127, 0.0
  %vm3200 = vcmp.gt.f32.partialorder %v3129, 0.0
  %vm3201 = vcmp.gt.f32.partialorder %v3131, 0.0
  %vm3202 = vcmp.gt.f32.partialorder %v3133, 0.0
  %vm3203 = vcmp.gt.f32.partialorder %v3137, 0.0
  %vm3204 = vcmp.gt.f32.partialorder %v3139, 0.0
  %vm3205 = vcmp.gt.f32.partialorder %v3141, 0.0
  %vm3206 = vcmp.gt.f32.partialorder %v3143, 0.0
  %vm3207 = vcmp.gt.f32.partialorder %v3147, 0.0
  %vm3208 = vcmp.gt.f32.partialorder %v3149, 0.0
  %vm3209 = vcmp.gt.f32.partialorder %v3151, 0.0
  %vm3210 = vcmp.gt.f32.partialorder %v3153, 0.0
  %vm3211 = vcmp.gt.f32.partialorder %v3157, 0.0
  %vm3212 = vcmp.gt.f32.partialorder %v3159, 0.0
  %vm3213 = vcmp.gt.f32.partialorder %v3161, 0.0
  %vm3214 = vcmp.gt.f32.partialorder %v3163, 0.0
  %vm3215 = vcmp.gt.f32.partialorder %v3167, 0.0
  %vm3216 = vcmp.gt.f32.partialorder %v3169, 0.0
  %vm3217 = vcmp.gt.f32.partialorder %v3171, 0.0
  %vm3218 = vcmp.gt.f32.partialorder %v3173, 0.0
  %vm3219 = vcmp.gt.f32.partialorder %v3177, 0.0
  %vm3220 = vcmp.gt.f32.partialorder %v3179, 0.0
  %vm3221 = vcmp.gt.f32.partialorder %v3181, 0.0
  %vm3222 = vcmp.gt.f32.partialorder %v3183, 0.0
  %vm3223 = vcmp.gt.f32.partialorder %v3187, 0.0
  %vm3224 = vcmp.gt.f32.partialorder %v3189, 0.0
  %vm3225 = vcmp.gt.f32.partialorder %v3191, 0.0
  %vm3226 = vcmp.gt.f32.partialorder %v3193, 0.0
  %v3227 = vmul.f32 %v3117, 0.01
  %v3228 = vmul.f32 %v3119, 0.01
  %v3229 = vmul.f32 %v3121, 0.01
  %v3230 = vmul.f32 %v3123, 0.01
  %v3231 = vmul.f32 %v3127, 0.01
  %v3232 = vmul.f32 %v3129, 0.01
  %v3233 = vmul.f32 %v3131, 0.01
  %v3234 = vmul.f32 %v3133, 0.01
  %v3235 = vmul.f32 %v3137, 0.01
  %v3236 = vmul.f32 %v3139, 0.01
  %v3237 = vmul.f32 %v3141, 0.01
  %v3238 = vmul.f32 %v3143, 0.01
  %v3239 = vmul.f32 %v3147, 0.01
  %v3240 = vmul.f32 %v3149, 0.01
  %v3241 = vmul.f32 %v3151, 0.01
  %v3242 = vmul.f32 %v3153, 0.01
  %v3243 = vmul.f32 %v3157, 0.01
  %v3244 = vmul.f32 %v3159, 0.01
  %v3245 = vmul.f32 %v3161, 0.01
  %v3246 = vmul.f32 %v3163, 0.01
  %v3247 = vmul.f32 %v3167, 0.01
  %v3248 = vmul.f32 %v3169, 0.01
  %v3249 = vmul.f32 %v3171, 0.01
  %v3250 = vmul.f32 %v3173, 0.01
  %v3251 = vmul.f32 %v3177, 0.01
  %v3252 = vmul.f32 %v3179, 0.01
  %v3253 = vmul.f32 %v3181, 0.01
  %v3254 = vmul.f32 %v3183, 0.01
  %v3255 = vmul.f32 %v3187, 0.01
  %v3256 = vmul.f32 %v3189, 0.01
  %v3257 = vmul.f32 %v3191, 0.01
  %v3258 = vmul.f32 %v3193, 0.01
  %v3259 = vsel %vm3195, %v3117, %v3227
  %v3260 = vsel %vm3196, %v3119, %v3228
  %v3261 = vsel %vm3197, %v3121, %v3229
  %v3262 = vsel %vm3198, %v3123, %v3230
  %v3263 = vsel %vm3199, %v3127, %v3231
  %v3264 = vsel %vm3200, %v3129, %v3232
  %v3265 = vsel %vm3201, %v3131, %v3233
  %v3266 = vsel %vm3202, %v3133, %v3234
  %v3267 = vsel %vm3203, %v3137, %v3235
  %v3268 = vsel %vm3204, %v3139, %v3236
  %v3269 = vsel %vm3205, %v3141, %v3237
  %v3270 = vsel %vm3206, %v3143, %v3238
  %v3271 = vsel %vm3207, %v3147, %v3239
  %v3272 = vsel %vm3208, %v3149, %v3240
  %v3273 = vsel %vm3209, %v3151, %v3241
  %v3274 = vsel %vm3210, %v3153, %v3242
  %v3275 = vsel %vm3211, %v3157, %v3243
  %v3276 = vsel %vm3212, %v3159, %v3244
  %v3277 = vsel %vm3213, %v3161, %v3245
  %v3278 = vsel %vm3214, %v3163, %v3246
  %v3279 = vsel %vm3215, %v3167, %v3247
  %v3280 = vsel %vm3216, %v3169, %v3248
  %v3281 = vsel %vm3217, %v3171, %v3249
  %v3282 = vsel %vm3218, %v3173, %v3250
  %v3283 = vsel %vm3219, %v3177, %v3251
  %v3284 = vsel %vm3220, %v3179, %v3252
  %v3285 = vsel %vm3221, %v3181, %v3253
  %v3286 = vsel %vm3222, %v3183, %v3254
  %v3287 = vsel %vm3223, %v3187, %v3255
  %v3288 = vsel %vm3224, %v3189, %v3256
  %v3289 = vsel %vm3225, %v3191, %v3257
  %v3290 = vsel %vm3226, %v3193, %v3258
  %v3291 = vpack.c.bf16 %v3261, %v3259
  %v3292 = vpack.c.bf16 %v3262, %v3260
  %v3293 = vpack.c.bf16 %v3265, %v3263
  %v3294 = vpack.c.bf16 %v3266, %v3264
  %v3295 = vpack.c.bf16 %v3269, %v3267
  %v3296 = vpack.c.bf16 %v3270, %v3268
  %v3297 = vpack.c.bf16 %v3273, %v3271
  %v3298 = vpack.c.bf16 %v3274, %v3272
  %v3299 = vpack.c.bf16 %v3277, %v3275
  %v3300 = vpack.c.bf16 %v3278, %v3276
  %v3301 = vpack.c.bf16 %v3281, %v3279
  %v3302 = vpack.c.bf16 %v3282, %v3280
  %v3303 = vpack.c.bf16 %v3285, %v3283
  %v3304 = vpack.c.bf16 %v3286, %v3284
  %v3305 = vpack.c.bf16 %v3289, %v3287
  %v3306 = vpack.c.bf16 %v3290, %v3288
  %v3307 = vld [vmem:[%s7] sm:$0xff]
  %v3308 = vld [vmem:[%s7 + $0x8] sm:$0xff]
  %v3309 = vld [vmem:[%s7 + $0x10] sm:$0xff]
  %v3310 = vld [vmem:[%s7 + $0x18] sm:$0xff]
  %v3311 = vld [vmem:[%s7 + $0x20] sm:$0xff]
  %v3312 = vld [vmem:[%s7 + $0x28] sm:$0xff]
  %v3313 = vld [vmem:[%s7 + $0x30] sm:$0xff]
  %v3314 = vld [vmem:[%s7 + $0x38] sm:$0xff]
  %v3315 = vld [vmem:[%s7 + $0x40] sm:$0xff]
  %v3316 = vld [vmem:[%s7 + $0x48] sm:$0xff]
  %v3317 = vld [vmem:[%s7 + $0x50] sm:$0xff]
  %v3318 = vld [vmem:[%s7 + $0x58] sm:$0xff]
  %v3319 = vld [vmem:[%s7 + $0x60] sm:$0xff]
  %v3320 = vld [vmem:[%s7 + $0x68] sm:$0xff]
  %v3321 = vld [vmem:[%s7 + $0x70] sm:$0xff]
  %v3322 = vld [vmem:[%s7 + $0x78] sm:$0xff]
  %v3323 = vld [vmem:[%s7 + $0x80] sm:$0xff]
  %v3324 = vld [vmem:[%s7 + $0x88] sm:$0xff]
  %v3325 = vld [vmem:[%s7 + $0x90] sm:$0xff]
  %v3326 = vld [vmem:[%s7 + $0x98] sm:$0xff]
  %v3327 = vld [vmem:[%s7 + $0xa0] sm:$0xff]
  %v3328 = vld [vmem:[%s7 + $0xa8] sm:$0xff]
  %v3329 = vld [vmem:[%s7 + $0xb0] sm:$0xff]
  %v3330 = vld [vmem:[%s7 + $0xb8] sm:$0xff]
  %v3331 = vld [vmem:[%s7 + $0xc0] sm:$0xff]
  %v3332 = vld [vmem:[%s7 + $0xc8] sm:$0xff]
  %v3333 = vld [vmem:[%s7 + $0xd0] sm:$0xff]
  %v3334 = vld [vmem:[%s7 + $0xd8] sm:$0xff]
  %v3335 = vld [vmem:[%s7 + $0xe0] sm:$0xff]
  %v3336 = vld [vmem:[%s7 + $0xe8] sm:$0xff]
  %v3337 = vld [vmem:[%s7 + $0xf0] sm:$0xff]
  %v3338 = vld [vmem:[%s7 + $0xf8] sm:$0xff]
  %v3371 = vunpack.c.l.b16 %v3307
  %v3372 = vunpack.c.h.b16 %v3307
  %v3373 = vunpack.c.l.b16 %v3308
  %v3374 = vunpack.c.h.b16 %v3308
  %v3375 = vunpack.c.l.b16 %v3309
  %v3376 = vunpack.c.h.b16 %v3309
  %v3377 = vunpack.c.l.b16 %v3310
  %v3378 = vunpack.c.h.b16 %v3310
  %v3379 = vunpack.c.l.b16 %v3311
  %v3380 = vunpack.c.h.b16 %v3311
  %v3381 = vunpack.c.l.b16 %v3312
  %v3382 = vunpack.c.h.b16 %v3312
  %v3383 = vunpack.c.l.b16 %v3313
  %v3384 = vunpack.c.h.b16 %v3313
  %v3385 = vunpack.c.l.b16 %v3314
  %v3386 = vunpack.c.h.b16 %v3314
  %v3387 = vunpack.c.l.b16 %v3315
  %v3388 = vunpack.c.h.b16 %v3315
  %v3389 = vunpack.c.l.b16 %v3316
  %v3390 = vunpack.c.h.b16 %v3316
  %v3391 = vunpack.c.l.b16 %v3317
  %v3392 = vunpack.c.h.b16 %v3317
  %v3393 = vunpack.c.l.b16 %v3318
  %v3394 = vunpack.c.h.b16 %v3318
  %v3395 = vunpack.c.l.b16 %v3319
  %v3396 = vunpack.c.h.b16 %v3319
  %v3397 = vunpack.c.l.b16 %v3320
  %v3398 = vunpack.c.h.b16 %v3320
  %v3399 = vunpack.c.l.b16 %v3321
  %v3400 = vunpack.c.h.b16 %v3321
  %v3401 = vunpack.c.l.b16 %v3322
  %v3402 = vunpack.c.h.b16 %v3322
  %v3403 = vunpack.c.l.b16 %v3323
  %v3404 = vunpack.c.h.b16 %v3323
  %v3405 = vunpack.c.l.b16 %v3324
  %v3406 = vunpack.c.h.b16 %v3324
  %v3407 = vunpack.c.l.b16 %v3325
  %v3408 = vunpack.c.h.b16 %v3325
  %v3409 = vunpack.c.l.b16 %v3326
  %v3410 = vunpack.c.h.b16 %v3326
  %v3411 = vunpack.c.l.b16 %v3327
  %v3412 = vunpack.c.h.b16 %v3327
  %v3413 = vunpack.c.l.b16 %v3328
  %v3414 = vunpack.c.h.b16 %v3328
  %v3415 = vunpack.c.l.b16 %v3329
  %v3416 = vunpack.c.h.b16 %v3329
  %v3417 = vunpack.c.l.b16 %v3330
  %v3418 = vunpack.c.h.b16 %v3330
  %v3419 = vunpack.c.l.b16 %v3331
  %v3420 = vunpack.c.h.b16 %v3331
  %v3421 = vunpack.c.l.b16 %v3332
  %v3422 = vunpack.c.h.b16 %v3332
  %v3423 = vunpack.c.l.b16 %v3333
  %v3424 = vunpack.c.h.b16 %v3333
  %v3425 = vunpack.c.l.b16 %v3334
  %v3426 = vunpack.c.h.b16 %v3334
  %v3427 = vunpack.c.l.b16 %v3335
  %v3428 = vunpack.c.h.b16 %v3335
  %v3429 = vunpack.c.l.b16 %v3336
  %v3430 = vunpack.c.h.b16 %v3336
  %v3431 = vunpack.c.l.b16 %v3337
  %v3432 = vunpack.c.h.b16 %v3337
  %v3433 = vunpack.c.l.b16 %v3338
  %v3434 = vunpack.c.h.b16 %v3338
  %v3435 = vpack.c.b16 %v3373, %v3371
  %v3436 = vpack.c.b16 %v3374, %v3372
  %v3437 = vpack.c.b16 %v3377, %v3375
  %v3438 = vpack.c.b16 %v3378, %v3376
  %v3439 = vpack.c.b16 %v3381, %v3379
  %v3440 = vpack.c.b16 %v3382, %v3380
  %v3441 = vpack.c.b16 %v3385, %v3383
  %v3442 = vpack.c.b16 %v3386, %v3384
  %v3443 = vpack.c.b16 %v3389, %v3387
  %v3444 = vpack.c.b16 %v3390, %v3388
  %v3445 = vpack.c.b16 %v3393, %v3391
  %v3446 = vpack.c.b16 %v3394, %v3392
  %v3447 = vpack.c.b16 %v3397, %v3395
  %v3448 = vpack.c.b16 %v3398, %v3396
  %v3449 = vpack.c.b16 %v3401, %v3399
  %v3450 = vpack.c.b16 %v3402, %v3400
  %v3451 = vpack.c.b16 %v3405, %v3403
  %v3452 = vpack.c.b16 %v3406, %v3404
  %v3453 = vpack.c.b16 %v3409, %v3407
  %v3454 = vpack.c.b16 %v3410, %v3408
  %v3455 = vpack.c.b16 %v3413, %v3411
  %v3456 = vpack.c.b16 %v3414, %v3412
  %v3457 = vpack.c.b16 %v3417, %v3415
  %v3458 = vpack.c.b16 %v3418, %v3416
  %v3459 = vpack.c.b16 %v3421, %v3419
  %v3460 = vpack.c.b16 %v3422, %v3420
  %v3461 = vpack.c.b16 %v3425, %v3423
  %v3462 = vpack.c.b16 %v3426, %v3424
  %v3463 = vpack.c.b16 %v3429, %v3427
  %v3464 = vpack.c.b16 %v3430, %v3428
  %v3465 = vpack.c.b16 %v3433, %v3431
  %v3466 = vpack.c.b16 %v3434, %v3432
  %3499 = vmatprep.subr.bf16.mxu0 %v3436
  %3500 = vmatpush1.bf16.msra.mxu0 %v3435
  %3501 = vmatprep.subr.bf16.mxu0 %v3438
  %3502 = vmatpush1.bf16.msra.mxu0 %v3437
  %3503 = vmatprep.subr.bf16.mxu0 %v3440
  %3504 = vmatpush1.bf16.msra.mxu0 %v3439
  %3505 = vmatprep.subr.bf16.mxu0 %v3442
  %3506 = vmatpush1.bf16.msra.mxu0 %v3441
  %3507 = vmatprep.subr.bf16.mxu0 %v3444
  %3508 = vmatpush1.bf16.msra.mxu0 %v3443
  %3509 = vmatprep.subr.bf16.mxu0 %v3446
  %3510 = vmatpush1.bf16.msra.mxu0 %v3445
  %3511 = vmatprep.subr.bf16.mxu0 %v3448
  %3512 = vmatpush1.bf16.msra.mxu0 %v3447
  %3513 = vmatprep.subr.bf16.mxu0 %v3450
  %3514 = vmatpush1.bf16.msra.mxu0 %v3449
  %3515 = vmatprep.subr.bf16.mxu0 %v3452
  %3516 = vmatpush1.bf16.msra.mxu0 %v3451
  %3517 = vmatprep.subr.bf16.mxu0 %v3454
  %3518 = vmatpush1.bf16.msra.mxu0 %v3453
  %3519 = vmatprep.subr.bf16.mxu0 %v3456
  %3520 = vmatpush1.bf16.msra.mxu0 %v3455
  %3521 = vmatprep.subr.bf16.mxu0 %v3458
  %3522 = vmatpush1.bf16.msra.mxu0 %v3457
  %3523 = vmatprep.subr.bf16.mxu0 %v3460
  %3524 = vmatpush1.bf16.msra.mxu0 %v3459
  %3525 = vmatprep.subr.bf16.mxu0 %v3462
  %3526 = vmatpush1.bf16.msra.mxu0 %v3461
  %3527 = vmatprep.subr.bf16.mxu0 %v3464
  %3528 = vmatpush1.bf16.msra.mxu0 %v3463
  %3529 = vmatprep.subr.bf16.mxu0 %v3466
  %3530 = vmatpush1.bf16.msra.mxu0 %v3465
  %3531 = vmatprep.mubr.bf16.mxu0 %v3292
  %3532 = vmatmul.mubr.bf16.gmra.mrb[0].mxu0 %v3291
  %v3533 = vpop.f32.mrb[0].mxu0
  %v3534 = vadd.f32 %v1277, %v3533
  %v3535 = vpop.f32.mrb[0].mxu0
  %v3536 = vadd.f32 %v1281, %v3535
  %v3537 = vpop.f32.mrb[0].mxu0
  %v3538 = vadd.f32 %v1277, %v3537
  %v3539 = vpop.f32.mrb[0].mxu0
  %v3540 = vadd.f32 %v1281, %v3539
  %3541 = vmatprep.mubr.bf16.mxu0 %v3294
  %3542 = vmatmul.mubr.bf16.gmra.mrb[0].mxu0 %v3293
  %v3543 = vpop.f32.mrb[0].mxu0
  %v3544 = vadd.f32 %v1277, %v3543
  %v3545 = vpop.f32.mrb[0].mxu0
  %v3546 = vadd.f32 %v1281, %v3545
  %v3547 = vpop.f32.mrb[0].mxu0
  %v3548 = vadd.f32 %v1277, %v3547
  %v3549 = vpop.f32.mrb[0].mxu0
  %v3550 = vadd.f32 %v1281, %v3549
  %3551 = vmatprep.mubr.bf16.mxu0 %v3296
  %3552 = vmatmul.mubr.bf16.gmra.mrb[0].mxu0 %v3295
  %v3553 = vpop.f32.mrb[0].mxu0
  %v3554 = vadd.f32 %v1277, %v3553
  %v3555 = vpop.f32.mrb[0].mxu0
  %v3556 = vadd.f32 %v1281, %v3555
  %v3557 = vpop.f32.mrb[0].mxu0
  %v3558 = vadd.f32 %v1277, %v3557
  %v3559 = vpop.f32.mrb[0].mxu0
  %v3560 = vadd.f32 %v1281, %v3559
  %3561 = vmatprep.mubr.bf16.mxu0 %v3298
  %3562 = vmatmul.mubr.bf16.gmra.mrb[0].mxu0 %v3297
  %v3563 = vpop.f32.mrb[0].mxu0
  %v3564 = vadd.f32 %v1277, %v3563
  %v3565 = vpop.f32.mrb[0].mxu0
  %v3566 = vadd.f32 %v1281, %v3565
  %v3567 = vpop.f32.mrb[0].mxu0
  %v3568 = vadd.f32 %v1277, %v3567
  %v3569 = vpop.f32.mrb[0].mxu0
  %v3570 = vadd.f32 %v1281, %v3569
  %3571 = vmatprep.mubr.bf16.mxu0 %v3300
  %3572 = vmatmul.mubr.bf16.gmra.mrb[0].mxu0 %v3299
  %v3573 = vpop.f32.mrb[0].mxu0
  %v3574 = vadd.f32 %v1277, %v3573
  %v3575 = vpop.f32.mrb[0].mxu0
  %v3576 = vadd.f32 %v1281, %v3575
  %v3577 = vpop.f32.mrb[0].mxu0
  %v3578 = vadd.f32 %v1277, %v3577
  %v3579 = vpop.f32.mrb[0].mxu0
  %v3580 = vadd.f32 %v1281, %v3579
  %3581 = vmatprep.mubr.bf16.mxu0 %v3302
  %3582 = vmatmul.mubr.bf16.gmra.mrb[0].mxu0 %v3301
  %v3583 = vpop.f32.mrb[0].mxu0
  %v3584 = vadd.f32 %v1277, %v3583
  %v3585 = vpop.f32.mrb[0].mxu0
  %v3586 = vadd.f32 %v1281, %v3585
  %v3587 = vpop.f32.mrb[0].mxu0
  %v3588 = vadd.f32 %v1277, %v3587
  %v3589 = vpop.f32.mrb[0].mxu0
  %v3590 = vadd.f32 %v1281, %v3589
  %3591 = vmatprep.mubr.bf16.mxu0 %v3304
  %3592 = vmatmul.mubr.bf16.gmra.mrb[0].mxu0 %v3303
  %v3593 = vpop.f32.mrb[0].mxu0
  %v3594 = vadd.f32 %v1277, %v3593
  %v3595 = vpop.f32.mrb[0].mxu0
  %v3596 = vadd.f32 %v1281, %v3595
  %v3597 = vpop.f32.mrb[0].mxu0
  %v3598 = vadd.f32 %v1277, %v3597
  %v3599 = vpop.f32.mrb[0].mxu0
  %v3600 = vadd.f32 %v1281, %v3599
  %3601 = vmatprep.mubr.bf16.mxu0 %v3306
  %3602 = vmatmul.mubr.bf16.gmra.mrb[0].mxu0 %v3305
  %v3603 = vpop.f32.mrb[0].mxu0
  %v3604 = vadd.f32 %v1277, %v3603
  %v3605 = vpop.f32.mrb[0].mxu0
  %v3606 = vadd.f32 %v1281, %v3605
  %v3607 = vpop.f32.mrb[0].mxu0
  %v3608 = vadd.f32 %v1277, %v3607
  %v3609 = vpop.f32.mrb[0].mxu0
  %v3610 = vadd.f32 %v1281, %v3609
  %3611 = vdwg.mxu0
  %vm3612 = vcmp.gt.f32.partialorder %v3534, 0.0
  %vm3613 = vcmp.gt.f32.partialorder %v3536, 0.0
  %vm3614 = vcmp.gt.f32.partialorder %v3538, 0.0
  %vm3615 = vcmp.gt.f32.partialorder %v3540, 0.0
  %vm3616 = vcmp.gt.f32.partialorder %v3544, 0.0
  %vm3617 = vcmp.gt.f32.partialorder %v3546, 0.0
  %vm3618 = vcmp.gt.f32.partialorder %v3548, 0.0
  %vm3619 = vcmp.gt.f32.partialorder %v3550, 0.0
  %vm3620 = vcmp.gt.f32.partialorder %v3554, 0.0
  %vm3621 = vcmp.gt.f32.partialorder %v3556, 0.0
  %vm3622 = vcmp.gt.f32.partialorder %v3558, 0.0
  %vm3623 = vcmp.gt.f32.partialorder %v3560, 0.0
  %vm3624 = vcmp.gt.f32.partialorder %v3564, 0.0
  %vm3625 = vcmp.gt.f32.partialorder %v3566, 0.0
  %vm3626 = vcmp.gt.f32.partialorder %v3568, 0.0
  %vm3627 = vcmp.gt.f32.partialorder %v3570, 0.0
  %vm3628 = vcmp.gt.f32.partialorder %v3574, 0.0
  %vm3629 = vcmp.gt.f32.partialorder %v3576, 0.0
  %vm3630 = vcmp.gt.f32.partialorder %v3578, 0.0
  %vm3631 = vcmp.gt.f32.partialorder %v3580, 0.0
  %vm3632 = vcmp.gt.f32.partialorder %v3584, 0.0
  %vm3633 = vcmp.gt.f32.partialorder %v3586, 0.0
  %vm3634 = vcmp.gt.f32.partialorder %v3588, 0.0
  %vm3635 = vcmp.gt.f32.partialorder %v3590, 0.0
  %vm3636 = vcmp.gt.f32.partialorder %v3594, 0.0
  %vm3637 = vcmp.gt.f32.partialorder %v3596, 0.0
  %vm3638 = vcmp.gt.f32.partialorder %v3598, 0.0
  %vm3639 = vcmp.gt.f32.partialorder %v3600, 0.0
  %vm3640 = vcmp.gt.f32.partialorder %v3604, 0.0
  %vm3641 = vcmp.gt.f32.partialorder %v3606, 0.0
  %vm3642 = vcmp.gt.f32.partialorder %v3608, 0.0
  %vm3643 = vcmp.gt.f32.partialorder %v3610, 0.0
  %v3644 = vmul.f32 %v3534, 0.01
  %v3645 = vmul.f32 %v3536, 0.01
  %v3646 = vmul.f32 %v3538, 0.01
  %v3647 = vmul.f32 %v3540, 0.01
  %v3648 = vmul.f32 %v3544, 0.01
  %v3649 = vmul.f32 %v3546, 0.01
  %v3650 = vmul.f32 %v3548, 0.01
  %v3651 = vmul.f32 %v3550, 0.01
  %v3652 = vmul.f32 %v3554, 0.01
  %v3653 = vmul.f32 %v3556, 0.01
  %v3654 = vmul.f32 %v3558, 0.01
  %v3655 = vmul.f32 %v3560, 0.01
  %v3656 = vmul.f32 %v3564, 0.01
  %v3657 = vmul.f32 %v3566, 0.01
  %v3658 = vmul.f32 %v3568, 0.01
  %v3659 = vmul.f32 %v3570, 0.01
  %v3660 = vmul.f32 %v3574, 0.01
  %v3661 = vmul.f32 %v3576, 0.01
  %v3662 = vmul.f32 %v3578, 0.01
  %v3663 = vmul.f32 %v3580, 0.01
  %v3664 = vmul.f32 %v3584, 0.01
  %v3665 = vmul.f32 %v3586, 0.01
  %v3666 = vmul.f32 %v3588, 0.01
  %v3667 = vmul.f32 %v3590, 0.01
  %v3668 = vmul.f32 %v3594, 0.01
  %v3669 = vmul.f32 %v3596, 0.01
  %v3670 = vmul.f32 %v3598, 0.01
  %v3671 = vmul.f32 %v3600, 0.01
  %v3672 = vmul.f32 %v3604, 0.01
  %v3673 = vmul.f32 %v3606, 0.01
  %v3674 = vmul.f32 %v3608, 0.01
  %v3675 = vmul.f32 %v3610, 0.01
  %v3676 = vsel %vm3612, %v3534, %v3644
  %v3677 = vsel %vm3613, %v3536, %v3645
  %v3678 = vsel %vm3614, %v3538, %v3646
  %v3679 = vsel %vm3615, %v3540, %v3647
  %v3680 = vsel %vm3616, %v3544, %v3648
  %v3681 = vsel %vm3617, %v3546, %v3649
  %v3682 = vsel %vm3618, %v3548, %v3650
  %v3683 = vsel %vm3619, %v3550, %v3651
  %v3684 = vsel %vm3620, %v3554, %v3652
  %v3685 = vsel %vm3621, %v3556, %v3653
  %v3686 = vsel %vm3622, %v3558, %v3654
  %v3687 = vsel %vm3623, %v3560, %v3655
  %v3688 = vsel %vm3624, %v3564, %v3656
  %v3689 = vsel %vm3625, %v3566, %v3657
  %v3690 = vsel %vm3626, %v3568, %v3658
  %v3691 = vsel %vm3627, %v3570, %v3659
  %v3692 = vsel %vm3628, %v3574, %v3660
  %v3693 = vsel %vm3629, %v3576, %v3661
  %v3694 = vsel %vm3630, %v3578, %v3662
  %v3695 = vsel %vm3631, %v3580, %v3663
  %v3696 = vsel %vm3632, %v3584, %v3664
  %v3697 = vsel %vm3633, %v3586, %v3665
  %v3698 = vsel %vm3634, %v3588, %v3666
  %v3699 = vsel %vm3635, %v3590, %v3667
  %v3700 = vsel %vm3636, %v3594, %v3668
  %v3701 = vsel %vm3637, %v3596, %v3669
  %v3702 = vsel %vm3638, %v3598, %v3670
  %v3703 = vsel %vm3639, %v3600, %v3671
  %v3704 = vsel %vm3640, %v3604, %v3672
  %v3705 = vsel %vm3641, %v3606, %v3673
  %v3706 = vsel %vm3642, %v3608, %v3674
  %v3707 = vsel %vm3643, %v3610, %v3675
  %v3708 = vpack.c.bf16 %v3678, %v3676
  %v3709 = vpack.c.bf16 %v3679, %v3677
  %v3710 = vpack.c.bf16 %v3682, %v3680
  %v3711 = vpack.c.bf16 %v3683, %v3681
  %v3712 = vpack.c.bf16 %v3686, %v3684
  %v3713 = vpack.c.bf16 %v3687, %v3685
  %v3714 = vpack.c.bf16 %v3690, %v3688
  %v3715 = vpack.c.bf16 %v3691, %v3689
  %v3716 = vpack.c.bf16 %v3694, %v3692
  %v3717 = vpack.c.bf16 %v3695, %v3693
  %v3718 = vpack.c.bf16 %v3698, %v3696
  %v3719 = vpack.c.bf16 %v3699, %v3697
  %v3720 = vpack.c.bf16 %v3702, %v3700
  %v3721 = vpack.c.bf16 %v3703, %v3701
  %v3722 = vpack.c.bf16 %v3706, %v3704
  %v3723 = vpack.c.bf16 %v3707, %v3705
  %v3724 = vld [vmem:[%s9] sm:$0xff]
  %v3725 = vld [vmem:[%s9 + $0x8] sm:$0xff]
  %v3726 = vld [vmem:[%s9 + $0x10] sm:$0xff]
  %v3727 = vld [vmem:[%s9 + $0x18] sm:$0xff]
  %v3728 = vld [vmem:[%s9 + $0x20] sm:$0xff]
  %v3729 = vld [vmem:[%s9 + $0x28] sm:$0xff]
  %v3730 = vld [vmem:[%s9 + $0x30] sm:$0xff]
  %v3731 = vld [vmem:[%s9 + $0x38] sm:$0xff]
  %v3732 = vld [vmem:[%s9 + $0x40] sm:$0xff]
  %v3733 = vld [vmem:[%s9 + $0x48] sm:$0xff]
  %v3734 = vld [vmem:[%s9 + $0x50] sm:$0xff]
  %v3735 = vld [vmem:[%s9 + $0x58] sm:$0xff]
  %v3736 = vld [vmem:[%s9 + $0x60] sm:$0xff]
  %v3737 = vld [vmem:[%s9 + $0x68] sm:$0xff]
  %v3738 = vld [vmem:[%s9 + $0x70] sm:$0xff]
  %v3739 = vld [vmem:[%s9 + $0x78] sm:$0xff]
  %v3740 = vld [vmem:[%s9 + $0x80] sm:$0xff]
  %v3741 = vld [vmem:[%s9 + $0x88] sm:$0xff]
  %v3742 = vld [vmem:[%s9 + $0x90] sm:$0xff]
  %v3743 = vld [vmem:[%s9 + $0x98] sm:$0xff]
  %v3744 = vld [vmem:[%s9 + $0xa0] sm:$0xff]
  %v3745 = vld [vmem:[%s9 + $0xa8] sm:$0xff]
  %v3746 = vld [vmem:[%s9 + $0xb0] sm:$0xff]
  %v3747 = vld [vmem:[%s9 + $0xb8] sm:$0xff]
  %v3748 = vld [vmem:[%s9 + $0xc0] sm:$0xff]
  %v3749 = vld [vmem:[%s9 + $0xc8] sm:$0xff]
  %v3750 = vld [vmem:[%s9 + $0xd0] sm:$0xff]
  %v3751 = vld [vmem:[%s9 + $0xd8] sm:$0xff]
  %v3752 = vld [vmem:[%s9 + $0xe0] sm:$0xff]
  %v3753 = vld [vmem:[%s9 + $0xe8] sm:$0xff]
  %v3754 = vld [vmem:[%s9 + $0xf0] sm:$0xff]
  %v3755 = vld [vmem:[%s9 + $0xf8] sm:$0xff]
  %v3788 = vunpack.c.l.b16 %v3724
  %v3789 = vunpack.c.h.b16 %v3724
  %v3790 = vunpack.c.l.b16 %v3725
  %v3791 = vunpack.c.h.b16 %v3725
  %v3792 = vunpack.c.l.b16 %v3726
  %v3793 = vunpack.c.h.b16 %v3726
  %v3794 = vunpack.c.l.b16 %v3727
  %v3795 = vunpack.c.h.b16 %v3727
  %v3796 = vunpack.c.l.b16 %v3728
  %v3797 = vunpack.c.h.b16 %v3728
  %v3798 = vunpack.c.l.b16 %v3729
  %v3799 = vunpack.c.h.b16 %v3729
  %v3800 = vunpack.c.l.b16 %v3730
  %v3801 = vunpack.c.h.b16 %v3730
  %v3802 = vunpack.c.l.b16 %v3731
  %v3803 = vunpack.c.h.b16 %v3731
  %v3804 = vunpack.c.l.b16 %v3732
  %v3805 = vunpack.c.h.b16 %v3732
  %v3806 = vunpack.c.l.b16 %v3733
  %v3807 = vunpack.c.h.b16 %v3733
  %v3808 = vunpack.c.l.b16 %v3734
  %v3809 = vunpack.c.h.b16 %v3734
  %v3810 = vunpack.c.l.b16 %v3735
  %v3811 = vunpack.c.h.b16 %v3735
  %v3812 = vunpack.c.l.b16 %v3736
  %v3813 = vunpack.c.h.b16 %v3736
  %v3814 = vunpack.c.l.b16 %v3737
  %v3815 = vunpack.c.h.b16 %v3737
  %v3816 = vunpack.c.l.b16 %v3738
  %v3817 = vunpack.c.h.b16 %v3738
  %v3818 = vunpack.c.l.b16 %v3739
  %v3819 = vunpack.c.h.b16 %v3739
  %v3820 = vunpack.c.l.b16 %v3740
  %v3821 = vunpack.c.h.b16 %v3740
  %v3822 = vunpack.c.l.b16 %v3741
  %v3823 = vunpack.c.h.b16 %v3741
  %v3824 = vunpack.c.l.b16 %v3742
  %v3825 = vunpack.c.h.b16 %v3742
  %v3826 = vunpack.c.l.b16 %v3743
  %v3827 = vunpack.c.h.b16 %v3743
  %v3828 = vunpack.c.l.b16 %v3744
  %v3829 = vunpack.c.h.b16 %v3744
  %v3830 = vunpack.c.l.b16 %v3745
  %v3831 = vunpack.c.h.b16 %v3745
  %v3832 = vunpack.c.l.b16 %v3746
  %v3833 = vunpack.c.h.b16 %v3746
  %v3834 = vunpack.c.l.b16 %v3747
  %v3835 = vunpack.c.h.b16 %v3747
  %v3836 = vunpack.c.l.b16 %v3748
  %v3837 = vunpack.c.h.b16 %v3748
  %v3838 = vunpack.c.l.b16 %v3749
  %v3839 = vunpack.c.h.b16 %v3749
  %v3840 = vunpack.c.l.b16 %v3750
  %v3841 = vunpack.c.h.b16 %v3750
  %v3842 = vunpack.c.l.b16 %v3751
  %v3843 = vunpack.c.h.b16 %v3751
  %v3844 = vunpack.c.l.b16 %v3752
  %v3845 = vunpack.c.h.b16 %v3752
  %v3846 = vunpack.c.l.b16 %v3753
  %v3847 = vunpack.c.h.b16 %v3753
  %v3848 = vunpack.c.l.b16 %v3754
  %v3849 = vunpack.c.h.b16 %v3754
  %v3850 = vunpack.c.l.b16 %v3755
  %v3851 = vunpack.c.h.b16 %v3755
  %v3852 = vpack.c.b16 %v3790, %v3788
  %v3853 = vpack.c.b16 %v3791, %v3789
  %v3854 = vpack.c.b16 %v3794, %v3792
  %v3855 = vpack.c.b16 %v3795, %v3793
  %v3856 = vpack.c.b16 %v3798, %v3796
  %v3857 = vpack.c.b16 %v3799, %v3797
  %v3858 = vpack.c.b16 %v3802, %v3800
  %v3859 = vpack.c.b16 %v3803, %v3801
  %v3860 = vpack.c.b16 %v3806, %v3804
  %v3861 = vpack.c.b16 %v3807, %v3805
  %v3862 = vpack.c.b16 %v3810, %v3808
  %v3863 = vpack.c.b16 %v3811, %v3809
  %v3864 = vpack.c.b16 %v3814, %v3812
  %v3865 = vpack.c.b16 %v3815, %v3813
  %v3866 = vpack.c.b16 %v3818, %v3816
  %v3867 = vpack.c.b16 %v3819, %v3817
  %v3868 = vpack.c.b16 %v3822, %v3820
  %v3869 = vpack.c.b16 %v3823, %v3821
  %v3870 = vpack.c.b16 %v3826, %v3824
  %v3871 = vpack.c.b16 %v3827, %v3825
  %v3872 = vpack.c.b16 %v3830, %v3828
  %v3873 = vpack.c.b16 %v3831, %v3829
  %v3874 = vpack.c.b16 %v3834, %v3832
  %v3875 = vpack.c.b16 %v3835, %v3833
  %v3876 = vpack.c.b16 %v3838, %v3836
  %v3877 = vpack.c.b16 %v3839, %v3837
  %v3878 = vpack.c.b16 %v3842, %v3840
  %v3879 = vpack.c.b16 %v3843, %v3841
  %v3880 = vpack.c.b16 %v3846, %v3844
  %v3881 = vpack.c.b16 %v3847, %v3845
  %v3882 = vpack.c.b16 %v3850, %v3848
  %v3883 = vpack.c.b16 %v3851, %v3849
  %3916 = vmatprep.subr.bf16.mxu0 %v3853
  %3917 = vmatpush1.bf16.msra.mxu0 %v3852
  %3918 = vmatprep.subr.bf16.mxu0 %v3855
  %3919 = vmatpush1.bf16.msra.mxu0 %v3854
  %3920 = vmatprep.subr.bf16.mxu0 %v3857
  %3921 = vmatpush1.bf16.msra.mxu0 %v3856
  %3922 = vmatprep.subr.bf16.mxu0 %v3859
  %3923 = vmatpush1.bf16.msra.mxu0 %v3858
  %3924 = vmatprep.subr.bf16.mxu0 %v3861
  %3925 = vmatpush1.bf16.msra.mxu0 %v3860
  %3926 = vmatprep.subr.bf16.mxu0 %v3863
  %3927 = vmatpush1.bf16.msra.mxu0 %v3862
  %3928 = vmatprep.subr.bf16.mxu0 %v3865
  %3929 = vmatpush1.bf16.msra.mxu0 %v3864
  %3930 = vmatprep.subr.bf16.mxu0 %v3867
  %3931 = vmatpush1.bf16.msra.mxu0 %v3866
  %3932 = vmatprep.subr.bf16.mxu0 %v3869
  %3933 = vmatpush1.bf16.msra.mxu0 %v3868
  %3934 = vmatprep.subr.bf16.mxu0 %v3871
  %3935 = vmatpush1.bf16.msra.mxu0 %v3870
  %3936 = vmatprep.subr.bf16.mxu0 %v3873
  %3937 = vmatpush1.bf16.msra.mxu0 %v3872
  %3938 = vmatprep.subr.bf16.mxu0 %v3875
  %3939 = vmatpush1.bf16.msra.mxu0 %v3874
  %3940 = vmatprep.subr.bf16.mxu0 %v3877
  %3941 = vmatpush1.bf16.msra.mxu0 %v3876
  %3942 = vmatprep.subr.bf16.mxu0 %v3879
  %3943 = vmatpush1.bf16.msra.mxu0 %v3878
  %3944 = vmatprep.subr.bf16.mxu0 %v3881
  %3945 = vmatpush1.bf16.msra.mxu0 %v3880
  %3946 = vmatprep.subr.bf16.mxu0 %v3883
  %3947 = vmatpush1.bf16.msra.mxu0 %v3882
  %3948 = vmatprep.mubr.bf16.mxu0 %v3709
  %3949 = vmatmul.mubr.bf16.gmra.mrb[0].mxu0 %v3708
  %v3950 = vpop.f32.mrb[0].mxu0
  %v3951 = vadd.f32 %v1705, %v3950
  %v3952 = vpop.f32.mrb[0].mxu0
  %v3953 = vadd.f32 %v1709, %v3952
  %v3954 = vpop.f32.mrb[0].mxu0
  %v3955 = vadd.f32 %v1705, %v3954
  %v3956 = vpop.f32.mrb[0].mxu0
  %v3957 = vadd.f32 %v1709, %v3956
  %3958 = vmatprep.mubr.bf16.mxu0 %v3711
  %3959 = vmatmul.mubr.bf16.gmra.mrb[0].mxu0 %v3710
  %v3960 = vpop.f32.mrb[0].mxu0
  %v3961 = vadd.f32 %v1705, %v3960
  %v3962 = vpop.f32.mrb[0].mxu0
  %v3963 = vadd.f32 %v1709, %v3962
  %v3964 = vpop.f32.mrb[0].mxu0
  %v3965 = vadd.f32 %v1705, %v3964
  %v3966 = vpop.f32.mrb[0].mxu0
  %v3967 = vadd.f32 %v1709, %v3966
  %3968 = vmatprep.mubr.bf16.mxu0 %v3713
  %3969 = vmatmul.mubr.bf16.gmra.mrb[0].mxu0 %v3712
  %v3970 = vpop.f32.mrb[0].mxu0
  %v3971 = vadd.f32 %v1705, %v3970
  %v3972 = vpop.f32.mrb[0].mxu0
  %v3973 = vadd.f32 %v1709, %v3972
  %v3974 = vpop.f32.mrb[0].mxu0
  %v3975 = vadd.f32 %v1705, %v3974
  %v3976 = vpop.f32.mrb[0].mxu0
  %v3977 = vadd.f32 %v1709, %v3976
  %3978 = vmatprep.mubr.bf16.mxu0 %v3715
  %3979 = vmatmul.mubr.bf16.gmra.mrb[0].mxu0 %v3714
  %v3980 = vpop.f32.mrb[0].mxu0
  %v3981 = vadd.f32 %v1705, %v3980
  %v3982 = vpop.f32.mrb[0].mxu0
  %v3983 = vadd.f32 %v1709, %v3982
  %v3984 = vpop.f32.mrb[0].mxu0
  %v3985 = vadd.f32 %v1705, %v3984
  %v3986 = vpop.f32.mrb[0].mxu0
  %v3987 = vadd.f32 %v1709, %v3986
  %3988 = vmatprep.mubr.bf16.mxu0 %v3717
  %3989 = vmatmul.mubr.bf16.gmra.mrb[0].mxu0 %v3716
  %v3990 = vpop.f32.mrb[0].mxu0
  %v3991 = vadd.f32 %v1705, %v3990
  %v3992 = vpop.f32.mrb[0].mxu0
  %v3993 = vadd.f32 %v1709, %v3992
  %v3994 = vpop.f32.mrb[0].mxu0
  %v3995 = vadd.f32 %v1705, %v3994
  %v3996 = vpop.f32.mrb[0].mxu0
  %v3997 = vadd.f32 %v1709, %v3996
  %3998 = vmatprep.mubr.bf16.mxu0 %v3719
  %3999 = vmatmul.mubr.bf16.gmra.mrb[0].mxu0 %v3718
  %v4000 = vpop.f32.mrb[0].mxu0
  %v4001 = vadd.f32 %v1705, %v4000
  %v4002 = vpop.f32.mrb[0].mxu0
  %v4003 = vadd.f32 %v1709, %v4002
  %v4004 = vpop.f32.mrb[0].mxu0
  %v4005 = vadd.f32 %v1705, %v4004
  %v4006 = vpop.f32.mrb[0].mxu0
  %v4007 = vadd.f32 %v1709, %v4006
  %4008 = vmatprep.mubr.bf16.mxu0 %v3721
  %4009 = vmatmul.mubr.bf16.gmra.mrb[0].mxu0 %v3720
  %v4010 = vpop.f32.mrb[0].mxu0
  %v4011 = vadd.f32 %v1705, %v4010
  %v4012 = vpop.f32.mrb[0].mxu0
  %v4013 = vadd.f32 %v1709, %v4012
  %v4014 = vpop.f32.mrb[0].mxu0
  %v4015 = vadd.f32 %v1705, %v4014
  %v4016 = vpop.f32.mrb[0].mxu0
  %v4017 = vadd.f32 %v1709, %v4016
  %4018 = vmatprep.mubr.bf16.mxu0 %v3723
  %4019 = vmatmul.mubr.bf16.gmra.mrb[0].mxu0 %v3722
  %v4020 = vpop.f32.mrb[0].mxu0
  %v4021 = vadd.f32 %v1705, %v4020
  %v4022 = vpop.f32.mrb[0].mxu0
  %v4023 = vadd.f32 %v1709, %v4022
  %v4024 = vpop.f32.mrb[0].mxu0
  %v4025 = vadd.f32 %v1705, %v4024
  %v4026 = vpop.f32.mrb[0].mxu0
  %v4027 = vadd.f32 %v1709, %v4026
  %4028 = vdwg.mxu0
  %vm4029 = vcmp.gt.f32.partialorder %v3951, 0.0
  %vm4030 = vcmp.gt.f32.partialorder %v3953, 0.0
  %vm4031 = vcmp.gt.f32.partialorder %v3955, 0.0
  %vm4032 = vcmp.gt.f32.partialorder %v3957, 0.0
  %vm4033 = vcmp.gt.f32.partialorder %v3961, 0.0
  %vm4034 = vcmp.gt.f32.partialorder %v3963, 0.0
  %vm4035 = vcmp.gt.f32.partialorder %v3965, 0.0
  %vm4036 = vcmp.gt.f32.partialorder %v3967, 0.0
  %vm4037 = vcmp.gt.f32.partialorder %v3971, 0.0
  %vm4038 = vcmp.gt.f32.partialorder %v3973, 0.0
  %vm4039 = vcmp.gt.f32.partialorder %v3975, 0.0
  %vm4040 = vcmp.gt.f32.partialorder %v3977, 0.0
  %vm4041 = vcmp.gt.f32.partialorder %v3981, 0.0
  %vm4042 = vcmp.gt.f32.partialorder %v3983, 0.0
  %vm4043 = vcmp.gt.f32.partialorder %v3985, 0.0
  %vm4044 = vcmp.gt.f32.partialorder %v3987, 0.0
  %vm4045 = vcmp.gt.f32.partialorder %v3991, 0.0
  %vm4046 = vcmp.gt.f32.partialorder %v3993, 0.0
  %vm4047 = vcmp.gt.f32.partialorder %v3995, 0.0
  %vm4048 = vcmp.gt.f32.partialorder %v3997, 0.0
  %vm4049 = vcmp.gt.f32.partialorder %v4001, 0.0
  %vm4050 = vcmp.gt.f32.partialorder %v4003, 0.0
  %vm4051 = vcmp.gt.f32.partialorder %v4005, 0.0
  %vm4052 = vcmp.gt.f32.partialorder %v4007, 0.0
  %vm4053 = vcmp.gt.f32.partialorder %v4011, 0.0
  %vm4054 = vcmp.gt.f32.partialorder %v4013, 0.0
  %vm4055 = vcmp.gt.f32.partialorder %v4015, 0.0
  %vm4056 = vcmp.gt.f32.partialorder %v4017, 0.0
  %vm4057 = vcmp.gt.f32.partialorder %v4021, 0.0
  %vm4058 = vcmp.gt.f32.partialorder %v4023, 0.0
  %vm4059 = vcmp.gt.f32.partialorder %v4025, 0.0
  %vm4060 = vcmp.gt.f32.partialorder %v4027, 0.0
  %v4061 = vmul.f32 %v3951, 0.01
  %v4062 = vmul.f32 %v3953, 0.01
  %v4063 = vmul.f32 %v3955, 0.01
  %v4064 = vmul.f32 %v3957, 0.01
  %v4065 = vmul.f32 %v3961, 0.01
  %v4066 = vmul.f32 %v3963, 0.01
  %v4067 = vmul.f32 %v3965, 0.01
  %v4068 = vmul.f32 %v3967, 0.01
  %v4069 = vmul.f32 %v3971, 0.01
  %v4070 = vmul.f32 %v3973, 0.01
  %v4071 = vmul.f32 %v3975, 0.01
  %v4072 = vmul.f32 %v3977, 0.01
  %v4073 = vmul.f32 %v3981, 0.01
  %v4074 = vmul.f32 %v3983, 0.01
  %v4075 = vmul.f32 %v3985, 0.01
  %v4076 = vmul.f32 %v3987, 0.01
  %v4077 = vmul.f32 %v3991, 0.01
  %v4078 = vmul.f32 %v3993, 0.01
  %v4079 = vmul.f32 %v3995, 0.01
  %v4080 = vmul.f32 %v3997, 0.01
  %v4081 = vmul.f32 %v4001, 0.01
  %v4082 = vmul.f32 %v4003, 0.01
  %v4083 = vmul.f32 %v4005, 0.01
  %v4084 = vmul.f32 %v4007, 0.01
  %v4085 = vmul.f32 %v4011, 0.01
  %v4086 = vmul.f32 %v4013, 0.01
  %v4087 = vmul.f32 %v4015, 0.01
  %v4088 = vmul.f32 %v4017, 0.01
  %v4089 = vmul.f32 %v4021, 0.01
  %v4090 = vmul.f32 %v4023, 0.01
  %v4091 = vmul.f32 %v4025, 0.01
  %v4092 = vmul.f32 %v4027, 0.01
  %v4093 = vsel %vm4029, %v3951, %v4061
  %v4094 = vsel %vm4030, %v3953, %v4062
  %v4095 = vsel %vm4031, %v3955, %v4063
  %v4096 = vsel %vm4032, %v3957, %v4064
  %v4097 = vsel %vm4033, %v3961, %v4065
  %v4098 = vsel %vm4034, %v3963, %v4066
  %v4099 = vsel %vm4035, %v3965, %v4067
  %v4100 = vsel %vm4036, %v3967, %v4068
  %v4101 = vsel %vm4037, %v3971, %v4069
  %v4102 = vsel %vm4038, %v3973, %v4070
  %v4103 = vsel %vm4039, %v3975, %v4071
  %v4104 = vsel %vm4040, %v3977, %v4072
  %v4105 = vsel %vm4041, %v3981, %v4073
  %v4106 = vsel %vm4042, %v3983, %v4074
  %v4107 = vsel %vm4043, %v3985, %v4075
  %v4108 = vsel %vm4044, %v3987, %v4076
  %v4109 = vsel %vm4045, %v3991, %v4077
  %v4110 = vsel %vm4046, %v3993, %v4078
  %v4111 = vsel %vm4047, %v3995, %v4079
  %v4112 = vsel %vm4048, %v3997, %v4080
  %v4113 = vsel %vm4049, %v4001, %v4081
  %v4114 = vsel %vm4050, %v4003, %v4082
  %v4115 = vsel %vm4051, %v4005, %v4083
  %v4116 = vsel %vm4052, %v4007, %v4084
  %v4117 = vsel %vm4053, %v4011, %v4085
  %v4118 = vsel %vm4054, %v4013, %v4086
  %v4119 = vsel %vm4055, %v4015, %v4087
  %v4120 = vsel %vm4056, %v4017, %v4088
  %v4121 = vsel %vm4057, %v4021, %v4089
  %v4122 = vsel %vm4058, %v4023, %v4090
  %v4123 = vsel %vm4059, %v4025, %v4091
  %v4124 = vsel %vm4060, %v4027, %v4092
  %v4125 = vpack.c.bf16 %v4095, %v4093
  %v4126 = vpack.c.bf16 %v4096, %v4094
  %v4127 = vpack.c.bf16 %v4099, %v4097
  %v4128 = vpack.c.bf16 %v4100, %v4098
  %v4129 = vpack.c.bf16 %v4103, %v4101
  %v4130 = vpack.c.bf16 %v4104, %v4102
  %v4131 = vpack.c.bf16 %v4107, %v4105
  %v4132 = vpack.c.bf16 %v4108, %v4106
  %v4133 = vpack.c.bf16 %v4111, %v4109
  %v4134 = vpack.c.bf16 %v4112, %v4110
  %v4135 = vpack.c.bf16 %v4115, %v4113
  %v4136 = vpack.c.bf16 %v4116, %v4114
  %v4137 = vpack.c.bf16 %v4119, %v4117
  %v4138 = vpack.c.bf16 %v4120, %v4118
  %v4139 = vpack.c.bf16 %v4123, %v4121
  %v4140 = vpack.c.bf16 %v4124, %v4122
  %v4141 = vld [vmem:[%s11] sm:$0xff]
  %v4143 = vunpack.c.l.b16 %v4141
  %v4144 = vunpack.c.h.b16 %v4141
  %v4145 = vpack.c.b16 %v4143, %v4143
  %v4146 = vpack.c.b16 %v4144, %v4144
  %4149 = vmatprep.subr.bf16.mxu0 %v4126
  %4150 = vmatpush1.bf16.xpose.msra.mxu0 %v4125
  %4151 = vmatprep.subr.bf16.mxu0 %v4128
  %4152 = vmatpush1.bf16.xpose.msra.mxu0 %v4127
  %4153 = vmatprep.subr.bf16.mxu0 %v4130
  %4154 = vmatpush1.bf16.xpose.msra.mxu0 %v4129
  %4155 = vmatprep.subr.bf16.mxu0 %v4132
  %4156 = vmatpush1.bf16.xpose.msra.mxu0 %v4131
  %4157 = vmatprep.subr.bf16.mxu0 %v4134
  %4158 = vmatpush1.bf16.xpose.msra.mxu0 %v4133
  %4159 = vmatprep.subr.bf16.mxu0 %v4136
  %4160 = vmatpush1.bf16.xpose.msra.mxu0 %v4135
  %4161 = vmatprep.subr.bf16.mxu0 %v4138
  %4162 = vmatpush1.bf16.xpose.msra.mxu0 %v4137
  %4163 = vmatprep.subr.bf16.mxu0 %v4140
  %4164 = vmatpush1.bf16.xpose.msra.mxu0 %v4139
  %4165 = vmatprep.subr.bf16.mxu0 0
  %4166 = vmatpush1.bf16.xpose.msra.mxu0 0
  %4167 = vmatprep.subr.bf16.mxu0 0
  %4168 = vmatpush1.bf16.xpose.msra.mxu0 0
  %4169 = vmatprep.subr.bf16.mxu0 0
  %4170 = vmatpush1.bf16.xpose.msra.mxu0 0
  %4171 = vmatprep.subr.bf16.mxu0 0
  %4172 = vmatpush1.bf16.xpose.msra.mxu0 0
  %4173 = vmatprep.subr.bf16.mxu0 0
  %4174 = vmatpush1.bf16.xpose.msra.mxu0 0
  %4175 = vmatprep.subr.bf16.mxu0 0
  %4176 = vmatpush1.bf16.xpose.msra.mxu0 0
  %4177 = vmatprep.subr.bf16.mxu0 0
  %4178 = vmatpush1.bf16.xpose.msra.mxu0 0
  %4179 = vmatprep.subr.bf16.mxu0 0
  %4180 = vmatpush1.bf16.xpose.msra.mxu0 0
  %4181 = vmatprep.mubr.bf16.mxu0 %v4146
  %4182 = vmatmul.mubr.bf16.gmra.mrb[0].mxu0 %v4145
  %v4183 = vpop.f32.mrb[0].mxu0
  %v4184 = vadd.f32 %v2101, %v4183
  %v4185 = vpop.f32.mrb[0].mxu0
  %v4186 = vpop.f32.mrb[0].mxu0
  %v4187 = vpop.f32.mrb[0].mxu0
  %4188 = vdwg.mxu0
  %s4189 = scalar_lea.vmem %s13, 8
  %4190 = vst [vmem:[%s4189] sm:$0xff] %v4184
  // Predicated region
  $region54: #{neural_net_forward.1} parent=0 // pred_check
    _
  $region55: #{neural_net_forward.1} parent=0 // pred_check_branch
    %4192 = sbr.rel (0) target = $region57
  $region56: #{neural_net_forward.1} parent=0 // pred_region
    _
  $region57: #{neural_net_forward.1} parent=0 // pred_fallthru
    _
  // Predicated region
  $region58: #{neural_net_forward.1} parent=0 // pred_check
    _
  $region59: #{neural_net_forward.1} parent=0 // pred_check_branch
    %4194 = sbr.rel (0) target = $region61
  $region60: #{neural_net_forward.1} parent=0 // pred_region
    _
  $region61: #{neural_net_forward.1} parent=0 // pred_fallthru
    _

</llo_original>
